<compile_context>
chip_gen: v5e
topology: v5e:2x2
jax: 0.10.0
libtpu: 0.0.40
codegen_flags: <defaults>
</compile_context>

<pallas_src>
import jax
import jax.numpy as jnp
from jax.experimental import pallas as pl
from jax.experimental.pallas import tpu as pltpu

HIDDEN = 6              # LSTM hidden size (PyTorch hidden_size=6)
LAYERS = 3              # num_layers=3
HID_PAD = 8             # hidden padded to the 8-sublane tile
NGATES = 4 * HID_PAD    # 32 gate rows: i, f, g, o blocks of 8 sublanes each


def _lstm_net_kernel(x_ref, wih0_ref, whh0_ref, wf_ref, b_ref, fcw_ref,
                     fcb_ref, out_ref):
    """Full forward pass (3-layer LSTM recurrence + final FC) in one kernel.

    x_ref    : (T, 1, B)                      time-major scalar input
    wih0_ref : (NGATES, 1)                    layer-0 input->gates column
    whh0_ref : (NGATES, HID_PAD)              layer-0 hidden->gates
    wf_ref   : (LAYERS-1, NGATES, 2*HID_PAD)  fused [W_ih | W_hh], layers 1..
    b_ref    : (LAYERS, NGATES, 1)            b_ih + b_hh per layer
    fcw_ref  : (HID_PAD, 1)                   final linear weight (column)
    fcb_ref  : (1, 1)                         final linear bias
    out_ref  : (1, B)                         prediction per batch element
    """
    T = x_ref.shape[0]
    B = x_ref.shape[2]
    HP = HID_PAD
    NG = NGATES

    # ---- Hoist loop-invariant loads / broadcasts out of the unrolled loop ---
    whh0 = whh0_ref[...]                                   # (NG, HP)
    wf = [wf_ref[l] for l in range(LAYERS - 1)]            # (NG, 2*HP) each
    bb = [jnp.broadcast_to(b_ref[l], (NG, B)) for l in range(LAYERS)]
    wih0_b = jnp.broadcast_to(wih0_ref[...], (NG, B))      # (NG, B)

    h = [jnp.zeros((HP, B), jnp.float32) for _ in range(LAYERS)]
    c = [jnp.zeros((HP, B), jnp.float32) for _ in range(LAYERS)]

    def lstm_cell(gates, l):
        # Gate blocks start at sublane multiples of 8 -> tile-aligned slices.
        # Padding rows carry exactly 0 (zero weight rows + zero bias), so the
        # padded lanes of h/c stay 0 through the recurrence.
        i_g = jax.nn.sigmoid(gates[0 * HP:1 * HP])
        f_g = jax.nn.sigmoid(gates[1 * HP:2 * HP])
        g_g = jnp.tanh(gates[2 * HP:3 * HP])
        o_g = jax.nn.sigmoid(gates[3 * HP:4 * HP])
        c[l] = f_g * c[l] + i_g * g_g
        h[l] = o_g * jnp.tanh(c[l])

    # T is small & static -> unroll the recurrence.
    for t in range(T):
        # Layer 0: scalar input feature -> broadcast-multiply, no MXU matmul.
        x_b = jnp.broadcast_to(x_ref[t], (NG, B))          # (1,B) -> (NG,B)
        gates0 = (wih0_b * x_b + bb[0]
                  + jnp.dot(whh0, h[0], preferred_element_type=jnp.float32))
        lstm_cell(gates0, 0)

        # Layers 1..L-1: single fused matmul per cell on [h_{l-1}; h_l].
        for l in range(1, LAYERS):
            xh = jnp.concatenate([h[l - 1], h[l]], axis=0)  # (2*HP, B), aligned
            gates = bb[l] + jnp.dot(wf[l - 1], xh,
                                    preferred_element_type=jnp.float32)
            lstm_cell(gates, l)

    # Final Linear(6, 1): elementwise multiply + sublane reduce (no MXU op).
    y = jnp.sum(fcw_ref[...] * h[LAYERS - 1], axis=0, keepdims=True)
    out_ref[...] = y + fcb_ref[...]


def init_params(key):
    """PyTorch-style U(-1/sqrt(H), 1/sqrt(H)) init for all LSTM / FC params."""
    k = 1.0 / jnp.sqrt(jnp.float32(HIDDEN))
    params = {}
    keys = jax.random.split(key, 4 * LAYERS + 2)
    idx = 0
    for l in range(LAYERS):
        in_sz = 1 if l == 0 else HIDDEN
        params[f"w_ih_{l}"] = jax.random.uniform(
            keys[idx], (4 * HIDDEN, in_sz), jnp.float32, -k, k); idx += 1
        params[f"w_hh_{l}"] = jax.random.uniform(
            keys[idx], (4 * HIDDEN, HIDDEN), jnp.float32, -k, k); idx += 1
        params[f"b_ih_{l}"] = jax.random.uniform(
            keys[idx], (4 * HIDDEN,), jnp.float32, -k, k); idx += 1
        params[f"b_hh_{l}"] = jax.random.uniform(
            keys[idx], (4 * HIDDEN,), jnp.float32, -k, k); idx += 1
    params["fc_w"] = jax.random.uniform(keys[idx], (1, HIDDEN), jnp.float32, -k, k); idx += 1
    params["fc_b"] = jax.random.uniform(keys[idx], (1,), jnp.float32, -k, k)
    return params


def _scatter_gate_rows(w):
    """(4H, K) in PyTorch gate order (i,f,g,o) -> (NGATES, K) with gate g at
    sublane rows [8g, 8g+H); padding rows are zero."""
    w = jnp.asarray(w, jnp.float32)
    out = jnp.zeros((NGATES, w.shape[1]), jnp.float32)
    for g in range(4):
        out = out.at[g * HID_PAD:g * HID_PAD + HIDDEN, :].set(
            w[g * HIDDEN:(g + 1) * HIDDEN, :])
    return out


def prepare_params(params):
    """One-time packing of PyTorch-layout params into the kernel layout."""
    wih0 = _scatter_gate_rows(params["w_ih_0"])                       # (32, 1)
    whh0 = jnp.pad(_scatter_gate_rows(params["w_hh_0"]),
                   ((0, 0), (0, HID_PAD - HIDDEN)))                   # (32, 8)
    wf = []
    for l in range(1, LAYERS):
        w = jnp.zeros((NGATES, 2 * HID_PAD), jnp.float32)
        w = w.at[:, 0:HIDDEN].set(_scatter_gate_rows(params[f"w_ih_{l}"]))
        w = w.at[:, HID_PAD:HID_PAD + HIDDEN].set(
            _scatter_gate_rows(params[f"w_hh_{l}"]))
        wf.append(w)
    wfused = jnp.stack(wf)                                            # (2, 32, 16)
    b = jnp.stack([
        _scatter_gate_rows((params[f"b_ih_{l}"] + params[f"b_hh_{l}"])[:, None])
        for l in range(LAYERS)])                                      # (3, 32, 1)
    fcw = jnp.pad(params["fc_w"].T, ((0, HID_PAD - HIDDEN), (0, 0)))  # (8, 1)
    fcb = params["fc_b"].reshape(1, 1)                                # (1, 1)
    return dict(wih0=wih0, whh0=whh0, wfused=wfused, b=b, fcw=fcw, fcb=fcb)


@jax.jit
def net_forward(x, packed):
    """x: (B, T, 1) float32  ->  (B, 1, 1) float32 (matches PyTorch Net.forward)."""
    B, T, _ = x.shape
    # Tiny glue: time-major with batch on the lane axis.
    x_tm = jnp.transpose(x[:, :, 0], (1, 0)).reshape(T, 1, B)

    vmem = pl.BlockSpec(memory_space=pltpu.MemorySpace.VMEM)
    out = pl.pallas_call(
        _lstm_net_kernel,
        out_shape=jax.ShapeDtypeStruct((1, B), jnp.float32),
        in_specs=[vmem] * 7,
        out_specs=vmem,
    )(x_tm, packed["wih0"], packed["whh0"], packed["wfused"],
      packed["b"], packed["fcw"], packed["fcb"])

    return out.reshape(B, 1, 1)


def net_forward_ref(x, params):
    """Pure-JAX reference of the same forward pass (correctness check)."""
    B, T, _ = x.shape
    H = HIDDEN
    layer_in = x
    for l in range(LAYERS):
        w_ih = params[f"w_ih_{l}"]
        w_hh = params[f"w_hh_{l}"]
        bias = params[f"b_ih_{l}"] + params[f"b_hh_{l}"]
        h = jnp.zeros((B, H), jnp.float32)
        c = jnp.zeros((B, H), jnp.float32)
        outs = []
        for t in range(T):
            g = layer_in[:, t, :] @ w_ih.T + h @ w_hh.T + bias
            i_g = jax.nn.sigmoid(g[:, 0 * H:1 * H])
            f_g = jax.nn.sigmoid(g[:, 1 * H:2 * H])
            g_g = jnp.tanh(g[:, 2 * H:3 * H])
            o_g = jax.nn.sigmoid(g[:, 3 * H:4 * H])
            c = f_g * c + i_g * g_g
            h = o_g * jnp.tanh(c)
            outs.append(h)
        layer_in = jnp.stack(outs, axis=1)  # (B, T, H)
    last = layer_in[:, -1, :]
    y = last @ params["fc_w"].T + params["fc_b"]
    return y.reshape(B, 1, 1)


if __name__ == "__main__":
    key = jax.random.PRNGKey(0)
    pkey, xkey = jax.random.split(key)

    params = init_params(pkey)
    packed = prepare_params(params)   # one-time weight packing (not per call)

    B, T = 2, 8
    x = jax.random.normal(xkey, (B, T, 1), jnp.float32)

    out = jax.block_until_ready(net_forward(x, packed))
    ref = jax.block_until_ready(net_forward_ref(x, params))

    assert out.shape == (B, 1, 1), out.shape
    assert jnp.allclose(out, ref, atol=1e-5, rtol=1e-5), (out, ref)
    print("KERNEL_OK")
</pallas_src>

<mosaic_0001>
module attributes {stable_mosaic.version = 11 : i64} {
  func.func @_lstm_net_kernel(%arg0: memref<8x1x2xf32, #tpu.memory_space<vmem>>, %arg1: memref<32x1xf32, #tpu.memory_space<vmem>>, %arg2: memref<32x8xf32, #tpu.memory_space<vmem>>, %arg3: memref<2x32x16xf32, #tpu.memory_space<vmem>>, %arg4: memref<3x32x1xf32, #tpu.memory_space<vmem>>, %arg5: memref<8x1xf32, #tpu.memory_space<vmem>>, %arg6: memref<1x1xf32, #tpu.memory_space<vmem>>, %arg7: memref<1x2xf32, #tpu.memory_space<vmem>>) attributes {dimension_semantics = [], scalar_prefetch = 0 : i64, scratch_operands = 0 : i64, tpu.core_type = #tpu.core_type<tc>} {
    %c0 = arith.constant 0 : index
    %c0_0 = arith.constant 0 : index
    %0 = vector.load %arg2[%c0, %c0_0] : memref<32x8xf32, #tpu.memory_space<vmem>>, vector<32x8xf32>
    %c0_1 = arith.constant 0 : index
    %c0_2 = arith.constant 0 : index
    %c0_3 = arith.constant 0 : index
    %1 = vector.load %arg3[%c0_1, %c0_2, %c0_3] : memref<2x32x16xf32, #tpu.memory_space<vmem>>, vector<1x32x16xf32>
    %2 = vector.shape_cast %1 : vector<1x32x16xf32> to vector<32x16xf32>
    %c1 = arith.constant 1 : index
    %c0_4 = arith.constant 0 : index
    %c0_5 = arith.constant 0 : index
    %3 = vector.load %arg3[%c1, %c0_4, %c0_5] : memref<2x32x16xf32, #tpu.memory_space<vmem>>, vector<1x32x16xf32>
    %4 = vector.shape_cast %3 : vector<1x32x16xf32> to vector<32x16xf32>
    %c0_6 = arith.constant 0 : index
    %c0_7 = arith.constant 0 : index
    %c0_8 = arith.constant 0 : index
    %5 = vector.load %arg4[%c0_6, %c0_7, %c0_8] : memref<3x32x1xf32, #tpu.memory_space<vmem>>, vector<1x32x1xf32>
    %6 = vector.shape_cast %5 : vector<1x32x1xf32> to vector<32x1xf32>
    %7 = vector.shape_cast %6 : vector<32x1xf32> to vector<32x1xf32>
    %8 = vector.broadcast %7 : vector<32x1xf32> to vector<32x2xf32>
    %c1_9 = arith.constant 1 : index
    %c0_10 = arith.constant 0 : index
    %c0_11 = arith.constant 0 : index
    %9 = vector.load %arg4[%c1_9, %c0_10, %c0_11] : memref<3x32x1xf32, #tpu.memory_space<vmem>>, vector<1x32x1xf32>
    %10 = vector.shape_cast %9 : vector<1x32x1xf32> to vector<32x1xf32>
    %11 = vector.shape_cast %10 : vector<32x1xf32> to vector<32x1xf32>
    %12 = vector.broadcast %11 : vector<32x1xf32> to vector<32x2xf32>
    %c2 = arith.constant 2 : index
    %c0_12 = arith.constant 0 : index
    %c0_13 = arith.constant 0 : index
    %13 = vector.load %arg4[%c2, %c0_12, %c0_13] : memref<3x32x1xf32, #tpu.memory_space<vmem>>, vector<1x32x1xf32>
    %14 = vector.shape_cast %13 : vector<1x32x1xf32> to vector<32x1xf32>
    %15 = vector.shape_cast %14 : vector<32x1xf32> to vector<32x1xf32>
    %16 = vector.broadcast %15 : vector<32x1xf32> to vector<32x2xf32>
    %c0_14 = arith.constant 0 : index
    %c0_15 = arith.constant 0 : index
    %17 = vector.load %arg1[%c0_14, %c0_15] : memref<32x1xf32, #tpu.memory_space<vmem>>, vector<32x1xf32>
    %18 = vector.shape_cast %17 : vector<32x1xf32> to vector<32x1xf32>
    %19 = vector.broadcast %18 : vector<32x1xf32> to vector<32x2xf32>
    %cst = arith.constant 0.000000e+00 : f32
    %20 = vector.broadcast %cst : f32 to vector<8x2xf32>
    %cst_16 = arith.constant 0.000000e+00 : f32
    %21 = vector.broadcast %cst_16 : f32 to vector<8x2xf32>
    %cst_17 = arith.constant 0.000000e+00 : f32
    %22 = vector.broadcast %cst_17 : f32 to vector<8x2xf32>
    %cst_18 = arith.constant 0.000000e+00 : f32
    %23 = vector.broadcast %cst_18 : f32 to vector<8x2xf32>
    %cst_19 = arith.constant 0.000000e+00 : f32
    %24 = vector.broadcast %cst_19 : f32 to vector<8x2xf32>
    %cst_20 = arith.constant 0.000000e+00 : f32
    %25 = vector.broadcast %cst_20 : f32 to vector<8x2xf32>
    %c0_21 = arith.constant 0 : index
    %c0_22 = arith.constant 0 : index
    %c0_23 = arith.constant 0 : index
    %26 = vector.load %arg0[%c0_21, %c0_22, %c0_23] : memref<8x1x2xf32, #tpu.memory_space<vmem>>, vector<1x1x2xf32>
    %27 = vector.shape_cast %26 : vector<1x1x2xf32> to vector<1x2xf32>
    %28 = vector.shape_cast %27 : vector<1x2xf32> to vector<1x2xf32>
    %29 = vector.broadcast %28 : vector<1x2xf32> to vector<32x2xf32>
    %30 = arith.mulf %19, %29 : vector<32x2xf32>
    %31 = arith.addf %30, %8 : vector<32x2xf32>
    %cst_24 = arith.constant dense<0.000000e+00> : vector<32x2xf32>
    %32 = tpu.matmul %0, %20, %cst_24 {dimension_numbers = #tpu.dot_dimension_numbers<[1], [0], [0], [1], [0, 0, 1, 1], [], []>} : vector<32x8xf32>, vector<8x2xf32>, vector<32x2xf32> -> vector<32x2xf32>
    %33 = arith.addf %31, %32 : vector<32x2xf32>
    %34 = vector.extract_strided_slice %33 {offsets = [0, 0], sizes = [8, 2], strides = [1, 1]} : vector<32x2xf32> to vector<8x2xf32>
    %35 = arith.negf %34 : vector<8x2xf32>
    %36 = math.exp %35 : vector<8x2xf32>
    %cst_25 = arith.constant 1.000000e+00 : f32
    %37 = vector.broadcast %cst_25 : f32 to vector<8x2xf32>
    %38 = arith.addf %37, %36 : vector<8x2xf32>
    %39 = arith.divf %37, %38 : vector<8x2xf32>
    %40 = vector.extract_strided_slice %33 {offsets = [8, 0], sizes = [8, 2], strides = [1, 1]} : vector<32x2xf32> to vector<8x2xf32>
    %41 = arith.negf %40 : vector<8x2xf32>
    %42 = math.exp %41 : vector<8x2xf32>
    %cst_26 = arith.constant 1.000000e+00 : f32
    %43 = vector.broadcast %cst_26 : f32 to vector<8x2xf32>
    %44 = arith.addf %43, %42 : vector<8x2xf32>
    %45 = arith.divf %43, %44 : vector<8x2xf32>
    %46 = vector.extract_strided_slice %33 {offsets = [16, 0], sizes = [8, 2], strides = [1, 1]} : vector<32x2xf32> to vector<8x2xf32>
    %47 = math.tanh %46 : vector<8x2xf32>
    %48 = vector.extract_strided_slice %33 {offsets = [24, 0], sizes = [8, 2], strides = [1, 1]} : vector<32x2xf32> to vector<8x2xf32>
    %49 = arith.negf %48 : vector<8x2xf32>
    %50 = math.exp %49 : vector<8x2xf32>
    %cst_27 = arith.constant 1.000000e+00 : f32
    %51 = vector.broadcast %cst_27 : f32 to vector<8x2xf32>
    %52 = arith.addf %51, %50 : vector<8x2xf32>
    %53 = arith.divf %51, %52 : vector<8x2xf32>
    %54 = arith.mulf %45, %23 : vector<8x2xf32>
    %55 = arith.mulf %39, %47 : vector<8x2xf32>
    %56 = arith.addf %54, %55 : vector<8x2xf32>
    %57 = math.tanh %56 : vector<8x2xf32>
    %58 = arith.mulf %53, %57 : vector<8x2xf32>
    %59 = tpu.concatenate %58, %21 in 0 : vector<8x2xf32>, vector<8x2xf32> -> vector<16x2xf32>
    %cst_28 = arith.constant dense<0.000000e+00> : vector<32x2xf32>
    %60 = tpu.matmul %2, %59, %cst_28 {dimension_numbers = #tpu.dot_dimension_numbers<[1], [0], [0], [1], [0, 0, 1, 1], [], []>} : vector<32x16xf32>, vector<16x2xf32>, vector<32x2xf32> -> vector<32x2xf32>
    %61 = arith.addf %12, %60 : vector<32x2xf32>
    %62 = vector.extract_strided_slice %61 {offsets = [0, 0], sizes = [8, 2], strides = [1, 1]} : vector<32x2xf32> to vector<8x2xf32>
    %63 = arith.negf %62 : vector<8x2xf32>
    %64 = math.exp %63 : vector<8x2xf32>
    %cst_29 = arith.constant 1.000000e+00 : f32
    %65 = vector.broadcast %cst_29 : f32 to vector<8x2xf32>
    %66 = arith.addf %65, %64 : vector<8x2xf32>
    %67 = arith.divf %65, %66 : vector<8x2xf32>
    %68 = vector.extract_strided_slice %61 {offsets = [8, 0], sizes = [8, 2], strides = [1, 1]} : vector<32x2xf32> to vector<8x2xf32>
    %69 = arith.negf %68 : vector<8x2xf32>
    %70 = math.exp %69 : vector<8x2xf32>
    %cst_30 = arith.constant 1.000000e+00 : f32
    %71 = vector.broadcast %cst_30 : f32 to vector<8x2xf32>
    %72 = arith.addf %71, %70 : vector<8x2xf32>
    %73 = arith.divf %71, %72 : vector<8x2xf32>
    %74 = vector.extract_strided_slice %61 {offsets = [16, 0], sizes = [8, 2], strides = [1, 1]} : vector<32x2xf32> to vector<8x2xf32>
    %75 = math.tanh %74 : vector<8x2xf32>
    %76 = vector.extract_strided_slice %61 {offsets = [24, 0], sizes = [8, 2], strides = [1, 1]} : vector<32x2xf32> to vector<8x2xf32>
    %77 = arith.negf %76 : vector<8x2xf32>
    %78 = math.exp %77 : vector<8x2xf32>
    %cst_31 = arith.constant 1.000000e+00 : f32
    %79 = vector.broadcast %cst_31 : f32 to vector<8x2xf32>
    %80 = arith.addf %79, %78 : vector<8x2xf32>
    %81 = arith.divf %79, %80 : vector<8x2xf32>
    %82 = arith.mulf %73, %24 : vector<8x2xf32>
    %83 = arith.mulf %67, %75 : vector<8x2xf32>
    %84 = arith.addf %82, %83 : vector<8x2xf32>
    %85 = math.tanh %84 : vector<8x2xf32>
    %86 = arith.mulf %81, %85 : vector<8x2xf32>
    %87 = tpu.concatenate %86, %22 in 0 : vector<8x2xf32>, vector<8x2xf32> -> vector<16x2xf32>
    %cst_32 = arith.constant dense<0.000000e+00> : vector<32x2xf32>
    %88 = tpu.matmul %4, %87, %cst_32 {dimension_numbers = #tpu.dot_dimension_numbers<[1], [0], [0], [1], [0, 0, 1, 1], [], []>} : vector<32x16xf32>, vector<16x2xf32>, vector<32x2xf32> -> vector<32x2xf32>
    %89 = arith.addf %16, %88 : vector<32x2xf32>
    %90 = vector.extract_strided_slice %89 {offsets = [0, 0], sizes = [8, 2], strides = [1, 1]} : vector<32x2xf32> to vector<8x2xf32>
    %91 = arith.negf %90 : vector<8x2xf32>
    %92 = math.exp %91 : vector<8x2xf32>
    %cst_33 = arith.constant 1.000000e+00 : f32
    %93 = vector.broadcast %cst_33 : f32 to vector<8x2xf32>
    %94 = arith.addf %93, %92 : vector<8x2xf32>
    %95 = arith.divf %93, %94 : vector<8x2xf32>
    %96 = vector.extract_strided_slice %89 {offsets = [8, 0], sizes = [8, 2], strides = [1, 1]} : vector<32x2xf32> to vector<8x2xf32>
    %97 = arith.negf %96 : vector<8x2xf32>
    %98 = math.exp %97 : vector<8x2xf32>
    %cst_34 = arith.constant 1.000000e+00 : f32
    %99 = vector.broadcast %cst_34 : f32 to vector<8x2xf32>
    %100 = arith.addf %99, %98 : vector<8x2xf32>
    %101 = arith.divf %99, %100 : vector<8x2xf32>
    %102 = vector.extract_strided_slice %89 {offsets = [16, 0], sizes = [8, 2], strides = [1, 1]} : vector<32x2xf32> to vector<8x2xf32>
    %103 = math.tanh %102 : vector<8x2xf32>
    %104 = vector.extract_strided_slice %89 {offsets = [24, 0], sizes = [8, 2], strides = [1, 1]} : vector<32x2xf32> to vector<8x2xf32>
    %105 = arith.negf %104 : vector<8x2xf32>
    %106 = math.exp %105 : vector<8x2xf32>
    %cst_35 = arith.constant 1.000000e+00 : f32
    %107 = vector.broadcast %cst_35 : f32 to vector<8x2xf32>
    %108 = arith.addf %107, %106 : vector<8x2xf32>
    %109 = arith.divf %107, %108 : vector<8x2xf32>
    %110 = arith.mulf %101, %25 : vector<8x2xf32>
    %111 = arith.mulf %95, %103 : vector<8x2xf32>
    %112 = arith.addf %110, %111 : vector<8x2xf32>
    %113 = math.tanh %112 : vector<8x2xf32>
    %114 = arith.mulf %109, %113 : vector<8x2xf32>
    %c1_36 = arith.constant 1 : index
    %c0_37 = arith.constant 0 : index
    %c0_38 = arith.constant 0 : index
    %115 = vector.load %arg0[%c1_36, %c0_37, %c0_38] : memref<8x1x2xf32, #tpu.memory_space<vmem>>, vector<1x1x2xf32>
    %116 = vector.shape_cast %115 : vector<1x1x2xf32> to vector<1x2xf32>
    %117 = vector.shape_cast %116 : vector<1x2xf32> to vector<1x2xf32>
    %118 = vector.broadcast %117 : vector<1x2xf32> to vector<32x2xf32>
    %119 = arith.mulf %19, %118 : vector<32x2xf32>
    %120 = arith.addf %119, %8 : vector<32x2xf32>
    %cst_39 = arith.constant dense<0.000000e+00> : vector<32x2xf32>
    %121 = tpu.matmul %0, %58, %cst_39 {dimension_numbers = #tpu.dot_dimension_numbers<[1], [0], [0], [1], [0, 0, 1, 1], [], []>} : vector<32x8xf32>, vector<8x2xf32>, vector<32x2xf32> -> vector<32x2xf32>
    %122 = arith.addf %120, %121 : vector<32x2xf32>
    %123 = vector.extract_strided_slice %122 {offsets = [0, 0], sizes = [8, 2], strides = [1, 1]} : vector<32x2xf32> to vector<8x2xf32>
    %124 = arith.negf %123 : vector<8x2xf32>
    %125 = math.exp %124 : vector<8x2xf32>
    %cst_40 = arith.constant 1.000000e+00 : f32
    %126 = vector.broadcast %cst_40 : f32 to vector<8x2xf32>
    %127 = arith.addf %126, %125 : vector<8x2xf32>
    %128 = arith.divf %126, %127 : vector<8x2xf32>
    %129 = vector.extract_strided_slice %122 {offsets = [8, 0], sizes = [8, 2], strides = [1, 1]} : vector<32x2xf32> to vector<8x2xf32>
    %130 = arith.negf %129 : vector<8x2xf32>
    %131 = math.exp %130 : vector<8x2xf32>
    %cst_41 = arith.constant 1.000000e+00 : f32
    %132 = vector.broadcast %cst_41 : f32 to vector<8x2xf32>
    %133 = arith.addf %132, %131 : vector<8x2xf32>
    %134 = arith.divf %132, %133 : vector<8x2xf32>
    %135 = vector.extract_strided_slice %122 {offsets = [16, 0], sizes = [8, 2], strides = [1, 1]} : vector<32x2xf32> to vector<8x2xf32>
    %136 = math.tanh %135 : vector<8x2xf32>
    %137 = vector.extract_strided_slice %122 {offsets = [24, 0], sizes = [8, 2], strides = [1, 1]} : vector<32x2xf32> to vector<8x2xf32>
    %138 = arith.negf %137 : vector<8x2xf32>
    %139 = math.exp %138 : vector<8x2xf32>
    %cst_42 = arith.constant 1.000000e+00 : f32
    %140 = vector.broadcast %cst_42 : f32 to vector<8x2xf32>
    %141 = arith.addf %140, %139 : vector<8x2xf32>
    %142 = arith.divf %140, %141 : vector<8x2xf32>
    %143 = arith.mulf %134, %56 : vector<8x2xf32>
    %144 = arith.mulf %128, %136 : vector<8x2xf32>
    %145 = arith.addf %143, %144 : vector<8x2xf32>
    %146 = math.tanh %145 : vector<8x2xf32>
    %147 = arith.mulf %142, %146 : vector<8x2xf32>
    %148 = tpu.concatenate %147, %86 in 0 : vector<8x2xf32>, vector<8x2xf32> -> vector<16x2xf32>
    %cst_43 = arith.constant dense<0.000000e+00> : vector<32x2xf32>
    %149 = tpu.matmul %2, %148, %cst_43 {dimension_numbers = #tpu.dot_dimension_numbers<[1], [0], [0], [1], [0, 0, 1, 1], [], []>} : vector<32x16xf32>, vector<16x2xf32>, vector<32x2xf32> -> vector<32x2xf32>
    %150 = arith.addf %12, %149 : vector<32x2xf32>
    %151 = vector.extract_strided_slice %150 {offsets = [0, 0], sizes = [8, 2], strides = [1, 1]} : vector<32x2xf32> to vector<8x2xf32>
    %152 = arith.negf %151 : vector<8x2xf32>
    %153 = math.exp %152 : vector<8x2xf32>
    %cst_44 = arith.constant 1.000000e+00 : f32
    %154 = vector.broadcast %cst_44 : f32 to vector<8x2xf32>
    %155 = arith.addf %154, %153 : vector<8x2xf32>
    %156 = arith.divf %154, %155 : vector<8x2xf32>
    %157 = vector.extract_strided_slice %150 {offsets = [8, 0], sizes = [8, 2], strides = [1, 1]} : vector<32x2xf32> to vector<8x2xf32>
    %158 = arith.negf %157 : vector<8x2xf32>
    %159 = math.exp %158 : vector<8x2xf32>
    %cst_45 = arith.constant 1.000000e+00 : f32
    %160 = vector.broadcast %cst_45 : f32 to vector<8x2xf32>
    %161 = arith.addf %160, %159 : vector<8x2xf32>
    %162 = arith.divf %160, %161 : vector<8x2xf32>
    %163 = vector.extract_strided_slice %150 {offsets = [16, 0], sizes = [8, 2], strides = [1, 1]} : vector<32x2xf32> to vector<8x2xf32>
    %164 = math.tanh %163 : vector<8x2xf32>
    %165 = vector.extract_strided_slice %150 {offsets = [24, 0], sizes = [8, 2], strides = [1, 1]} : vector<32x2xf32> to vector<8x2xf32>
    %166 = arith.negf %165 : vector<8x2xf32>
    %167 = math.exp %166 : vector<8x2xf32>
    %cst_46 = arith.constant 1.000000e+00 : f32
    %168 = vector.broadcast %cst_46 : f32 to vector<8x2xf32>
    %169 = arith.addf %168, %167 : vector<8x2xf32>
    %170 = arith.divf %168, %169 : vector<8x2xf32>
    %171 = arith.mulf %162, %84 : vector<8x2xf32>
    %172 = arith.mulf %156, %164 : vector<8x2xf32>
    %173 = arith.addf %171, %172 : vector<8x2xf32>
    %174 = math.tanh %173 : vector<8x2xf32>
    %175 = arith.mulf %170, %174 : vector<8x2xf32>
    %176 = tpu.concatenate %175, %114 in 0 : vector<8x2xf32>, vector<8x2xf32> -> vector<16x2xf32>
    %cst_47 = arith.constant dense<0.000000e+00> : vector<32x2xf32>
    %177 = tpu.matmul %4, %176, %cst_47 {dimension_numbers = #tpu.dot_dimension_numbers<[1], [0], [0], [1], [0, 0, 1, 1], [], []>} : vector<32x16xf32>, vector<16x2xf32>, vector<32x2xf32> -> vector<32x2xf32>
    %178 = arith.addf %16, %177 : vector<32x2xf32>
    %179 = vector.extract_strided_slice %178 {offsets = [0, 0], sizes = [8, 2], strides = [1, 1]} : vector<32x2xf32> to vector<8x2xf32>
    %180 = arith.negf %179 : vector<8x2xf32>
    %181 = math.exp %180 : vector<8x2xf32>
    %cst_48 = arith.constant 1.000000e+00 : f32
    %182 = vector.broadcast %cst_48 : f32 to vector<8x2xf32>
    %183 = arith.addf %182, %181 : vector<8x2xf32>
    %184 = arith.divf %182, %183 : vector<8x2xf32>
    %185 = vector.extract_strided_slice %178 {offsets = [8, 0], sizes = [8, 2], strides = [1, 1]} : vector<32x2xf32> to vector<8x2xf32>
    %186 = arith.negf %185 : vector<8x2xf32>
    %187 = math.exp %186 : vector<8x2xf32>
    %cst_49 = arith.constant 1.000000e+00 : f32
    %188 = vector.broadcast %cst_49 : f32 to vector<8x2xf32>
    %189 = arith.addf %188, %187 : vector<8x2xf32>
    %190 = arith.divf %188, %189 : vector<8x2xf32>
    %191 = vector.extract_strided_slice %178 {offsets = [16, 0], sizes = [8, 2], strides = [1, 1]} : vector<32x2xf32> to vector<8x2xf32>
    %192 = math.tanh %191 : vector<8x2xf32>
    %193 = vector.extract_strided_slice %178 {offsets = [24, 0], sizes = [8, 2], strides = [1, 1]} : vector<32x2xf32> to vector<8x2xf32>
    %194 = arith.negf %193 : vector<8x2xf32>
    %195 = math.exp %194 : vector<8x2xf32>
    %cst_50 = arith.constant 1.000000e+00 : f32
    %196 = vector.broadcast %cst_50 : f32 to vector<8x2xf32>
    %197 = arith.addf %196, %195 : vector<8x2xf32>
    %198 = arith.divf %196, %197 : vector<8x2xf32>
    %199 = arith.mulf %190, %112 : vector<8x2xf32>
    %200 = arith.mulf %184, %192 : vector<8x2xf32>
    %201 = arith.addf %199, %200 : vector<8x2xf32>
    %202 = math.tanh %201 : vector<8x2xf32>
    %203 = arith.mulf %198, %202 : vector<8x2xf32>
    %c2_51 = arith.constant 2 : index
    %c0_52 = arith.constant 0 : index
    %c0_53 = arith.constant 0 : index
    %204 = vector.load %arg0[%c2_51, %c0_52, %c0_53] : memref<8x1x2xf32, #tpu.memory_space<vmem>>, vector<1x1x2xf32>
    %205 = vector.shape_cast %204 : vector<1x1x2xf32> to vector<1x2xf32>
    %206 = vector.shape_cast %205 : vector<1x2xf32> to vector<1x2xf32>
    %207 = vector.broadcast %206 : vector<1x2xf32> to vector<32x2xf32>
    %208 = arith.mulf %19, %207 : vector<32x2xf32>
    %209 = arith.addf %208, %8 : vector<32x2xf32>
    %cst_54 = arith.constant dense<0.000000e+00> : vector<32x2xf32>
    %210 = tpu.matmul %0, %147, %cst_54 {dimension_numbers = #tpu.dot_dimension_numbers<[1], [0], [0], [1], [0, 0, 1, 1], [], []>} : vector<32x8xf32>, vector<8x2xf32>, vector<32x2xf32> -> vector<32x2xf32>
    %211 = arith.addf %209, %210 : vector<32x2xf32>
    %212 = vector.extract_strided_slice %211 {offsets = [0, 0], sizes = [8, 2], strides = [1, 1]} : vector<32x2xf32> to vector<8x2xf32>
    %213 = arith.negf %212 : vector<8x2xf32>
    %214 = math.exp %213 : vector<8x2xf32>
    %cst_55 = arith.constant 1.000000e+00 : f32
    %215 = vector.broadcast %cst_55 : f32 to vector<8x2xf32>
    %216 = arith.addf %215, %214 : vector<8x2xf32>
    %217 = arith.divf %215, %216 : vector<8x2xf32>
    %218 = vector.extract_strided_slice %211 {offsets = [8, 0], sizes = [8, 2], strides = [1, 1]} : vector<32x2xf32> to vector<8x2xf32>
    %219 = arith.negf %218 : vector<8x2xf32>
    %220 = math.exp %219 : vector<8x2xf32>
    %cst_56 = arith.constant 1.000000e+00 : f32
    %221 = vector.broadcast %cst_56 : f32 to vector<8x2xf32>
    %222 = arith.addf %221, %220 : vector<8x2xf32>
    %223 = arith.divf %221, %222 : vector<8x2xf32>
    %224 = vector.extract_strided_slice %211 {offsets = [16, 0], sizes = [8, 2], strides = [1, 1]} : vector<32x2xf32> to vector<8x2xf32>
    %225 = math.tanh %224 : vector<8x2xf32>
    %226 = vector.extract_strided_slice %211 {offsets = [24, 0], sizes = [8, 2], strides = [1, 1]} : vector<32x2xf32> to vector<8x2xf32>
    %227 = arith.negf %226 : vector<8x2xf32>
    %228 = math.exp %227 : vector<8x2xf32>
    %cst_57 = arith.constant 1.000000e+00 : f32
    %229 = vector.broadcast %cst_57 : f32 to vector<8x2xf32>
    %230 = arith.addf %229, %228 : vector<8x2xf32>
    %231 = arith.divf %229, %230 : vector<8x2xf32>
    %232 = arith.mulf %223, %145 : vector<8x2xf32>
    %233 = arith.mulf %217, %225 : vector<8x2xf32>
    %234 = arith.addf %232, %233 : vector<8x2xf32>
    %235 = math.tanh %234 : vector<8x2xf32>
    %236 = arith.mulf %231, %235 : vector<8x2xf32>
    %237 = tpu.concatenate %236, %175 in 0 : vector<8x2xf32>, vector<8x2xf32> -> vector<16x2xf32>
    %cst_58 = arith.constant dense<0.000000e+00> : vector<32x2xf32>
    %238 = tpu.matmul %2, %237, %cst_58 {dimension_numbers = #tpu.dot_dimension_numbers<[1], [0], [0], [1], [0, 0, 1, 1], [], []>} : vector<32x16xf32>, vector<16x2xf32>, vector<32x2xf32> -> vector<32x2xf32>
    %239 = arith.addf %12, %238 : vector<32x2xf32>
    %240 = vector.extract_strided_slice %239 {offsets = [0, 0], sizes = [8, 2], strides = [1, 1]} : vector<32x2xf32> to vector<8x2xf32>
    %241 = arith.negf %240 : vector<8x2xf32>
    %242 = math.exp %241 : vector<8x2xf32>
    %cst_59 = arith.constant 1.000000e+00 : f32
    %243 = vector.broadcast %cst_59 : f32 to vector<8x2xf32>
    %244 = arith.addf %243, %242 : vector<8x2xf32>
    %245 = arith.divf %243, %244 : vector<8x2xf32>
    %246 = vector.extract_strided_slice %239 {offsets = [8, 0], sizes = [8, 2], strides = [1, 1]} : vector<32x2xf32> to vector<8x2xf32>
    %247 = arith.negf %246 : vector<8x2xf32>
    %248 = math.exp %247 : vector<8x2xf32>
    %cst_60 = arith.constant 1.000000e+00 : f32
    %249 = vector.broadcast %cst_60 : f32 to vector<8x2xf32>
    %250 = arith.addf %249, %248 : vector<8x2xf32>
    %251 = arith.divf %249, %250 : vector<8x2xf32>
    %252 = vector.extract_strided_slice %239 {offsets = [16, 0], sizes = [8, 2], strides = [1, 1]} : vector<32x2xf32> to vector<8x2xf32>
    %253 = math.tanh %252 : vector<8x2xf32>
    %254 = vector.extract_strided_slice %239 {offsets = [24, 0], sizes = [8, 2], strides = [1, 1]} : vector<32x2xf32> to vector<8x2xf32>
    %255 = arith.negf %254 : vector<8x2xf32>
    %256 = math.exp %255 : vector<8x2xf32>
    %cst_61 = arith.constant 1.000000e+00 : f32
    %257 = vector.broadcast %cst_61 : f32 to vector<8x2xf32>
    %258 = arith.addf %257, %256 : vector<8x2xf32>
    %259 = arith.divf %257, %258 : vector<8x2xf32>
    %260 = arith.mulf %251, %173 : vector<8x2xf32>
    %261 = arith.mulf %245, %253 : vector<8x2xf32>
    %262 = arith.addf %260, %261 : vector<8x2xf32>
    %263 = math.tanh %262 : vector<8x2xf32>
    %264 = arith.mulf %259, %263 : vector<8x2xf32>
    %265 = tpu.concatenate %264, %203 in 0 : vector<8x2xf32>, vector<8x2xf32> -> vector<16x2xf32>
    %cst_62 = arith.constant dense<0.000000e+00> : vector<32x2xf32>
    %266 = tpu.matmul %4, %265, %cst_62 {dimension_numbers = #tpu.dot_dimension_numbers<[1], [0], [0], [1], [0, 0, 1, 1], [], []>} : vector<32x16xf32>, vector<16x2xf32>, vector<32x2xf32> -> vector<32x2xf32>
    %267 = arith.addf %16, %266 : vector<32x2xf32>
    %268 = vector.extract_strided_slice %267 {offsets = [0, 0], sizes = [8, 2], strides = [1, 1]} : vector<32x2xf32> to vector<8x2xf32>
    %269 = arith.negf %268 : vector<8x2xf32>
    %270 = math.exp %269 : vector<8x2xf32>
    %cst_63 = arith.constant 1.000000e+00 : f32
    %271 = vector.broadcast %cst_63 : f32 to vector<8x2xf32>
    %272 = arith.addf %271, %270 : vector<8x2xf32>
    %273 = arith.divf %271, %272 : vector<8x2xf32>
    %274 = vector.extract_strided_slice %267 {offsets = [8, 0], sizes = [8, 2], strides = [1, 1]} : vector<32x2xf32> to vector<8x2xf32>
    %275 = arith.negf %274 : vector<8x2xf32>
    %276 = math.exp %275 : vector<8x2xf32>
    %cst_64 = arith.constant 1.000000e+00 : f32
    %277 = vector.broadcast %cst_64 : f32 to vector<8x2xf32>
    %278 = arith.addf %277, %276 : vector<8x2xf32>
    %279 = arith.divf %277, %278 : vector<8x2xf32>
    %280 = vector.extract_strided_slice %267 {offsets = [16, 0], sizes = [8, 2], strides = [1, 1]} : vector<32x2xf32> to vector<8x2xf32>
    %281 = math.tanh %280 : vector<8x2xf32>
    %282 = vector.extract_strided_slice %267 {offsets = [24, 0], sizes = [8, 2], strides = [1, 1]} : vector<32x2xf32> to vector<8x2xf32>
    %283 = arith.negf %282 : vector<8x2xf32>
    %284 = math.exp %283 : vector<8x2xf32>
    %cst_65 = arith.constant 1.000000e+00 : f32
    %285 = vector.broadcast %cst_65 : f32 to vector<8x2xf32>
    %286 = arith.addf %285, %284 : vector<8x2xf32>
    %287 = arith.divf %285, %286 : vector<8x2xf32>
    %288 = arith.mulf %279, %201 : vector<8x2xf32>
    %289 = arith.mulf %273, %281 : vector<8x2xf32>
    %290 = arith.addf %288, %289 : vector<8x2xf32>
    %291 = math.tanh %290 : vector<8x2xf32>
    %292 = arith.mulf %287, %291 : vector<8x2xf32>
    %c3 = arith.constant 3 : index
    %c0_66 = arith.constant 0 : index
    %c0_67 = arith.constant 0 : index
    %293 = vector.load %arg0[%c3, %c0_66, %c0_67] : memref<8x1x2xf32, #tpu.memory_space<vmem>>, vector<1x1x2xf32>
    %294 = vector.shape_cast %293 : vector<1x1x2xf32> to vector<1x2xf32>
    %295 = vector.shape_cast %294 : vector<1x2xf32> to vector<1x2xf32>
    %296 = vector.broadcast %295 : vector<1x2xf32> to vector<32x2xf32>
    %297 = arith.mulf %19, %296 : vector<32x2xf32>
    %298 = arith.addf %297, %8 : vector<32x2xf32>
    %cst_68 = arith.constant dense<0.000000e+00> : vector<32x2xf32>
    %299 = tpu.matmul %0, %236, %cst_68 {dimension_numbers = #tpu.dot_dimension_numbers<[1], [0], [0], [1], [0, 0, 1, 1], [], []>} : vector<32x8xf32>, vector<8x2xf32>, vector<32x2xf32> -> vector<32x2xf32>
    %300 = arith.addf %298, %299 : vector<32x2xf32>
    %301 = vector.extract_strided_slice %300 {offsets = [0, 0], sizes = [8, 2], strides = [1, 1]} : vector<32x2xf32> to vector<8x2xf32>
    %302 = arith.negf %301 : vector<8x2xf32>
    %303 = math.exp %302 : vector<8x2xf32>
    %cst_69 = arith.constant 1.000000e+00 : f32
    %304 = vector.broadcast %cst_69 : f32 to vector<8x2xf32>
    %305 = arith.addf %304, %303 : vector<8x2xf32>
    %306 = arith.divf %304, %305 : vector<8x2xf32>
    %307 = vector.extract_strided_slice %300 {offsets = [8, 0], sizes = [8, 2], strides = [1, 1]} : vector<32x2xf32> to vector<8x2xf32>
    %308 = arith.negf %307 : vector<8x2xf32>
    %309 = math.exp %308 : vector<8x2xf32>
    %cst_70 = arith.constant 1.000000e+00 : f32
    %310 = vector.broadcast %cst_70 : f32 to vector<8x2xf32>
    %311 = arith.addf %310, %309 : vector<8x2xf32>
    %312 = arith.divf %310, %311 : vector<8x2xf32>
    %313 = vector.extract_strided_slice %300 {offsets = [16, 0], sizes = [8, 2], strides = [1, 1]} : vector<32x2xf32> to vector<8x2xf32>
    %314 = math.tanh %313 : vector<8x2xf32>
    %315 = vector.extract_strided_slice %300 {offsets = [24, 0], sizes = [8, 2], strides = [1, 1]} : vector<32x2xf32> to vector<8x2xf32>
    %316 = arith.negf %315 : vector<8x2xf32>
    %317 = math.exp %316 : vector<8x2xf32>
    %cst_71 = arith.constant 1.000000e+00 : f32
    %318 = vector.broadcast %cst_71 : f32 to vector<8x2xf32>
    %319 = arith.addf %318, %317 : vector<8x2xf32>
    %320 = arith.divf %318, %319 : vector<8x2xf32>
    %321 = arith.mulf %312, %234 : vector<8x2xf32>
    %322 = arith.mulf %306, %314 : vector<8x2xf32>
    %323 = arith.addf %321, %322 : vector<8x2xf32>
    %324 = math.tanh %323 : vector<8x2xf32>
    %325 = arith.mulf %320, %324 : vector<8x2xf32>
    %326 = tpu.concatenate %325, %264 in 0 : vector<8x2xf32>, vector<8x2xf32> -> vector<16x2xf32>
    %cst_72 = arith.constant dense<0.000000e+00> : vector<32x2xf32>
    %327 = tpu.matmul %2, %326, %cst_72 {dimension_numbers = #tpu.dot_dimension_numbers<[1], [0], [0], [1], [0, 0, 1, 1], [], []>} : vector<32x16xf32>, vector<16x2xf32>, vector<32x2xf32> -> vector<32x2xf32>
    %328 = arith.addf %12, %327 : vector<32x2xf32>
    %329 = vector.extract_strided_slice %328 {offsets = [0, 0], sizes = [8, 2], strides = [1, 1]} : vector<32x2xf32> to vector<8x2xf32>
    %330 = arith.negf %329 : vector<8x2xf32>
    %331 = math.exp %330 : vector<8x2xf32>
    %cst_73 = arith.constant 1.000000e+00 : f32
    %332 = vector.broadcast %cst_73 : f32 to vector<8x2xf32>
    %333 = arith.addf %332, %331 : vector<8x2xf32>
    %334 = arith.divf %332, %333 : vector<8x2xf32>
    %335 = vector.extract_strided_slice %328 {offsets = [8, 0], sizes = [8, 2], strides = [1, 1]} : vector<32x2xf32> to vector<8x2xf32>
    %336 = arith.negf %335 : vector<8x2xf32>
    %337 = math.exp %336 : vector<8x2xf32>
    %cst_74 = arith.constant 1.000000e+00 : f32
    %338 = vector.broadcast %cst_74 : f32 to vector<8x2xf32>
    %339 = arith.addf %338, %337 : vector<8x2xf32>
    %340 = arith.divf %338, %339 : vector<8x2xf32>
    %341 = vector.extract_strided_slice %328 {offsets = [16, 0], sizes = [8, 2], strides = [1, 1]} : vector<32x2xf32> to vector<8x2xf32>
    %342 = math.tanh %341 : vector<8x2xf32>
    %343 = vector.extract_strided_slice %328 {offsets = [24, 0], sizes = [8, 2], strides = [1, 1]} : vector<32x2xf32> to vector<8x2xf32>
    %344 = arith.negf %343 : vector<8x2xf32>
    %345 = math.exp %344 : vector<8x2xf32>
    %cst_75 = arith.constant 1.000000e+00 : f32
    %346 = vector.broadcast %cst_75 : f32 to vector<8x2xf32>
    %347 = arith.addf %346, %345 : vector<8x2xf32>
    %348 = arith.divf %346, %347 : vector<8x2xf32>
    %349 = arith.mulf %340, %262 : vector<8x2xf32>
    %350 = arith.mulf %334, %342 : vector<8x2xf32>
    %351 = arith.addf %349, %350 : vector<8x2xf32>
    %352 = math.tanh %351 : vector<8x2xf32>
    %353 = arith.mulf %348, %352 : vector<8x2xf32>
    %354 = tpu.concatenate %353, %292 in 0 : vector<8x2xf32>, vector<8x2xf32> -> vector<16x2xf32>
    %cst_76 = arith.constant dense<0.000000e+00> : vector<32x2xf32>
    %355 = tpu.matmul %4, %354, %cst_76 {dimension_numbers = #tpu.dot_dimension_numbers<[1], [0], [0], [1], [0, 0, 1, 1], [], []>} : vector<32x16xf32>, vector<16x2xf32>, vector<32x2xf32> -> vector<32x2xf32>
    %356 = arith.addf %16, %355 : vector<32x2xf32>
    %357 = vector.extract_strided_slice %356 {offsets = [0, 0], sizes = [8, 2], strides = [1, 1]} : vector<32x2xf32> to vector<8x2xf32>
    %358 = arith.negf %357 : vector<8x2xf32>
    %359 = math.exp %358 : vector<8x2xf32>
    %cst_77 = arith.constant 1.000000e+00 : f32
    %360 = vector.broadcast %cst_77 : f32 to vector<8x2xf32>
    %361 = arith.addf %360, %359 : vector<8x2xf32>
    %362 = arith.divf %360, %361 : vector<8x2xf32>
    %363 = vector.extract_strided_slice %356 {offsets = [8, 0], sizes = [8, 2], strides = [1, 1]} : vector<32x2xf32> to vector<8x2xf32>
    %364 = arith.negf %363 : vector<8x2xf32>
    %365 = math.exp %364 : vector<8x2xf32>
    %cst_78 = arith.constant 1.000000e+00 : f32
    %366 = vector.broadcast %cst_78 : f32 to vector<8x2xf32>
    %367 = arith.addf %366, %365 : vector<8x2xf32>
    %368 = arith.divf %366, %367 : vector<8x2xf32>
    %369 = vector.extract_strided_slice %356 {offsets = [16, 0], sizes = [8, 2], strides = [1, 1]} : vector<32x2xf32> to vector<8x2xf32>
    %370 = math.tanh %369 : vector<8x2xf32>
    %371 = vector.extract_strided_slice %356 {offsets = [24, 0], sizes = [8, 2], strides = [1, 1]} : vector<32x2xf32> to vector<8x2xf32>
    %372 = arith.negf %371 : vector<8x2xf32>
    %373 = math.exp %372 : vector<8x2xf32>
    %cst_79 = arith.constant 1.000000e+00 : f32
    %374 = vector.broadcast %cst_79 : f32 to vector<8x2xf32>
    %375 = arith.addf %374, %373 : vector<8x2xf32>
    %376 = arith.divf %374, %375 : vector<8x2xf32>
    %377 = arith.mulf %368, %290 : vector<8x2xf32>
    %378 = arith.mulf %362, %370 : vector<8x2xf32>
    %379 = arith.addf %377, %378 : vector<8x2xf32>
    %380 = math.tanh %379 : vector<8x2xf32>
    %381 = arith.mulf %376, %380 : vector<8x2xf32>
    %c4 = arith.constant 4 : index
    %c0_80 = arith.constant 0 : index
    %c0_81 = arith.constant 0 : index
    %382 = vector.load %arg0[%c4, %c0_80, %c0_81] : memref<8x1x2xf32, #tpu.memory_space<vmem>>, vector<1x1x2xf32>
    %383 = vector.shape_cast %382 : vector<1x1x2xf32> to vector<1x2xf32>
    %384 = vector.shape_cast %383 : vector<1x2xf32> to vector<1x2xf32>
    %385 = vector.broadcast %384 : vector<1x2xf32> to vector<32x2xf32>
    %386 = arith.mulf %19, %385 : vector<32x2xf32>
    %387 = arith.addf %386, %8 : vector<32x2xf32>
    %cst_82 = arith.constant dense<0.000000e+00> : vector<32x2xf32>
    %388 = tpu.matmul %0, %325, %cst_82 {dimension_numbers = #tpu.dot_dimension_numbers<[1], [0], [0], [1], [0, 0, 1, 1], [], []>} : vector<32x8xf32>, vector<8x2xf32>, vector<32x2xf32> -> vector<32x2xf32>
    %389 = arith.addf %387, %388 : vector<32x2xf32>
    %390 = vector.extract_strided_slice %389 {offsets = [0, 0], sizes = [8, 2], strides = [1, 1]} : vector<32x2xf32> to vector<8x2xf32>
    %391 = arith.negf %390 : vector<8x2xf32>
    %392 = math.exp %391 : vector<8x2xf32>
    %cst_83 = arith.constant 1.000000e+00 : f32
    %393 = vector.broadcast %cst_83 : f32 to vector<8x2xf32>
    %394 = arith.addf %393, %392 : vector<8x2xf32>
    %395 = arith.divf %393, %394 : vector<8x2xf32>
    %396 = vector.extract_strided_slice %389 {offsets = [8, 0], sizes = [8, 2], strides = [1, 1]} : vector<32x2xf32> to vector<8x2xf32>
    %397 = arith.negf %396 : vector<8x2xf32>
    %398 = math.exp %397 : vector<8x2xf32>
    %cst_84 = arith.constant 1.000000e+00 : f32
    %399 = vector.broadcast %cst_84 : f32 to vector<8x2xf32>
    %400 = arith.addf %399, %398 : vector<8x2xf32>
    %401 = arith.divf %399, %400 : vector<8x2xf32>
    %402 = vector.extract_strided_slice %389 {offsets = [16, 0], sizes = [8, 2], strides = [1, 1]} : vector<32x2xf32> to vector<8x2xf32>
    %403 = math.tanh %402 : vector<8x2xf32>
    %404 = vector.extract_strided_slice %389 {offsets = [24, 0], sizes = [8, 2], strides = [1, 1]} : vector<32x2xf32> to vector<8x2xf32>
    %405 = arith.negf %404 : vector<8x2xf32>
    %406 = math.exp %405 : vector<8x2xf32>
    %cst_85 = arith.constant 1.000000e+00 : f32
    %407 = vector.broadcast %cst_85 : f32 to vector<8x2xf32>
    %408 = arith.addf %407, %406 : vector<8x2xf32>
    %409 = arith.divf %407, %408 : vector<8x2xf32>
    %410 = arith.mulf %401, %323 : vector<8x2xf32>
    %411 = arith.mulf %395, %403 : vector<8x2xf32>
    %412 = arith.addf %410, %411 : vector<8x2xf32>
    %413 = math.tanh %412 : vector<8x2xf32>
    %414 = arith.mulf %409, %413 : vector<8x2xf32>
    %415 = tpu.concatenate %414, %353 in 0 : vector<8x2xf32>, vector<8x2xf32> -> vector<16x2xf32>
    %cst_86 = arith.constant dense<0.000000e+00> : vector<32x2xf32>
    %416 = tpu.matmul %2, %415, %cst_86 {dimension_numbers = #tpu.dot_dimension_numbers<[1], [0], [0], [1], [0, 0, 1, 1], [], []>} : vector<32x16xf32>, vector<16x2xf32>, vector<32x2xf32> -> vector<32x2xf32>
    %417 = arith.addf %12, %416 : vector<32x2xf32>
    %418 = vector.extract_strided_slice %417 {offsets = [0, 0], sizes = [8, 2], strides = [1, 1]} : vector<32x2xf32> to vector<8x2xf32>
    %419 = arith.negf %418 : vector<8x2xf32>
    %420 = math.exp %419 : vector<8x2xf32>
    %cst_87 = arith.constant 1.000000e+00 : f32
    %421 = vector.broadcast %cst_87 : f32 to vector<8x2xf32>
    %422 = arith.addf %421, %420 : vector<8x2xf32>
    %423 = arith.divf %421, %422 : vector<8x2xf32>
    %424 = vector.extract_strided_slice %417 {offsets = [8, 0], sizes = [8, 2], strides = [1, 1]} : vector<32x2xf32> to vector<8x2xf32>
    %425 = arith.negf %424 : vector<8x2xf32>
    %426 = math.exp %425 : vector<8x2xf32>
    %cst_88 = arith.constant 1.000000e+00 : f32
    %427 = vector.broadcast %cst_88 : f32 to vector<8x2xf32>
    %428 = arith.addf %427, %426 : vector<8x2xf32>
    %429 = arith.divf %427, %428 : vector<8x2xf32>
    %430 = vector.extract_strided_slice %417 {offsets = [16, 0], sizes = [8, 2], strides = [1, 1]} : vector<32x2xf32> to vector<8x2xf32>
    %431 = math.tanh %430 : vector<8x2xf32>
    %432 = vector.extract_strided_slice %417 {offsets = [24, 0], sizes = [8, 2], strides = [1, 1]} : vector<32x2xf32> to vector<8x2xf32>
    %433 = arith.negf %432 : vector<8x2xf32>
    %434 = math.exp %433 : vector<8x2xf32>
    %cst_89 = arith.constant 1.000000e+00 : f32
    %435 = vector.broadcast %cst_89 : f32 to vector<8x2xf32>
    %436 = arith.addf %435, %434 : vector<8x2xf32>
    %437 = arith.divf %435, %436 : vector<8x2xf32>
    %438 = arith.mulf %429, %351 : vector<8x2xf32>
    %439 = arith.mulf %423, %431 : vector<8x2xf32>
    %440 = arith.addf %438, %439 : vector<8x2xf32>
    %441 = math.tanh %440 : vector<8x2xf32>
    %442 = arith.mulf %437, %441 : vector<8x2xf32>
    %443 = tpu.concatenate %442, %381 in 0 : vector<8x2xf32>, vector<8x2xf32> -> vector<16x2xf32>
    %cst_90 = arith.constant dense<0.000000e+00> : vector<32x2xf32>
    %444 = tpu.matmul %4, %443, %cst_90 {dimension_numbers = #tpu.dot_dimension_numbers<[1], [0], [0], [1], [0, 0, 1, 1], [], []>} : vector<32x16xf32>, vector<16x2xf32>, vector<32x2xf32> -> vector<32x2xf32>
    %445 = arith.addf %16, %444 : vector<32x2xf32>
    %446 = vector.extract_strided_slice %445 {offsets = [0, 0], sizes = [8, 2], strides = [1, 1]} : vector<32x2xf32> to vector<8x2xf32>
    %447 = arith.negf %446 : vector<8x2xf32>
    %448 = math.exp %447 : vector<8x2xf32>
    %cst_91 = arith.constant 1.000000e+00 : f32
    %449 = vector.broadcast %cst_91 : f32 to vector<8x2xf32>
    %450 = arith.addf %449, %448 : vector<8x2xf32>
    %451 = arith.divf %449, %450 : vector<8x2xf32>
    %452 = vector.extract_strided_slice %445 {offsets = [8, 0], sizes = [8, 2], strides = [1, 1]} : vector<32x2xf32> to vector<8x2xf32>
    %453 = arith.negf %452 : vector<8x2xf32>
    %454 = math.exp %453 : vector<8x2xf32>
    %cst_92 = arith.constant 1.000000e+00 : f32
    %455 = vector.broadcast %cst_92 : f32 to vector<8x2xf32>
    %456 = arith.addf %455, %454 : vector<8x2xf32>
    %457 = arith.divf %455, %456 : vector<8x2xf32>
    %458 = vector.extract_strided_slice %445 {offsets = [16, 0], sizes = [8, 2], strides = [1, 1]} : vector<32x2xf32> to vector<8x2xf32>
    %459 = math.tanh %458 : vector<8x2xf32>
    %460 = vector.extract_strided_slice %445 {offsets = [24, 0], sizes = [8, 2], strides = [1, 1]} : vector<32x2xf32> to vector<8x2xf32>
    %461 = arith.negf %460 : vector<8x2xf32>
    %462 = math.exp %461 : vector<8x2xf32>
    %cst_93 = arith.constant 1.000000e+00 : f32
    %463 = vector.broadcast %cst_93 : f32 to vector<8x2xf32>
    %464 = arith.addf %463, %462 : vector<8x2xf32>
    %465 = arith.divf %463, %464 : vector<8x2xf32>
    %466 = arith.mulf %457, %379 : vector<8x2xf32>
    %467 = arith.mulf %451, %459 : vector<8x2xf32>
    %468 = arith.addf %466, %467 : vector<8x2xf32>
    %469 = math.tanh %468 : vector<8x2xf32>
    %470 = arith.mulf %465, %469 : vector<8x2xf32>
    %c5 = arith.constant 5 : index
    %c0_94 = arith.constant 0 : index
    %c0_95 = arith.constant 0 : index
    %471 = vector.load %arg0[%c5, %c0_94, %c0_95] : memref<8x1x2xf32, #tpu.memory_space<vmem>>, vector<1x1x2xf32>
    %472 = vector.shape_cast %471 : vector<1x1x2xf32> to vector<1x2xf32>
    %473 = vector.shape_cast %472 : vector<1x2xf32> to vector<1x2xf32>
    %474 = vector.broadcast %473 : vector<1x2xf32> to vector<32x2xf32>
    %475 = arith.mulf %19, %474 : vector<32x2xf32>
    %476 = arith.addf %475, %8 : vector<32x2xf32>
    %cst_96 = arith.constant dense<0.000000e+00> : vector<32x2xf32>
    %477 = tpu.matmul %0, %414, %cst_96 {dimension_numbers = #tpu.dot_dimension_numbers<[1], [0], [0], [1], [0, 0, 1, 1], [], []>} : vector<32x8xf32>, vector<8x2xf32>, vector<32x2xf32> -> vector<32x2xf32>
    %478 = arith.addf %476, %477 : vector<32x2xf32>
    %479 = vector.extract_strided_slice %478 {offsets = [0, 0], sizes = [8, 2], strides = [1, 1]} : vector<32x2xf32> to vector<8x2xf32>
    %480 = arith.negf %479 : vector<8x2xf32>
    %481 = math.exp %480 : vector<8x2xf32>
    %cst_97 = arith.constant 1.000000e+00 : f32
    %482 = vector.broadcast %cst_97 : f32 to vector<8x2xf32>
    %483 = arith.addf %482, %481 : vector<8x2xf32>
    %484 = arith.divf %482, %483 : vector<8x2xf32>
    %485 = vector.extract_strided_slice %478 {offsets = [8, 0], sizes = [8, 2], strides = [1, 1]} : vector<32x2xf32> to vector<8x2xf32>
    %486 = arith.negf %485 : vector<8x2xf32>
    %487 = math.exp %486 : vector<8x2xf32>
    %cst_98 = arith.constant 1.000000e+00 : f32
    %488 = vector.broadcast %cst_98 : f32 to vector<8x2xf32>
    %489 = arith.addf %488, %487 : vector<8x2xf32>
    %490 = arith.divf %488, %489 : vector<8x2xf32>
    %491 = vector.extract_strided_slice %478 {offsets = [16, 0], sizes = [8, 2], strides = [1, 1]} : vector<32x2xf32> to vector<8x2xf32>
    %492 = math.tanh %491 : vector<8x2xf32>
    %493 = vector.extract_strided_slice %478 {offsets = [24, 0], sizes = [8, 2], strides = [1, 1]} : vector<32x2xf32> to vector<8x2xf32>
    %494 = arith.negf %493 : vector<8x2xf32>
    %495 = math.exp %494 : vector<8x2xf32>
    %cst_99 = arith.constant 1.000000e+00 : f32
    %496 = vector.broadcast %cst_99 : f32 to vector<8x2xf32>
    %497 = arith.addf %496, %495 : vector<8x2xf32>
    %498 = arith.divf %496, %497 : vector<8x2xf32>
    %499 = arith.mulf %490, %412 : vector<8x2xf32>
    %500 = arith.mulf %484, %492 : vector<8x2xf32>
    %501 = arith.addf %499, %500 : vector<8x2xf32>
    %502 = math.tanh %501 : vector<8x2xf32>
    %503 = arith.mulf %498, %502 : vector<8x2xf32>
    %504 = tpu.concatenate %503, %442 in 0 : vector<8x2xf32>, vector<8x2xf32> -> vector<16x2xf32>
    %cst_100 = arith.constant dense<0.000000e+00> : vector<32x2xf32>
    %505 = tpu.matmul %2, %504, %cst_100 {dimension_numbers = #tpu.dot_dimension_numbers<[1], [0], [0], [1], [0, 0, 1, 1], [], []>} : vector<32x16xf32>, vector<16x2xf32>, vector<32x2xf32> -> vector<32x2xf32>
    %506 = arith.addf %12, %505 : vector<32x2xf32>
    %507 = vector.extract_strided_slice %506 {offsets = [0, 0], sizes = [8, 2], strides = [1, 1]} : vector<32x2xf32> to vector<8x2xf32>
    %508 = arith.negf %507 : vector<8x2xf32>
    %509 = math.exp %508 : vector<8x2xf32>
    %cst_101 = arith.constant 1.000000e+00 : f32
    %510 = vector.broadcast %cst_101 : f32 to vector<8x2xf32>
    %511 = arith.addf %510, %509 : vector<8x2xf32>
    %512 = arith.divf %510, %511 : vector<8x2xf32>
    %513 = vector.extract_strided_slice %506 {offsets = [8, 0], sizes = [8, 2], strides = [1, 1]} : vector<32x2xf32> to vector<8x2xf32>
    %514 = arith.negf %513 : vector<8x2xf32>
    %515 = math.exp %514 : vector<8x2xf32>
    %cst_102 = arith.constant 1.000000e+00 : f32
    %516 = vector.broadcast %cst_102 : f32 to vector<8x2xf32>
    %517 = arith.addf %516, %515 : vector<8x2xf32>
    %518 = arith.divf %516, %517 : vector<8x2xf32>
    %519 = vector.extract_strided_slice %506 {offsets = [16, 0], sizes = [8, 2], strides = [1, 1]} : vector<32x2xf32> to vector<8x2xf32>
    %520 = math.tanh %519 : vector<8x2xf32>
    %521 = vector.extract_strided_slice %506 {offsets = [24, 0], sizes = [8, 2], strides = [1, 1]} : vector<32x2xf32> to vector<8x2xf32>
    %522 = arith.negf %521 : vector<8x2xf32>
    %523 = math.exp %522 : vector<8x2xf32>
    %cst_103 = arith.constant 1.000000e+00 : f32
    %524 = vector.broadcast %cst_103 : f32 to vector<8x2xf32>
    %525 = arith.addf %524, %523 : vector<8x2xf32>
    %526 = arith.divf %524, %525 : vector<8x2xf32>
    %527 = arith.mulf %518, %440 : vector<8x2xf32>
    %528 = arith.mulf %512, %520 : vector<8x2xf32>
    %529 = arith.addf %527, %528 : vector<8x2xf32>
    %530 = math.tanh %529 : vector<8x2xf32>
    %531 = arith.mulf %526, %530 : vector<8x2xf32>
    %532 = tpu.concatenate %531, %470 in 0 : vector<8x2xf32>, vector<8x2xf32> -> vector<16x2xf32>
    %cst_104 = arith.constant dense<0.000000e+00> : vector<32x2xf32>
    %533 = tpu.matmul %4, %532, %cst_104 {dimension_numbers = #tpu.dot_dimension_numbers<[1], [0], [0], [1], [0, 0, 1, 1], [], []>} : vector<32x16xf32>, vector<16x2xf32>, vector<32x2xf32> -> vector<32x2xf32>
    %534 = arith.addf %16, %533 : vector<32x2xf32>
    %535 = vector.extract_strided_slice %534 {offsets = [0, 0], sizes = [8, 2], strides = [1, 1]} : vector<32x2xf32> to vector<8x2xf32>
    %536 = arith.negf %535 : vector<8x2xf32>
    %537 = math.exp %536 : vector<8x2xf32>
    %cst_105 = arith.constant 1.000000e+00 : f32
    %538 = vector.broadcast %cst_105 : f32 to vector<8x2xf32>
    %539 = arith.addf %538, %537 : vector<8x2xf32>
    %540 = arith.divf %538, %539 : vector<8x2xf32>
    %541 = vector.extract_strided_slice %534 {offsets = [8, 0], sizes = [8, 2], strides = [1, 1]} : vector<32x2xf32> to vector<8x2xf32>
    %542 = arith.negf %541 : vector<8x2xf32>
    %543 = math.exp %542 : vector<8x2xf32>
    %cst_106 = arith.constant 1.000000e+00 : f32
    %544 = vector.broadcast %cst_106 : f32 to vector<8x2xf32>
    %545 = arith.addf %544, %543 : vector<8x2xf32>
    %546 = arith.divf %544, %545 : vector<8x2xf32>
    %547 = vector.extract_strided_slice %534 {offsets = [16, 0], sizes = [8, 2], strides = [1, 1]} : vector<32x2xf32> to vector<8x2xf32>
    %548 = math.tanh %547 : vector<8x2xf32>
    %549 = vector.extract_strided_slice %534 {offsets = [24, 0], sizes = [8, 2], strides = [1, 1]} : vector<32x2xf32> to vector<8x2xf32>
    %550 = arith.negf %549 : vector<8x2xf32>
    %551 = math.exp %550 : vector<8x2xf32>
    %cst_107 = arith.constant 1.000000e+00 : f32
    %552 = vector.broadcast %cst_107 : f32 to vector<8x2xf32>
    %553 = arith.addf %552, %551 : vector<8x2xf32>
    %554 = arith.divf %552, %553 : vector<8x2xf32>
    %555 = arith.mulf %546, %468 : vector<8x2xf32>
    %556 = arith.mulf %540, %548 : vector<8x2xf32>
    %557 = arith.addf %555, %556 : vector<8x2xf32>
    %558 = math.tanh %557 : vector<8x2xf32>
    %559 = arith.mulf %554, %558 : vector<8x2xf32>
    %c6 = arith.constant 6 : index
    %c0_108 = arith.constant 0 : index
    %c0_109 = arith.constant 0 : index
    %560 = vector.load %arg0[%c6, %c0_108, %c0_109] : memref<8x1x2xf32, #tpu.memory_space<vmem>>, vector<1x1x2xf32>
    %561 = vector.shape_cast %560 : vector<1x1x2xf32> to vector<1x2xf32>
    %562 = vector.shape_cast %561 : vector<1x2xf32> to vector<1x2xf32>
    %563 = vector.broadcast %562 : vector<1x2xf32> to vector<32x2xf32>
    %564 = arith.mulf %19, %563 : vector<32x2xf32>
    %565 = arith.addf %564, %8 : vector<32x2xf32>
    %cst_110 = arith.constant dense<0.000000e+00> : vector<32x2xf32>
    %566 = tpu.matmul %0, %503, %cst_110 {dimension_numbers = #tpu.dot_dimension_numbers<[1], [0], [0], [1], [0, 0, 1, 1], [], []>} : vector<32x8xf32>, vector<8x2xf32>, vector<32x2xf32> -> vector<32x2xf32>
    %567 = arith.addf %565, %566 : vector<32x2xf32>
    %568 = vector.extract_strided_slice %567 {offsets = [0, 0], sizes = [8, 2], strides = [1, 1]} : vector<32x2xf32> to vector<8x2xf32>
    %569 = arith.negf %568 : vector<8x2xf32>
    %570 = math.exp %569 : vector<8x2xf32>
    %cst_111 = arith.constant 1.000000e+00 : f32
    %571 = vector.broadcast %cst_111 : f32 to vector<8x2xf32>
    %572 = arith.addf %571, %570 : vector<8x2xf32>
    %573 = arith.divf %571, %572 : vector<8x2xf32>
    %574 = vector.extract_strided_slice %567 {offsets = [8, 0], sizes = [8, 2], strides = [1, 1]} : vector<32x2xf32> to vector<8x2xf32>
    %575 = arith.negf %574 : vector<8x2xf32>
    %576 = math.exp %575 : vector<8x2xf32>
    %cst_112 = arith.constant 1.000000e+00 : f32
    %577 = vector.broadcast %cst_112 : f32 to vector<8x2xf32>
    %578 = arith.addf %577, %576 : vector<8x2xf32>
    %579 = arith.divf %577, %578 : vector<8x2xf32>
    %580 = vector.extract_strided_slice %567 {offsets = [16, 0], sizes = [8, 2], strides = [1, 1]} : vector<32x2xf32> to vector<8x2xf32>
    %581 = math.tanh %580 : vector<8x2xf32>
    %582 = vector.extract_strided_slice %567 {offsets = [24, 0], sizes = [8, 2], strides = [1, 1]} : vector<32x2xf32> to vector<8x2xf32>
    %583 = arith.negf %582 : vector<8x2xf32>
    %584 = math.exp %583 : vector<8x2xf32>
    %cst_113 = arith.constant 1.000000e+00 : f32
    %585 = vector.broadcast %cst_113 : f32 to vector<8x2xf32>
    %586 = arith.addf %585, %584 : vector<8x2xf32>
    %587 = arith.divf %585, %586 : vector<8x2xf32>
    %588 = arith.mulf %579, %501 : vector<8x2xf32>
    %589 = arith.mulf %573, %581 : vector<8x2xf32>
    %590 = arith.addf %588, %589 : vector<8x2xf32>
    %591 = math.tanh %590 : vector<8x2xf32>
    %592 = arith.mulf %587, %591 : vector<8x2xf32>
    %593 = tpu.concatenate %592, %531 in 0 : vector<8x2xf32>, vector<8x2xf32> -> vector<16x2xf32>
    %cst_114 = arith.constant dense<0.000000e+00> : vector<32x2xf32>
    %594 = tpu.matmul %2, %593, %cst_114 {dimension_numbers = #tpu.dot_dimension_numbers<[1], [0], [0], [1], [0, 0, 1, 1], [], []>} : vector<32x16xf32>, vector<16x2xf32>, vector<32x2xf32> -> vector<32x2xf32>
    %595 = arith.addf %12, %594 : vector<32x2xf32>
    %596 = vector.extract_strided_slice %595 {offsets = [0, 0], sizes = [8, 2], strides = [1, 1]} : vector<32x2xf32> to vector<8x2xf32>
    %597 = arith.negf %596 : vector<8x2xf32>
    %598 = math.exp %597 : vector<8x2xf32>
    %cst_115 = arith.constant 1.000000e+00 : f32
    %599 = vector.broadcast %cst_115 : f32 to vector<8x2xf32>
    %600 = arith.addf %599, %598 : vector<8x2xf32>
    %601 = arith.divf %599, %600 : vector<8x2xf32>
    %602 = vector.extract_strided_slice %595 {offsets = [8, 0], sizes = [8, 2], strides = [1, 1]} : vector<32x2xf32> to vector<8x2xf32>
    %603 = arith.negf %602 : vector<8x2xf32>
    %604 = math.exp %603 : vector<8x2xf32>
    %cst_116 = arith.constant 1.000000e+00 : f32
    %605 = vector.broadcast %cst_116 : f32 to vector<8x2xf32>
    %606 = arith.addf %605, %604 : vector<8x2xf32>
    %607 = arith.divf %605, %606 : vector<8x2xf32>
    %608 = vector.extract_strided_slice %595 {offsets = [16, 0], sizes = [8, 2], strides = [1, 1]} : vector<32x2xf32> to vector<8x2xf32>
    %609 = math.tanh %608 : vector<8x2xf32>
    %610 = vector.extract_strided_slice %595 {offsets = [24, 0], sizes = [8, 2], strides = [1, 1]} : vector<32x2xf32> to vector<8x2xf32>
    %611 = arith.negf %610 : vector<8x2xf32>
    %612 = math.exp %611 : vector<8x2xf32>
    %cst_117 = arith.constant 1.000000e+00 : f32
    %613 = vector.broadcast %cst_117 : f32 to vector<8x2xf32>
    %614 = arith.addf %613, %612 : vector<8x2xf32>
    %615 = arith.divf %613, %614 : vector<8x2xf32>
    %616 = arith.mulf %607, %529 : vector<8x2xf32>
    %617 = arith.mulf %601, %609 : vector<8x2xf32>
    %618 = arith.addf %616, %617 : vector<8x2xf32>
    %619 = math.tanh %618 : vector<8x2xf32>
    %620 = arith.mulf %615, %619 : vector<8x2xf32>
    %621 = tpu.concatenate %620, %559 in 0 : vector<8x2xf32>, vector<8x2xf32> -> vector<16x2xf32>
    %cst_118 = arith.constant dense<0.000000e+00> : vector<32x2xf32>
    %622 = tpu.matmul %4, %621, %cst_118 {dimension_numbers = #tpu.dot_dimension_numbers<[1], [0], [0], [1], [0, 0, 1, 1], [], []>} : vector<32x16xf32>, vector<16x2xf32>, vector<32x2xf32> -> vector<32x2xf32>
    %623 = arith.addf %16, %622 : vector<32x2xf32>
    %624 = vector.extract_strided_slice %623 {offsets = [0, 0], sizes = [8, 2], strides = [1, 1]} : vector<32x2xf32> to vector<8x2xf32>
    %625 = arith.negf %624 : vector<8x2xf32>
    %626 = math.exp %625 : vector<8x2xf32>
    %cst_119 = arith.constant 1.000000e+00 : f32
    %627 = vector.broadcast %cst_119 : f32 to vector<8x2xf32>
    %628 = arith.addf %627, %626 : vector<8x2xf32>
    %629 = arith.divf %627, %628 : vector<8x2xf32>
    %630 = vector.extract_strided_slice %623 {offsets = [8, 0], sizes = [8, 2], strides = [1, 1]} : vector<32x2xf32> to vector<8x2xf32>
    %631 = arith.negf %630 : vector<8x2xf32>
    %632 = math.exp %631 : vector<8x2xf32>
    %cst_120 = arith.constant 1.000000e+00 : f32
    %633 = vector.broadcast %cst_120 : f32 to vector<8x2xf32>
    %634 = arith.addf %633, %632 : vector<8x2xf32>
    %635 = arith.divf %633, %634 : vector<8x2xf32>
    %636 = vector.extract_strided_slice %623 {offsets = [16, 0], sizes = [8, 2], strides = [1, 1]} : vector<32x2xf32> to vector<8x2xf32>
    %637 = math.tanh %636 : vector<8x2xf32>
    %638 = vector.extract_strided_slice %623 {offsets = [24, 0], sizes = [8, 2], strides = [1, 1]} : vector<32x2xf32> to vector<8x2xf32>
    %639 = arith.negf %638 : vector<8x2xf32>
    %640 = math.exp %639 : vector<8x2xf32>
    %cst_121 = arith.constant 1.000000e+00 : f32
    %641 = vector.broadcast %cst_121 : f32 to vector<8x2xf32>
    %642 = arith.addf %641, %640 : vector<8x2xf32>
    %643 = arith.divf %641, %642 : vector<8x2xf32>
    %644 = arith.mulf %635, %557 : vector<8x2xf32>
    %645 = arith.mulf %629, %637 : vector<8x2xf32>
    %646 = arith.addf %644, %645 : vector<8x2xf32>
    %647 = math.tanh %646 : vector<8x2xf32>
    %648 = arith.mulf %643, %647 : vector<8x2xf32>
    %c7 = arith.constant 7 : index
    %c0_122 = arith.constant 0 : index
    %c0_123 = arith.constant 0 : index
    %649 = vector.load %arg0[%c7, %c0_122, %c0_123] : memref<8x1x2xf32, #tpu.memory_space<vmem>>, vector<1x1x2xf32>
    %650 = vector.shape_cast %649 : vector<1x1x2xf32> to vector<1x2xf32>
    %651 = vector.shape_cast %650 : vector<1x2xf32> to vector<1x2xf32>
    %652 = vector.broadcast %651 : vector<1x2xf32> to vector<32x2xf32>
    %653 = arith.mulf %19, %652 : vector<32x2xf32>
    %654 = arith.addf %653, %8 : vector<32x2xf32>
    %cst_124 = arith.constant dense<0.000000e+00> : vector<32x2xf32>
    %655 = tpu.matmul %0, %592, %cst_124 {dimension_numbers = #tpu.dot_dimension_numbers<[1], [0], [0], [1], [0, 0, 1, 1], [], []>} : vector<32x8xf32>, vector<8x2xf32>, vector<32x2xf32> -> vector<32x2xf32>
    %656 = arith.addf %654, %655 : vector<32x2xf32>
    %657 = vector.extract_strided_slice %656 {offsets = [0, 0], sizes = [8, 2], strides = [1, 1]} : vector<32x2xf32> to vector<8x2xf32>
    %658 = arith.negf %657 : vector<8x2xf32>
    %659 = math.exp %658 : vector<8x2xf32>
    %cst_125 = arith.constant 1.000000e+00 : f32
    %660 = vector.broadcast %cst_125 : f32 to vector<8x2xf32>
    %661 = arith.addf %660, %659 : vector<8x2xf32>
    %662 = arith.divf %660, %661 : vector<8x2xf32>
    %663 = vector.extract_strided_slice %656 {offsets = [8, 0], sizes = [8, 2], strides = [1, 1]} : vector<32x2xf32> to vector<8x2xf32>
    %664 = arith.negf %663 : vector<8x2xf32>
    %665 = math.exp %664 : vector<8x2xf32>
    %cst_126 = arith.constant 1.000000e+00 : f32
    %666 = vector.broadcast %cst_126 : f32 to vector<8x2xf32>
    %667 = arith.addf %666, %665 : vector<8x2xf32>
    %668 = arith.divf %666, %667 : vector<8x2xf32>
    %669 = vector.extract_strided_slice %656 {offsets = [16, 0], sizes = [8, 2], strides = [1, 1]} : vector<32x2xf32> to vector<8x2xf32>
    %670 = math.tanh %669 : vector<8x2xf32>
    %671 = vector.extract_strided_slice %656 {offsets = [24, 0], sizes = [8, 2], strides = [1, 1]} : vector<32x2xf32> to vector<8x2xf32>
    %672 = arith.negf %671 : vector<8x2xf32>
    %673 = math.exp %672 : vector<8x2xf32>
    %cst_127 = arith.constant 1.000000e+00 : f32
    %674 = vector.broadcast %cst_127 : f32 to vector<8x2xf32>
    %675 = arith.addf %674, %673 : vector<8x2xf32>
    %676 = arith.divf %674, %675 : vector<8x2xf32>
    %677 = arith.mulf %668, %590 : vector<8x2xf32>
    %678 = arith.mulf %662, %670 : vector<8x2xf32>
    %679 = arith.addf %677, %678 : vector<8x2xf32>
    %680 = math.tanh %679 : vector<8x2xf32>
    %681 = arith.mulf %676, %680 : vector<8x2xf32>
    %682 = tpu.concatenate %681, %620 in 0 : vector<8x2xf32>, vector<8x2xf32> -> vector<16x2xf32>
    %cst_128 = arith.constant dense<0.000000e+00> : vector<32x2xf32>
    %683 = tpu.matmul %2, %682, %cst_128 {dimension_numbers = #tpu.dot_dimension_numbers<[1], [0], [0], [1], [0, 0, 1, 1], [], []>} : vector<32x16xf32>, vector<16x2xf32>, vector<32x2xf32> -> vector<32x2xf32>
    %684 = arith.addf %12, %683 : vector<32x2xf32>
    %685 = vector.extract_strided_slice %684 {offsets = [0, 0], sizes = [8, 2], strides = [1, 1]} : vector<32x2xf32> to vector<8x2xf32>
    %686 = arith.negf %685 : vector<8x2xf32>
    %687 = math.exp %686 : vector<8x2xf32>
    %cst_129 = arith.constant 1.000000e+00 : f32
    %688 = vector.broadcast %cst_129 : f32 to vector<8x2xf32>
    %689 = arith.addf %688, %687 : vector<8x2xf32>
    %690 = arith.divf %688, %689 : vector<8x2xf32>
    %691 = vector.extract_strided_slice %684 {offsets = [8, 0], sizes = [8, 2], strides = [1, 1]} : vector<32x2xf32> to vector<8x2xf32>
    %692 = arith.negf %691 : vector<8x2xf32>
    %693 = math.exp %692 : vector<8x2xf32>
    %cst_130 = arith.constant 1.000000e+00 : f32
    %694 = vector.broadcast %cst_130 : f32 to vector<8x2xf32>
    %695 = arith.addf %694, %693 : vector<8x2xf32>
    %696 = arith.divf %694, %695 : vector<8x2xf32>
    %697 = vector.extract_strided_slice %684 {offsets = [16, 0], sizes = [8, 2], strides = [1, 1]} : vector<32x2xf32> to vector<8x2xf32>
    %698 = math.tanh %697 : vector<8x2xf32>
    %699 = vector.extract_strided_slice %684 {offsets = [24, 0], sizes = [8, 2], strides = [1, 1]} : vector<32x2xf32> to vector<8x2xf32>
    %700 = arith.negf %699 : vector<8x2xf32>
    %701 = math.exp %700 : vector<8x2xf32>
    %cst_131 = arith.constant 1.000000e+00 : f32
    %702 = vector.broadcast %cst_131 : f32 to vector<8x2xf32>
    %703 = arith.addf %702, %701 : vector<8x2xf32>
    %704 = arith.divf %702, %703 : vector<8x2xf32>
    %705 = arith.mulf %696, %618 : vector<8x2xf32>
    %706 = arith.mulf %690, %698 : vector<8x2xf32>
    %707 = arith.addf %705, %706 : vector<8x2xf32>
    %708 = math.tanh %707 : vector<8x2xf32>
    %709 = arith.mulf %704, %708 : vector<8x2xf32>
    %710 = tpu.concatenate %709, %648 in 0 : vector<8x2xf32>, vector<8x2xf32> -> vector<16x2xf32>
    %cst_132 = arith.constant dense<0.000000e+00> : vector<32x2xf32>
    %711 = tpu.matmul %4, %710, %cst_132 {dimension_numbers = #tpu.dot_dimension_numbers<[1], [0], [0], [1], [0, 0, 1, 1], [], []>} : vector<32x16xf32>, vector<16x2xf32>, vector<32x2xf32> -> vector<32x2xf32>
    %712 = arith.addf %16, %711 : vector<32x2xf32>
    %713 = vector.extract_strided_slice %712 {offsets = [0, 0], sizes = [8, 2], strides = [1, 1]} : vector<32x2xf32> to vector<8x2xf32>
    %714 = arith.negf %713 : vector<8x2xf32>
    %715 = math.exp %714 : vector<8x2xf32>
    %cst_133 = arith.constant 1.000000e+00 : f32
    %716 = vector.broadcast %cst_133 : f32 to vector<8x2xf32>
    %717 = arith.addf %716, %715 : vector<8x2xf32>
    %718 = arith.divf %716, %717 : vector<8x2xf32>
    %719 = vector.extract_strided_slice %712 {offsets = [8, 0], sizes = [8, 2], strides = [1, 1]} : vector<32x2xf32> to vector<8x2xf32>
    %720 = arith.negf %719 : vector<8x2xf32>
    %721 = math.exp %720 : vector<8x2xf32>
    %cst_134 = arith.constant 1.000000e+00 : f32
    %722 = vector.broadcast %cst_134 : f32 to vector<8x2xf32>
    %723 = arith.addf %722, %721 : vector<8x2xf32>
    %724 = arith.divf %722, %723 : vector<8x2xf32>
    %725 = vector.extract_strided_slice %712 {offsets = [16, 0], sizes = [8, 2], strides = [1, 1]} : vector<32x2xf32> to vector<8x2xf32>
    %726 = math.tanh %725 : vector<8x2xf32>
    %727 = vector.extract_strided_slice %712 {offsets = [24, 0], sizes = [8, 2], strides = [1, 1]} : vector<32x2xf32> to vector<8x2xf32>
    %728 = arith.negf %727 : vector<8x2xf32>
    %729 = math.exp %728 : vector<8x2xf32>
    %cst_135 = arith.constant 1.000000e+00 : f32
    %730 = vector.broadcast %cst_135 : f32 to vector<8x2xf32>
    %731 = arith.addf %730, %729 : vector<8x2xf32>
    %732 = arith.divf %730, %731 : vector<8x2xf32>
    %733 = arith.mulf %724, %646 : vector<8x2xf32>
    %734 = arith.mulf %718, %726 : vector<8x2xf32>
    %735 = arith.addf %733, %734 : vector<8x2xf32>
    %736 = math.tanh %735 : vector<8x2xf32>
    %737 = arith.mulf %732, %736 : vector<8x2xf32>
    %c0_136 = arith.constant 0 : index
    %c0_137 = arith.constant 0 : index
    %738 = vector.load %arg5[%c0_136, %c0_137] : memref<8x1xf32, #tpu.memory_space<vmem>>, vector<8x1xf32>
    %739 = vector.broadcast %738 : vector<8x1xf32> to vector<8x2xf32>
    %740 = arith.mulf %739, %737 : vector<8x2xf32>
    %cst_138 = arith.constant dense<0.000000e+00> : vector<2xf32>
    %741 = vector.multi_reduction <add>, %740, %cst_138 [0] : vector<8x2xf32> to vector<2xf32>
    %742 = vector.shape_cast %741 : vector<2xf32> to vector<1x2xf32>
    %c0_139 = arith.constant 0 : index
    %c0_140 = arith.constant 0 : index
    %743 = vector.load %arg6[%c0_139, %c0_140] : memref<1x1xf32, #tpu.memory_space<vmem>>, vector<1x1xf32>
    %744 = vector.broadcast %743 : vector<1x1xf32> to vector<1x2xf32>
    %745 = arith.addf %742, %744 : vector<1x2xf32>
    %c0_141 = arith.constant 0 : index
    %c0_142 = arith.constant 0 : index
    %746 = vector.load %arg7[%c0_141, %c0_142] : memref<1x2xf32, #tpu.memory_space<vmem>>, vector<1x2xf32>
    tpu.vector_store %arg7[%c0_141, %c0_142], %745 {strides = array<i32>} : memref<1x2xf32, #tpu.memory_space<vmem>>, vector<1x2xf32>,
    return
  }
}

</mosaic_0001>

<llo_original>
// kernel: net_forward.1
$region0: #{net_forward.1}
  #allocation0 [shape = 'u32[]', space=smem, size = 0x4, offset = 0x4, fixed_abs, tag = 'smem constant byte address 0x4 - core index']
  #allocation1 [shape = 'u32[72,128]{1,0:T(1,128)}', space=vmem, size = 0x9000, scoped, tag = 'internal scratch']
  #allocation2 [shape = 'f32[1,1]{1,0:T(1,128)S(1)}', space=vmem, size = 0x200, scoped, tag = 'scoped memory for net_forward.1']
  %s0 = inlined_call_operand.vmem [shape: f32[8,1,2], index: 0, kind: input, shape index: {}]
  %s1 = inlined_call_operand.vmem [shape: f32[32,1], index: 1, kind: input, shape index: {}]
  %s2 = inlined_call_operand.vmem [shape: f32[32,8], index: 2, kind: input, shape index: {}]
  %s3 = inlined_call_operand.vmem [shape: f32[2,32,16], index: 3, kind: input, shape index: {}]
  %s4 = inlined_call_operand.vmem [shape: f32[3,32,1], index: 4, kind: input, shape index: {}]
  %s5 = inlined_call_operand.vmem [shape: f32[8,1], index: 5, kind: input, shape index: {}]
  %s6 = inlined_call_operand.<no memory space> [shape: f32[1,1], index: 6, kind: input, shape index: {}]
  %s7 = inlined_call_operand.hbm [shape: f32[1,2], index: 7, kind: output, shape index: {}]
  %s8 = sld [smem:[#allocation0]]
  $region38: #{net_forward.1} parent=0
    _
  %s10 = ssub.s32 1, %s8
  %s11 = scalar_select 0, %s10, %s8
  %v12 = vstv %s6
  %13 = vst [vmem:[#allocation2] sm:$0x1] %v12
  $region1: #{net_forward.1} parent=0
    #allocation3 [shape = 'u8[512]{0}', space=vmem, size = 0x400, scoped, tag = 'output window, operand 0, single buffered']
    #allocation4 [shape = 's32[1]{0}', space=sflag, size = 0x4, scoped, tag = 'scoped memory for net_forward.1']
    %14 = vsyncpa [#allocation4], 0
    // Predicated region
    $region2: #{net_forward.1} parent=1 // pred_check
      _
    $region3: #{net_forward.1} parent=1 // pred_check_branch
      %16 = sbr.rel (0) target = $region5
    $region4: #{net_forward.1} parent=1 // pred_region
      _
    $region5: #{net_forward.1} parent=1 // pred_fallthru
      _
    // Predicated region
    $region6: #{net_forward.1} parent=1 // pred_check
      _
    $region7: #{net_forward.1} parent=1 // pred_check_branch
      %18 = sbr.rel (0) target = $region9
    $region8: #{net_forward.1} parent=1 // pred_region
      _
    $region9: #{net_forward.1} parent=1 // pred_fallthru
      _
    // Predicated region
    $region10: #{net_forward.1} parent=1 // pred_check
      _
    $region11: #{net_forward.1} parent=1 // pred_check_branch
      %20 = sbr.rel (0) target = $region13
    $region12: #{net_forward.1} parent=1 // pred_region
      _
    $region13: #{net_forward.1} parent=1 // pred_fallthru
      _
    // Predicated region
    $region14: #{net_forward.1} parent=1 // pred_check
      _
    $region15: #{net_forward.1} parent=1 // pred_check_branch
      %22 = sbr.rel (0) target = $region17
    $region16: #{net_forward.1} parent=1 // pred_region
      _
    $region17: #{net_forward.1} parent=1 // pred_fallthru
      _
    // Predicated region
    $region18: #{net_forward.1} parent=1 // pred_check
      _
    $region19: #{net_forward.1} parent=1 // pred_check_branch
      %24 = sbr.rel (0) target = $region21
    $region20: #{net_forward.1} parent=1 // pred_region
      _
    $region21: #{net_forward.1} parent=1 // pred_fallthru
      _
    // Predicated region
    $region22: #{net_forward.1} parent=1 // pred_check
      _
    $region23: #{net_forward.1} parent=1 // pred_check_branch
      %26 = sbr.rel (0) target = $region25
    $region24: #{net_forward.1} parent=1 // pred_region
      _
    $region25: #{net_forward.1} parent=1 // pred_fallthru
      _
    // Predicated region
    $region26: #{net_forward.1} parent=1 // pred_check
      _
    $region27: #{net_forward.1} parent=1 // pred_check_branch
      %28 = sbr.rel (0) target = $region29
    $region28: #{net_forward.1} parent=1 // pred_region
      _
    $region29: #{net_forward.1} parent=1 // pred_fallthru
      _
    %v29 = vld [vmem:[%s2] sm:$0xff]
    %v30 = vld [vmem:[%s2 + $0x8] sm:$0xff]
    %v31 = vld [vmem:[%s2 + $0x10] sm:$0xff]
    %v32 = vld [vmem:[%s2 + $0x18] sm:$0xff]
    %v33 = vld [vmem:[%s3] sm:$0xff]
    %v34 = vld [vmem:[%s3 + $0x8] sm:$0xff]
    %v35 = vld [vmem:[%s3 + $0x10] sm:$0xff]
    %v36 = vld [vmem:[%s3 + $0x18] sm:$0xff]
    %s37 = scalar_lea.vmem %s3, 32
    %v38 = vld [vmem:[%s37] sm:$0xff]
    %v39 = vld [vmem:[%s37 + $0x8] sm:$0xff]
    %v40 = vld [vmem:[%s37 + $0x10] sm:$0xff]
    %v41 = vld [vmem:[%s37 + $0x18] sm:$0xff]
    %v42 = vld [vmem:[%s4] sm:$0xff]
    %v43 = vld [vmem:[%s4 + $0x8] sm:$0xff]
    %v44 = vld [vmem:[%s4 + $0x10] sm:$0xff]
    %v45 = vld [vmem:[%s4 + $0x18] sm:$0xff]
    %47 = vset.pattern.permute.xlu0 0
    %48 = vperm.xlu0 %47, %v42
    %v49 = vpop.permute.xlu0 %48
    %52 = vset.pattern.permute.xlu0 0
    %53 = vperm.xlu0 %52, %v43
    %v54 = vpop.permute.xlu0 %53
    %57 = vset.pattern.permute.xlu0 0
    %58 = vperm.xlu0 %57, %v44
    %v59 = vpop.permute.xlu0 %58
    %62 = vset.pattern.permute.xlu0 0
    %63 = vperm.xlu0 %62, %v45
    %v64 = vpop.permute.xlu0 %63
    %s66 = scalar_lea.vmem %s4, 32
    %v67 = vld [vmem:[%s66] sm:$0xff]
    %v68 = vld [vmem:[%s66 + $0x8] sm:$0xff]
    %v69 = vld [vmem:[%s66 + $0x10] sm:$0xff]
    %v70 = vld [vmem:[%s66 + $0x18] sm:$0xff]
    %72 = vset.pattern.permute.xlu0 0
    %73 = vperm.xlu0 %72, %v67
    %v74 = vpop.permute.xlu0 %73
    %77 = vset.pattern.permute.xlu0 0
    %78 = vperm.xlu0 %77, %v68
    %v79 = vpop.permute.xlu0 %78
    %82 = vset.pattern.permute.xlu0 0
    %83 = vperm.xlu0 %82, %v69
    %v84 = vpop.permute.xlu0 %83
    %87 = vset.pattern.permute.xlu0 0
    %88 = vperm.xlu0 %87, %v70
    %v89 = vpop.permute.xlu0 %88
    %s91 = scalar_lea.vmem %s4, 64
    %v92 = vld [vmem:[%s91] sm:$0xff]
    %v93 = vld [vmem:[%s91 + $0x8] sm:$0xff]
    %v94 = vld [vmem:[%s91 + $0x10] sm:$0xff]
    %v95 = vld [vmem:[%s91 + $0x18] sm:$0xff]
    %97 = vset.pattern.permute.xlu0 0
    %98 = vperm.xlu0 %97, %v92
    %v99 = vpop.permute.xlu0 %98
    %102 = vset.pattern.permute.xlu0 0
    %103 = vperm.xlu0 %102, %v93
    %v104 = vpop.permute.xlu0 %103
    %107 = vset.pattern.permute.xlu0 0
    %108 = vperm.xlu0 %107, %v94
    %v109 = vpop.permute.xlu0 %108
    %112 = vset.pattern.permute.xlu0 0
    %113 = vperm.xlu0 %112, %v95
    %v114 = vpop.permute.xlu0 %113
    %v116 = vld [vmem:[%s1] sm:$0xff]
    %v117 = vld [vmem:[%s1 + $0x8] sm:$0xff]
    %v118 = vld [vmem:[%s1 + $0x10] sm:$0xff]
    %v119 = vld [vmem:[%s1 + $0x18] sm:$0xff]
    %121 = vset.pattern.permute.xlu0 0
    %122 = vperm.xlu0 %121, %v116
    %v123 = vpop.permute.xlu0 %122
    %126 = vset.pattern.permute.xlu0 0
    %127 = vperm.xlu0 %126, %v117
    %v128 = vpop.permute.xlu0 %127
    %131 = vset.pattern.permute.xlu0 0
    %132 = vperm.xlu0 %131, %v118
    %v133 = vpop.permute.xlu0 %132
    %136 = vset.pattern.permute.xlu0 0
    %137 = vperm.xlu0 %136, %v119
    %v138 = vpop.permute.xlu0 %137
    %v140 = vld [vmem:[%s0] sm:$0x1]
    %v142 = vperm.slane %v140, 0
    %v144 = vmul.f32 %v123, %v142
    %v145 = vmul.f32 %v128, %v142
    %v146 = vmul.f32 %v133, %v142
    %v147 = vmul.f32 %v138, %v142
    %v148 = vadd.f32 %v144, %v49
    %v149 = vadd.f32 %v145, %v54
    %v150 = vadd.f32 %v146, %v59
    %v151 = vadd.f32 %v147, %v64
    %vm152 = vcmask 64512
    %v154 = vsel %vm152, %v29, 0
    %v157 = vsel %vm152, %v30, 0
    %v160 = vsel %vm152, %v31, 0
    %v163 = vsel %vm152, %v32, 0
    %165 = vmatpush.msra.mxu0 0.0
    %166 = vmatpush.msra.mxu0 0.0
    %167 = vmatpush.msra.mxu0 0.0
    %168 = vmatpush.msra.mxu0 0.0
    %169 = vmatpush.msra.mxu0 0.0
    %170 = vmatpush.msra.mxu0 0.0
    %171 = vmatpush.msra.mxu0 0.0
    %172 = vmatpush.msra.mxu0 0.0
    %173 = vmatpush.msra.mxu0 0.0
    %174 = vmatpush.msra.mxu0 0.0
    %175 = vmatpush.msra.mxu0 0.0
    %176 = vmatpush.msra.mxu0 0.0
    %177 = vmatpush.msra.mxu0 0.0
    %178 = vmatpush.msra.mxu0 0.0
    %179 = vmatpush.msra.mxu0 0.0
    %180 = vmatpush.msra.mxu0 0.0
    %181 = vmatmul.f32.gmra.mxu0 %v154
    %v182 = vpop.f32.mrf.mxu0
    %v183 = vadd.f32 0.0, %v182
    %184 = vmatmul.f32.gmra.mxu0 %v157
    %v185 = vpop.f32.mrf.mxu0
    %v186 = vadd.f32 0.0, %v185
    %187 = vmatmul.f32.gmra.mxu0 %v160
    %v188 = vpop.f32.mrf.mxu0
    %v189 = vadd.f32 0.0, %v188
    %190 = vmatmul.f32.gmra.mxu0 %v163
    %v191 = vpop.f32.mrf.mxu0
    %v192 = vadd.f32 0.0, %v191
    %193 = vdwg.mxu0
    %v194 = vadd.f32 %v148, %v183
    %v195 = vadd.f32 %v149, %v186
    %v196 = vadd.f32 %v150, %v189
    %v197 = vadd.f32 %v151, %v192
    %v198 = vxor.u32 %v194, 2147483648
    %v199 = vmul.f32 %v198, 1.442695
    %v200 = vpow.pop %v199
    %v201 = vadd.f32 %v200, 1.0
    %v202 = vrcp.pop %v201
    %v203 = vmul.f32 %v201, %v202
    %v204 = vsub.f32 1.0, %v203
    %v205 = vmul.f32 %v202, %v204
    %v206 = vadd.f32 %v202, %v205
    %vm207 = vweird.f32 %v201
    %vm208 = vweird.f32 %v202
    %vm209 = vmor %vm207, %vm208
    %v210 = vsel %vm209, %v202, %v206
    %v211 = vand.u32 2147483647, %v201
    %vm212 = vcmp.eq.f32.partialorder %v211, 8.507059e+37
    %v213 = vand.u32 %v201, 2147483648
    %v214 = vor.u32 1.1754944e-38, %v213
    %v215 = vsel %vm212, %v214, %v210
    %v216 = vmul.f32 1.0, %v215
    %v217 = vxor.u32 %v195, 2147483648
    %v218 = vmul.f32 %v217, 1.442695
    %v219 = vpow.pop %v218
    %v220 = vadd.f32 %v219, 1.0
    %v221 = vrcp.pop %v220
    %v222 = vmul.f32 %v220, %v221
    %v223 = vsub.f32 1.0, %v222
    %v224 = vmul.f32 %v221, %v223
    %v225 = vadd.f32 %v221, %v224
    %vm226 = vweird.f32 %v220
    %vm227 = vweird.f32 %v221
    %vm228 = vmor %vm226, %vm227
    %v229 = vsel %vm228, %v221, %v225
    %v230 = vand.u32 2147483647, %v220
    %vm231 = vcmp.eq.f32.partialorder %v230, 8.507059e+37
    %v232 = vand.u32 %v220, 2147483648
    %v233 = vor.u32 1.1754944e-38, %v232
    %v234 = vsel %vm231, %v233, %v229
    %v235 = vmul.f32 1.0, %v234
    %v236 = vtanh.pop %v196
    %v237 = vxor.u32 %v197, 2147483648
    %v238 = vmul.f32 %v237, 1.442695
    %v239 = vpow.pop %v238
    %v240 = vadd.f32 %v239, 1.0
    %v241 = vrcp.pop %v240
    %v242 = vmul.f32 %v240, %v241
    %v243 = vsub.f32 1.0, %v242
    %v244 = vmul.f32 %v241, %v243
    %v245 = vadd.f32 %v241, %v244
    %vm246 = vweird.f32 %v240
    %vm247 = vweird.f32 %v241
    %vm248 = vmor %vm246, %vm247
    %v249 = vsel %vm248, %v241, %v245
    %v250 = vand.u32 2147483647, %v240
    %vm251 = vcmp.eq.f32.partialorder %v250, 8.507059e+37
    %v252 = vand.u32 %v240, 2147483648
    %v253 = vor.u32 1.1754944e-38, %v252
    %v254 = vsel %vm251, %v253, %v249
    %v255 = vmul.f32 1.0, %v254
    %v256 = vmul.f32 %v235, 0.0
    %v257 = vmul.f32 %v216, %v236
    %v258 = vadd.f32 %v256, %v257
    %v259 = vtanh.pop %v258
    %v260 = vmul.f32 %v255, %v259
    %vm261 = vcmask 130048
    %v263 = vsel %vm261, %v33, 0
    %v266 = vsel %vm261, %v34, 0
    %v269 = vsel %vm261, %v35, 0
    %v272 = vsel %vm261, %v36, 0
    %274 = vmatpush.msra.mxu0 0.0
    %275 = vmatpush.msra.mxu0 0.0
    %276 = vmatpush.msra.mxu0 0.0
    %277 = vmatpush.msra.mxu0 0.0
    %278 = vmatpush.msra.mxu0 0.0
    %279 = vmatpush.msra.mxu0 0.0
    %280 = vmatpush.msra.mxu0 0.0
    %281 = vmatpush.msra.mxu0 0.0
    %282 = vmatpush.msra.mxu0 0.0
    %283 = vmatpush.msra.mxu0 0.0
    %284 = vmatpush.msra.mxu0 0.0
    %285 = vmatpush.msra.mxu0 0.0
    %286 = vmatpush.msra.mxu0 0.0
    %287 = vmatpush.msra.mxu0 0.0
    %288 = vmatpush.msra.mxu0 0.0
    %289 = vmatpush.msra.mxu0 %v260
    %290 = vmatmul.f32.gmra.mxu0 %v263
    %v291 = vpop.f32.mrf.mxu0
    %v292 = vadd.f32 0.0, %v291
    %293 = vmatmul.f32.gmra.mxu0 %v266
    %v294 = vpop.f32.mrf.mxu0
    %v295 = vadd.f32 0.0, %v294
    %296 = vmatmul.f32.gmra.mxu0 %v269
    %v297 = vpop.f32.mrf.mxu0
    %v298 = vadd.f32 0.0, %v297
    %299 = vmatmul.f32.gmra.mxu0 %v272
    %v300 = vpop.f32.mrf.mxu0
    %v301 = vadd.f32 0.0, %v300
    %302 = vdwg.mxu0
    %v303 = vadd.f32 %v74, %v292
    %v304 = vadd.f32 %v79, %v295
    %v305 = vadd.f32 %v84, %v298
    %v306 = vadd.f32 %v89, %v301
    %v307 = vxor.u32 %v303, 2147483648
    %v308 = vmul.f32 %v307, 1.442695
    %v309 = vpow.pop %v308
    %v310 = vadd.f32 %v309, 1.0
    %v311 = vrcp.pop %v310
    %v312 = vmul.f32 %v310, %v311
    %v313 = vsub.f32 1.0, %v312
    %v314 = vmul.f32 %v311, %v313
    %v315 = vadd.f32 %v311, %v314
    %vm316 = vweird.f32 %v310
    %vm317 = vweird.f32 %v311
    %vm318 = vmor %vm316, %vm317
    %v319 = vsel %vm318, %v311, %v315
    %v320 = vand.u32 2147483647, %v310
    %vm321 = vcmp.eq.f32.partialorder %v320, 8.507059e+37
    %v322 = vand.u32 %v310, 2147483648
    %v323 = vor.u32 1.1754944e-38, %v322
    %v324 = vsel %vm321, %v323, %v319
    %v325 = vmul.f32 1.0, %v324
    %v326 = vxor.u32 %v304, 2147483648
    %v327 = vmul.f32 %v326, 1.442695
    %v328 = vpow.pop %v327
    %v329 = vadd.f32 %v328, 1.0
    %v330 = vrcp.pop %v329
    %v331 = vmul.f32 %v329, %v330
    %v332 = vsub.f32 1.0, %v331
    %v333 = vmul.f32 %v330, %v332
    %v334 = vadd.f32 %v330, %v333
    %vm335 = vweird.f32 %v329
    %vm336 = vweird.f32 %v330
    %vm337 = vmor %vm335, %vm336
    %v338 = vsel %vm337, %v330, %v334
    %v339 = vand.u32 2147483647, %v329
    %vm340 = vcmp.eq.f32.partialorder %v339, 8.507059e+37
    %v341 = vand.u32 %v329, 2147483648
    %v342 = vor.u32 1.1754944e-38, %v341
    %v343 = vsel %vm340, %v342, %v338
    %v344 = vmul.f32 1.0, %v343
    %v345 = vtanh.pop %v305
    %v346 = vxor.u32 %v306, 2147483648
    %v347 = vmul.f32 %v346, 1.442695
    %v348 = vpow.pop %v347
    %v349 = vadd.f32 %v348, 1.0
    %v350 = vrcp.pop %v349
    %v351 = vmul.f32 %v349, %v350
    %v352 = vsub.f32 1.0, %v351
    %v353 = vmul.f32 %v350, %v352
    %v354 = vadd.f32 %v350, %v353
    %vm355 = vweird.f32 %v349
    %vm356 = vweird.f32 %v350
    %vm357 = vmor %vm355, %vm356
    %v358 = vsel %vm357, %v350, %v354
    %v359 = vand.u32 2147483647, %v349
    %vm360 = vcmp.eq.f32.partialorder %v359, 8.507059e+37
    %v361 = vand.u32 %v349, 2147483648
    %v362 = vor.u32 1.1754944e-38, %v361
    %v363 = vsel %vm360, %v362, %v358
    %v364 = vmul.f32 1.0, %v363
    %v365 = vmul.f32 %v344, 0.0
    %v366 = vmul.f32 %v325, %v345
    %v367 = vadd.f32 %v365, %v366
    %v368 = vtanh.pop %v367
    %v369 = vmul.f32 %v364, %v368
    %v371 = vsel %vm261, %v38, 0
    %v374 = vsel %vm261, %v39, 0
    %v377 = vsel %vm261, %v40, 0
    %v380 = vsel %vm261, %v41, 0
    %382 = vmatpush.msra.mxu0 0.0
    %383 = vmatpush.msra.mxu0 0.0
    %384 = vmatpush.msra.mxu0 0.0
    %385 = vmatpush.msra.mxu0 0.0
    %386 = vmatpush.msra.mxu0 0.0
    %387 = vmatpush.msra.mxu0 0.0
    %388 = vmatpush.msra.mxu0 0.0
    %389 = vmatpush.msra.mxu0 0.0
    %390 = vmatpush.msra.mxu0 0.0
    %391 = vmatpush.msra.mxu0 0.0
    %392 = vmatpush.msra.mxu0 0.0
    %393 = vmatpush.msra.mxu0 0.0
    %394 = vmatpush.msra.mxu0 0.0
    %395 = vmatpush.msra.mxu0 0.0
    %396 = vmatpush.msra.mxu0 0.0
    %397 = vmatpush.msra.mxu0 %v369
    %398 = vmatmul.f32.gmra.mxu0 %v371
    %v399 = vpop.f32.mrf.mxu0
    %v400 = vadd.f32 0.0, %v399
    %401 = vmatmul.f32.gmra.mxu0 %v374
    %v402 = vpop.f32.mrf.mxu0
    %v403 = vadd.f32 0.0, %v402
    %404 = vmatmul.f32.gmra.mxu0 %v377
    %v405 = vpop.f32.mrf.mxu0
    %v406 = vadd.f32 0.0, %v405
    %407 = vmatmul.f32.gmra.mxu0 %v380
    %v408 = vpop.f32.mrf.mxu0
    %v409 = vadd.f32 0.0, %v408
    %410 = vdwg.mxu0
    %v411 = vadd.f32 %v99, %v400
    %v412 = vadd.f32 %v104, %v403
    %v413 = vadd.f32 %v109, %v406
    %v414 = vadd.f32 %v114, %v409
    %v415 = vxor.u32 %v411, 2147483648
    %v416 = vmul.f32 %v415, 1.442695
    %v417 = vpow.pop %v416
    %v418 = vadd.f32 %v417, 1.0
    %v419 = vrcp.pop %v418
    %v420 = vmul.f32 %v418, %v419
    %v421 = vsub.f32 1.0, %v420
    %v422 = vmul.f32 %v419, %v421
    %v423 = vadd.f32 %v419, %v422
    %vm424 = vweird.f32 %v418
    %vm425 = vweird.f32 %v419
    %vm426 = vmor %vm424, %vm425
    %v427 = vsel %vm426, %v419, %v423
    %v428 = vand.u32 2147483647, %v418
    %vm429 = vcmp.eq.f32.partialorder %v428, 8.507059e+37
    %v430 = vand.u32 %v418, 2147483648
    %v431 = vor.u32 1.1754944e-38, %v430
    %v432 = vsel %vm429, %v431, %v427
    %v433 = vmul.f32 1.0, %v432
    %v434 = vxor.u32 %v412, 2147483648
    %v435 = vmul.f32 %v434, 1.442695
    %v436 = vpow.pop %v435
    %v437 = vadd.f32 %v436, 1.0
    %v438 = vrcp.pop %v437
    %v439 = vmul.f32 %v437, %v438
    %v440 = vsub.f32 1.0, %v439
    %v441 = vmul.f32 %v438, %v440
    %v442 = vadd.f32 %v438, %v441
    %vm443 = vweird.f32 %v437
    %vm444 = vweird.f32 %v438
    %vm445 = vmor %vm443, %vm444
    %v446 = vsel %vm445, %v438, %v442
    %v447 = vand.u32 2147483647, %v437
    %vm448 = vcmp.eq.f32.partialorder %v447, 8.507059e+37
    %v449 = vand.u32 %v437, 2147483648
    %v450 = vor.u32 1.1754944e-38, %v449
    %v451 = vsel %vm448, %v450, %v446
    %v452 = vmul.f32 1.0, %v451
    %v453 = vtanh.pop %v413
    %v454 = vxor.u32 %v414, 2147483648
    %v455 = vmul.f32 %v454, 1.442695
    %v456 = vpow.pop %v455
    %v457 = vadd.f32 %v456, 1.0
    %v458 = vrcp.pop %v457
    %v459 = vmul.f32 %v457, %v458
    %v460 = vsub.f32 1.0, %v459
    %v461 = vmul.f32 %v458, %v460
    %v462 = vadd.f32 %v458, %v461
    %vm463 = vweird.f32 %v457
    %vm464 = vweird.f32 %v458
    %vm465 = vmor %vm463, %vm464
    %v466 = vsel %vm465, %v458, %v462
    %v467 = vand.u32 2147483647, %v457
    %vm468 = vcmp.eq.f32.partialorder %v467, 8.507059e+37
    %v469 = vand.u32 %v457, 2147483648
    %v470 = vor.u32 1.1754944e-38, %v469
    %v471 = vsel %vm468, %v470, %v466
    %v472 = vmul.f32 1.0, %v471
    %v473 = vmul.f32 %v452, 0.0
    %v474 = vmul.f32 %v433, %v453
    %v475 = vadd.f32 %v473, %v474
    %v476 = vtanh.pop %v475
    %v477 = vmul.f32 %v472, %v476
    %s478 = scalar_lea.vmem %s0, 1
    %v479 = vld [vmem:[%s478] sm:$0x1]
    %v481 = vperm.slane %v479, 0
    %v483 = vmul.f32 %v123, %v481
    %v484 = vmul.f32 %v128, %v481
    %v485 = vmul.f32 %v133, %v481
    %v486 = vmul.f32 %v138, %v481
    %v487 = vadd.f32 %v483, %v49
    %v488 = vadd.f32 %v484, %v54
    %v489 = vadd.f32 %v485, %v59
    %v490 = vadd.f32 %v486, %v64
    %491 = vmatpush.msra.mxu0 0.0
    %492 = vmatpush.msra.mxu0 0.0
    %493 = vmatpush.msra.mxu0 0.0
    %494 = vmatpush.msra.mxu0 0.0
    %495 = vmatpush.msra.mxu0 0.0
    %496 = vmatpush.msra.mxu0 0.0
    %497 = vmatpush.msra.mxu0 0.0
    %498 = vmatpush.msra.mxu0 0.0
    %499 = vmatpush.msra.mxu0 0.0
    %500 = vmatpush.msra.mxu0 0.0
    %501 = vmatpush.msra.mxu0 0.0
    %502 = vmatpush.msra.mxu0 0.0
    %503 = vmatpush.msra.mxu0 0.0
    %504 = vmatpush.msra.mxu0 0.0
    %505 = vmatpush.msra.mxu0 0.0
    %506 = vmatpush.msra.mxu0 %v260
    %507 = vmatmul.f32.gmra.mxu0 %v154
    %v508 = vpop.f32.mrf.mxu0
    %v509 = vadd.f32 0.0, %v508
    %510 = vmatmul.f32.gmra.mxu0 %v157
    %v511 = vpop.f32.mrf.mxu0
    %v512 = vadd.f32 0.0, %v511
    %513 = vmatmul.f32.gmra.mxu0 %v160
    %v514 = vpop.f32.mrf.mxu0
    %v515 = vadd.f32 0.0, %v514
    %516 = vmatmul.f32.gmra.mxu0 %v163
    %v517 = vpop.f32.mrf.mxu0
    %v518 = vadd.f32 0.0, %v517
    %519 = vdwg.mxu0
    %v520 = vadd.f32 %v487, %v509
    %v521 = vadd.f32 %v488, %v512
    %v522 = vadd.f32 %v489, %v515
    %v523 = vadd.f32 %v490, %v518
    %v524 = vxor.u32 %v520, 2147483648
    %v525 = vmul.f32 %v524, 1.442695
    %v526 = vpow.pop %v525
    %v527 = vadd.f32 %v526, 1.0
    %v528 = vrcp.pop %v527
    %v529 = vmul.f32 %v527, %v528
    %v530 = vsub.f32 1.0, %v529
    %v531 = vmul.f32 %v528, %v530
    %v532 = vadd.f32 %v528, %v531
    %vm533 = vweird.f32 %v527
    %vm534 = vweird.f32 %v528
    %vm535 = vmor %vm533, %vm534
    %v536 = vsel %vm535, %v528, %v532
    %v537 = vand.u32 2147483647, %v527
    %vm538 = vcmp.eq.f32.partialorder %v537, 8.507059e+37
    %v539 = vand.u32 %v527, 2147483648
    %v540 = vor.u32 1.1754944e-38, %v539
    %v541 = vsel %vm538, %v540, %v536
    %v542 = vmul.f32 1.0, %v541
    %v543 = vxor.u32 %v521, 2147483648
    %v544 = vmul.f32 %v543, 1.442695
    %v545 = vpow.pop %v544
    %v546 = vadd.f32 %v545, 1.0
    %v547 = vrcp.pop %v546
    %v548 = vmul.f32 %v546, %v547
    %v549 = vsub.f32 1.0, %v548
    %v550 = vmul.f32 %v547, %v549
    %v551 = vadd.f32 %v547, %v550
    %vm552 = vweird.f32 %v546
    %vm553 = vweird.f32 %v547
    %vm554 = vmor %vm552, %vm553
    %v555 = vsel %vm554, %v547, %v551
    %v556 = vand.u32 2147483647, %v546
    %vm557 = vcmp.eq.f32.partialorder %v556, 8.507059e+37
    %v558 = vand.u32 %v546, 2147483648
    %v559 = vor.u32 1.1754944e-38, %v558
    %v560 = vsel %vm557, %v559, %v555
    %v561 = vmul.f32 1.0, %v560
    %v562 = vtanh.pop %v522
    %v563 = vxor.u32 %v523, 2147483648
    %v564 = vmul.f32 %v563, 1.442695
    %v565 = vpow.pop %v564
    %v566 = vadd.f32 %v565, 1.0
    %v567 = vrcp.pop %v566
    %v568 = vmul.f32 %v566, %v567
    %v569 = vsub.f32 1.0, %v568
    %v570 = vmul.f32 %v567, %v569
    %v571 = vadd.f32 %v567, %v570
    %vm572 = vweird.f32 %v566
    %vm573 = vweird.f32 %v567
    %vm574 = vmor %vm572, %vm573
    %v575 = vsel %vm574, %v567, %v571
    %v576 = vand.u32 2147483647, %v566
    %vm577 = vcmp.eq.f32.partialorder %v576, 8.507059e+37
    %v578 = vand.u32 %v566, 2147483648
    %v579 = vor.u32 1.1754944e-38, %v578
    %v580 = vsel %vm577, %v579, %v575
    %v581 = vmul.f32 1.0, %v580
    %v582 = vmul.f32 %v561, %v258
    %v583 = vmul.f32 %v542, %v562
    %v584 = vadd.f32 %v582, %v583
    %v585 = vtanh.pop %v584
    %v586 = vmul.f32 %v581, %v585
    %587 = vmatpush.msra.mxu0 0.0
    %588 = vmatpush.msra.mxu0 0.0
    %589 = vmatpush.msra.mxu0 0.0
    %590 = vmatpush.msra.mxu0 0.0
    %591 = vmatpush.msra.mxu0 0.0
    %592 = vmatpush.msra.mxu0 0.0
    %593 = vmatpush.msra.mxu0 0.0
    %594 = vmatpush.msra.mxu0 0.0
    %595 = vmatpush.msra.mxu0 0.0
    %596 = vmatpush.msra.mxu0 0.0
    %597 = vmatpush.msra.mxu0 0.0
    %598 = vmatpush.msra.mxu0 0.0
    %599 = vmatpush.msra.mxu0 0.0
    %600 = vmatpush.msra.mxu0 0.0
    %601 = vmatpush.msra.mxu0 %v369
    %602 = vmatpush.msra.mxu0 %v586
    %603 = vmatmul.f32.gmra.mxu0 %v263
    %v604 = vpop.f32.mrf.mxu0
    %v605 = vadd.f32 0.0, %v604
    %606 = vmatmul.f32.gmra.mxu0 %v266
    %v607 = vpop.f32.mrf.mxu0
    %v608 = vadd.f32 0.0, %v607
    %609 = vmatmul.f32.gmra.mxu0 %v269
    %v610 = vpop.f32.mrf.mxu0
    %v611 = vadd.f32 0.0, %v610
    %612 = vmatmul.f32.gmra.mxu0 %v272
    %v613 = vpop.f32.mrf.mxu0
    %v614 = vadd.f32 0.0, %v613
    %615 = vdwg.mxu0
    %v616 = vadd.f32 %v74, %v605
    %v617 = vadd.f32 %v79, %v608
    %v618 = vadd.f32 %v84, %v611
    %v619 = vadd.f32 %v89, %v614
    %v620 = vxor.u32 %v616, 2147483648
    %v621 = vmul.f32 %v620, 1.442695
    %v622 = vpow.pop %v621
    %v623 = vadd.f32 %v622, 1.0
    %v624 = vrcp.pop %v623
    %v625 = vmul.f32 %v623, %v624
    %v626 = vsub.f32 1.0, %v625
    %v627 = vmul.f32 %v624, %v626
    %v628 = vadd.f32 %v624, %v627
    %vm629 = vweird.f32 %v623
    %vm630 = vweird.f32 %v624
    %vm631 = vmor %vm629, %vm630
    %v632 = vsel %vm631, %v624, %v628
    %v633 = vand.u32 2147483647, %v623
    %vm634 = vcmp.eq.f32.partialorder %v633, 8.507059e+37
    %v635 = vand.u32 %v623, 2147483648
    %v636 = vor.u32 1.1754944e-38, %v635
    %v637 = vsel %vm634, %v636, %v632
    %v638 = vmul.f32 1.0, %v637
    %v639 = vxor.u32 %v617, 2147483648
    %v640 = vmul.f32 %v639, 1.442695
    %v641 = vpow.pop %v640
    %v642 = vadd.f32 %v641, 1.0
    %v643 = vrcp.pop %v642
    %v644 = vmul.f32 %v642, %v643
    %v645 = vsub.f32 1.0, %v644
    %v646 = vmul.f32 %v643, %v645
    %v647 = vadd.f32 %v643, %v646
    %vm648 = vweird.f32 %v642
    %vm649 = vweird.f32 %v643
    %vm650 = vmor %vm648, %vm649
    %v651 = vsel %vm650, %v643, %v647
    %v652 = vand.u32 2147483647, %v642
    %vm653 = vcmp.eq.f32.partialorder %v652, 8.507059e+37
    %v654 = vand.u32 %v642, 2147483648
    %v655 = vor.u32 1.1754944e-38, %v654
    %v656 = vsel %vm653, %v655, %v651
    %v657 = vmul.f32 1.0, %v656
    %v658 = vtanh.pop %v618
    %v659 = vxor.u32 %v619, 2147483648
    %v660 = vmul.f32 %v659, 1.442695
    %v661 = vpow.pop %v660
    %v662 = vadd.f32 %v661, 1.0
    %v663 = vrcp.pop %v662
    %v664 = vmul.f32 %v662, %v663
    %v665 = vsub.f32 1.0, %v664
    %v666 = vmul.f32 %v663, %v665
    %v667 = vadd.f32 %v663, %v666
    %vm668 = vweird.f32 %v662
    %vm669 = vweird.f32 %v663
    %vm670 = vmor %vm668, %vm669
    %v671 = vsel %vm670, %v663, %v667
    %v672 = vand.u32 2147483647, %v662
    %vm673 = vcmp.eq.f32.partialorder %v672, 8.507059e+37
    %v674 = vand.u32 %v662, 2147483648
    %v675 = vor.u32 1.1754944e-38, %v674
    %v676 = vsel %vm673, %v675, %v671
    %v677 = vmul.f32 1.0, %v676
    %v678 = vmul.f32 %v657, %v367
    %v679 = vmul.f32 %v638, %v658
    %v680 = vadd.f32 %v678, %v679
    %v681 = vtanh.pop %v680
    %v682 = vmul.f32 %v677, %v681
    %683 = vmatpush.msra.mxu0 0.0
    %684 = vmatpush.msra.mxu0 0.0
    %685 = vmatpush.msra.mxu0 0.0
    %686 = vmatpush.msra.mxu0 0.0
    %687 = vmatpush.msra.mxu0 0.0
    %688 = vmatpush.msra.mxu0 0.0
    %689 = vmatpush.msra.mxu0 0.0
    %690 = vmatpush.msra.mxu0 0.0
    %691 = vmatpush.msra.mxu0 0.0
    %692 = vmatpush.msra.mxu0 0.0
    %693 = vmatpush.msra.mxu0 0.0
    %694 = vmatpush.msra.mxu0 0.0
    %695 = vmatpush.msra.mxu0 0.0
    %696 = vmatpush.msra.mxu0 0.0
    %697 = vmatpush.msra.mxu0 %v477
    %698 = vmatpush.msra.mxu0 %v682
    %699 = vmatmul.f32.gmra.mxu0 %v371
    %v700 = vpop.f32.mrf.mxu0
    %v701 = vadd.f32 0.0, %v700
    %702 = vmatmul.f32.gmra.mxu0 %v374
    %v703 = vpop.f32.mrf.mxu0
    %v704 = vadd.f32 0.0, %v703
    %705 = vmatmul.f32.gmra.mxu0 %v377
    %v706 = vpop.f32.mrf.mxu0
    %v707 = vadd.f32 0.0, %v706
    %708 = vmatmul.f32.gmra.mxu0 %v380
    %v709 = vpop.f32.mrf.mxu0
    %v710 = vadd.f32 0.0, %v709
    %711 = vdwg.mxu0
    %v712 = vadd.f32 %v99, %v701
    %v713 = vadd.f32 %v104, %v704
    %v714 = vadd.f32 %v109, %v707
    %v715 = vadd.f32 %v114, %v710
    %v716 = vxor.u32 %v712, 2147483648
    %v717 = vmul.f32 %v716, 1.442695
    %v718 = vpow.pop %v717
    %v719 = vadd.f32 %v718, 1.0
    %v720 = vrcp.pop %v719
    %v721 = vmul.f32 %v719, %v720
    %v722 = vsub.f32 1.0, %v721
    %v723 = vmul.f32 %v720, %v722
    %v724 = vadd.f32 %v720, %v723
    %vm725 = vweird.f32 %v719
    %vm726 = vweird.f32 %v720
    %vm727 = vmor %vm725, %vm726
    %v728 = vsel %vm727, %v720, %v724
    %v729 = vand.u32 2147483647, %v719
    %vm730 = vcmp.eq.f32.partialorder %v729, 8.507059e+37
    %v731 = vand.u32 %v719, 2147483648
    %v732 = vor.u32 1.1754944e-38, %v731
    %v733 = vsel %vm730, %v732, %v728
    %v734 = vmul.f32 1.0, %v733
    %v735 = vxor.u32 %v713, 2147483648
    %v736 = vmul.f32 %v735, 1.442695
    %v737 = vpow.pop %v736
    %v738 = vadd.f32 %v737, 1.0
    %v739 = vrcp.pop %v738
    %v740 = vmul.f32 %v738, %v739
    %v741 = vsub.f32 1.0, %v740
    %v742 = vmul.f32 %v739, %v741
    %v743 = vadd.f32 %v739, %v742
    %vm744 = vweird.f32 %v738
    %vm745 = vweird.f32 %v739
    %vm746 = vmor %vm744, %vm745
    %v747 = vsel %vm746, %v739, %v743
    %v748 = vand.u32 2147483647, %v738
    %vm749 = vcmp.eq.f32.partialorder %v748, 8.507059e+37
    %v750 = vand.u32 %v738, 2147483648
    %v751 = vor.u32 1.1754944e-38, %v750
    %v752 = vsel %vm749, %v751, %v747
    %v753 = vmul.f32 1.0, %v752
    %v754 = vtanh.pop %v714
    %v755 = vxor.u32 %v715, 2147483648
    %v756 = vmul.f32 %v755, 1.442695
    %v757 = vpow.pop %v756
    %v758 = vadd.f32 %v757, 1.0
    %v759 = vrcp.pop %v758
    %v760 = vmul.f32 %v758, %v759
    %v761 = vsub.f32 1.0, %v760
    %v762 = vmul.f32 %v759, %v761
    %v763 = vadd.f32 %v759, %v762
    %vm764 = vweird.f32 %v758
    %vm765 = vweird.f32 %v759
    %vm766 = vmor %vm764, %vm765
    %v767 = vsel %vm766, %v759, %v763
    %v768 = vand.u32 2147483647, %v758
    %vm769 = vcmp.eq.f32.partialorder %v768, 8.507059e+37
    %v770 = vand.u32 %v758, 2147483648
    %v771 = vor.u32 1.1754944e-38, %v770
    %v772 = vsel %vm769, %v771, %v767
    %v773 = vmul.f32 1.0, %v772
    %v774 = vmul.f32 %v753, %v475
    %v775 = vmul.f32 %v734, %v754
    %v776 = vadd.f32 %v774, %v775
    %v777 = vtanh.pop %v776
    %v778 = vmul.f32 %v773, %v777
    %s779 = scalar_lea.vmem %s0, 2
    %v780 = vld [vmem:[%s779] sm:$0x1]
    %v782 = vperm.slane %v780, 0
    %v784 = vmul.f32 %v123, %v782
    %v785 = vmul.f32 %v128, %v782
    %v786 = vmul.f32 %v133, %v782
    %v787 = vmul.f32 %v138, %v782
    %v788 = vadd.f32 %v784, %v49
    %v789 = vadd.f32 %v785, %v54
    %v790 = vadd.f32 %v786, %v59
    %v791 = vadd.f32 %v787, %v64
    %792 = vmatpush.msra.mxu0 0.0
    %793 = vmatpush.msra.mxu0 0.0
    %794 = vmatpush.msra.mxu0 0.0
    %795 = vmatpush.msra.mxu0 0.0
    %796 = vmatpush.msra.mxu0 0.0
    %797 = vmatpush.msra.mxu0 0.0
    %798 = vmatpush.msra.mxu0 0.0
    %799 = vmatpush.msra.mxu0 0.0
    %800 = vmatpush.msra.mxu0 0.0
    %801 = vmatpush.msra.mxu0 0.0
    %802 = vmatpush.msra.mxu0 0.0
    %803 = vmatpush.msra.mxu0 0.0
    %804 = vmatpush.msra.mxu0 0.0
    %805 = vmatpush.msra.mxu0 0.0
    %806 = vmatpush.msra.mxu0 0.0
    %807 = vmatpush.msra.mxu0 %v586
    %808 = vmatmul.f32.gmra.mxu0 %v154
    %v809 = vpop.f32.mrf.mxu0
    %v810 = vadd.f32 0.0, %v809
    %811 = vmatmul.f32.gmra.mxu0 %v157
    %v812 = vpop.f32.mrf.mxu0
    %v813 = vadd.f32 0.0, %v812
    %814 = vmatmul.f32.gmra.mxu0 %v160
    %v815 = vpop.f32.mrf.mxu0
    %v816 = vadd.f32 0.0, %v815
    %817 = vmatmul.f32.gmra.mxu0 %v163
    %v818 = vpop.f32.mrf.mxu0
    %v819 = vadd.f32 0.0, %v818
    %820 = vdwg.mxu0
    %v821 = vadd.f32 %v788, %v810
    %v822 = vadd.f32 %v789, %v813
    %v823 = vadd.f32 %v790, %v816
    %v824 = vadd.f32 %v791, %v819
    %v825 = vxor.u32 %v821, 2147483648
    %v826 = vmul.f32 %v825, 1.442695
    %v827 = vpow.pop %v826
    %v828 = vadd.f32 %v827, 1.0
    %v829 = vrcp.pop %v828
    %v830 = vmul.f32 %v828, %v829
    %v831 = vsub.f32 1.0, %v830
    %v832 = vmul.f32 %v829, %v831
    %v833 = vadd.f32 %v829, %v832
    %vm834 = vweird.f32 %v828
    %vm835 = vweird.f32 %v829
    %vm836 = vmor %vm834, %vm835
    %v837 = vsel %vm836, %v829, %v833
    %v838 = vand.u32 2147483647, %v828
    %vm839 = vcmp.eq.f32.partialorder %v838, 8.507059e+37
    %v840 = vand.u32 %v828, 2147483648
    %v841 = vor.u32 1.1754944e-38, %v840
    %v842 = vsel %vm839, %v841, %v837
    %v843 = vmul.f32 1.0, %v842
    %v844 = vxor.u32 %v822, 2147483648
    %v845 = vmul.f32 %v844, 1.442695
    %v846 = vpow.pop %v845
    %v847 = vadd.f32 %v846, 1.0
    %v848 = vrcp.pop %v847
    %v849 = vmul.f32 %v847, %v848
    %v850 = vsub.f32 1.0, %v849
    %v851 = vmul.f32 %v848, %v850
    %v852 = vadd.f32 %v848, %v851
    %vm853 = vweird.f32 %v847
    %vm854 = vweird.f32 %v848
    %vm855 = vmor %vm853, %vm854
    %v856 = vsel %vm855, %v848, %v852
    %v857 = vand.u32 2147483647, %v847
    %vm858 = vcmp.eq.f32.partialorder %v857, 8.507059e+37
    %v859 = vand.u32 %v847, 2147483648
    %v860 = vor.u32 1.1754944e-38, %v859
    %v861 = vsel %vm858, %v860, %v856
    %v862 = vmul.f32 1.0, %v861
    %v863 = vtanh.pop %v823
    %v864 = vxor.u32 %v824, 2147483648
    %v865 = vmul.f32 %v864, 1.442695
    %v866 = vpow.pop %v865
    %v867 = vadd.f32 %v866, 1.0
    %v868 = vrcp.pop %v867
    %v869 = vmul.f32 %v867, %v868
    %v870 = vsub.f32 1.0, %v869
    %v871 = vmul.f32 %v868, %v870
    %v872 = vadd.f32 %v868, %v871
    %vm873 = vweird.f32 %v867
    %vm874 = vweird.f32 %v868
    %vm875 = vmor %vm873, %vm874
    %v876 = vsel %vm875, %v868, %v872
    %v877 = vand.u32 2147483647, %v867
    %vm878 = vcmp.eq.f32.partialorder %v877, 8.507059e+37
    %v879 = vand.u32 %v867, 2147483648
    %v880 = vor.u32 1.1754944e-38, %v879
    %v881 = vsel %vm878, %v880, %v876
    %v882 = vmul.f32 1.0, %v881
    %v883 = vmul.f32 %v862, %v584
    %v884 = vmul.f32 %v843, %v863
    %v885 = vadd.f32 %v883, %v884
    %v886 = vtanh.pop %v885
    %v887 = vmul.f32 %v882, %v886
    %888 = vmatpush.msra.mxu0 0.0
    %889 = vmatpush.msra.mxu0 0.0
    %890 = vmatpush.msra.mxu0 0.0
    %891 = vmatpush.msra.mxu0 0.0
    %892 = vmatpush.msra.mxu0 0.0
    %893 = vmatpush.msra.mxu0 0.0
    %894 = vmatpush.msra.mxu0 0.0
    %895 = vmatpush.msra.mxu0 0.0
    %896 = vmatpush.msra.mxu0 0.0
    %897 = vmatpush.msra.mxu0 0.0
    %898 = vmatpush.msra.mxu0 0.0
    %899 = vmatpush.msra.mxu0 0.0
    %900 = vmatpush.msra.mxu0 0.0
    %901 = vmatpush.msra.mxu0 0.0
    %902 = vmatpush.msra.mxu0 %v682
    %903 = vmatpush.msra.mxu0 %v887
    %904 = vmatmul.f32.gmra.mxu0 %v263
    %v905 = vpop.f32.mrf.mxu0
    %v906 = vadd.f32 0.0, %v905
    %907 = vmatmul.f32.gmra.mxu0 %v266
    %v908 = vpop.f32.mrf.mxu0
    %v909 = vadd.f32 0.0, %v908
    %910 = vmatmul.f32.gmra.mxu0 %v269
    %v911 = vpop.f32.mrf.mxu0
    %v912 = vadd.f32 0.0, %v911
    %913 = vmatmul.f32.gmra.mxu0 %v272
    %v914 = vpop.f32.mrf.mxu0
    %v915 = vadd.f32 0.0, %v914
    %916 = vdwg.mxu0
    %v917 = vadd.f32 %v74, %v906
    %v918 = vadd.f32 %v79, %v909
    %v919 = vadd.f32 %v84, %v912
    %v920 = vadd.f32 %v89, %v915
    %v921 = vxor.u32 %v917, 2147483648
    %v922 = vmul.f32 %v921, 1.442695
    %v923 = vpow.pop %v922
    %v924 = vadd.f32 %v923, 1.0
    %v925 = vrcp.pop %v924
    %v926 = vmul.f32 %v924, %v925
    %v927 = vsub.f32 1.0, %v926
    %v928 = vmul.f32 %v925, %v927
    %v929 = vadd.f32 %v925, %v928
    %vm930 = vweird.f32 %v924
    %vm931 = vweird.f32 %v925
    %vm932 = vmor %vm930, %vm931
    %v933 = vsel %vm932, %v925, %v929
    %v934 = vand.u32 2147483647, %v924
    %vm935 = vcmp.eq.f32.partialorder %v934, 8.507059e+37
    %v936 = vand.u32 %v924, 2147483648
    %v937 = vor.u32 1.1754944e-38, %v936
    %v938 = vsel %vm935, %v937, %v933
    %v939 = vmul.f32 1.0, %v938
    %v940 = vxor.u32 %v918, 2147483648
    %v941 = vmul.f32 %v940, 1.442695
    %v942 = vpow.pop %v941
    %v943 = vadd.f32 %v942, 1.0
    %v944 = vrcp.pop %v943
    %v945 = vmul.f32 %v943, %v944
    %v946 = vsub.f32 1.0, %v945
    %v947 = vmul.f32 %v944, %v946
    %v948 = vadd.f32 %v944, %v947
    %vm949 = vweird.f32 %v943
    %vm950 = vweird.f32 %v944
    %vm951 = vmor %vm949, %vm950
    %v952 = vsel %vm951, %v944, %v948
    %v953 = vand.u32 2147483647, %v943
    %vm954 = vcmp.eq.f32.partialorder %v953, 8.507059e+37
    %v955 = vand.u32 %v943, 2147483648
    %v956 = vor.u32 1.1754944e-38, %v955
    %v957 = vsel %vm954, %v956, %v952
    %v958 = vmul.f32 1.0, %v957
    %v959 = vtanh.pop %v919
    %v960 = vxor.u32 %v920, 2147483648
    %v961 = vmul.f32 %v960, 1.442695
    %v962 = vpow.pop %v961
    %v963 = vadd.f32 %v962, 1.0
    %v964 = vrcp.pop %v963
    %v965 = vmul.f32 %v963, %v964
    %v966 = vsub.f32 1.0, %v965
    %v967 = vmul.f32 %v964, %v966
    %v968 = vadd.f32 %v964, %v967
    %vm969 = vweird.f32 %v963
    %vm970 = vweird.f32 %v964
    %vm971 = vmor %vm969, %vm970
    %v972 = vsel %vm971, %v964, %v968
    %v973 = vand.u32 2147483647, %v963
    %vm974 = vcmp.eq.f32.partialorder %v973, 8.507059e+37
    %v975 = vand.u32 %v963, 2147483648
    %v976 = vor.u32 1.1754944e-38, %v975
    %v977 = vsel %vm974, %v976, %v972
    %v978 = vmul.f32 1.0, %v977
    %v979 = vmul.f32 %v958, %v680
    %v980 = vmul.f32 %v939, %v959
    %v981 = vadd.f32 %v979, %v980
    %v982 = vtanh.pop %v981
    %v983 = vmul.f32 %v978, %v982
    %984 = vmatpush.msra.mxu0 0.0
    %985 = vmatpush.msra.mxu0 0.0
    %986 = vmatpush.msra.mxu0 0.0
    %987 = vmatpush.msra.mxu0 0.0
    %988 = vmatpush.msra.mxu0 0.0
    %989 = vmatpush.msra.mxu0 0.0
    %990 = vmatpush.msra.mxu0 0.0
    %991 = vmatpush.msra.mxu0 0.0
    %992 = vmatpush.msra.mxu0 0.0
    %993 = vmatpush.msra.mxu0 0.0
    %994 = vmatpush.msra.mxu0 0.0
    %995 = vmatpush.msra.mxu0 0.0
    %996 = vmatpush.msra.mxu0 0.0
    %997 = vmatpush.msra.mxu0 0.0
    %998 = vmatpush.msra.mxu0 %v778
    %999 = vmatpush.msra.mxu0 %v983
    %1000 = vmatmul.f32.gmra.mxu0 %v371
    %v1001 = vpop.f32.mrf.mxu0
    %v1002 = vadd.f32 0.0, %v1001
    %1003 = vmatmul.f32.gmra.mxu0 %v374
    %v1004 = vpop.f32.mrf.mxu0
    %v1005 = vadd.f32 0.0, %v1004
    %1006 = vmatmul.f32.gmra.mxu0 %v377
    %v1007 = vpop.f32.mrf.mxu0
    %v1008 = vadd.f32 0.0, %v1007
    %1009 = vmatmul.f32.gmra.mxu0 %v380
    %v1010 = vpop.f32.mrf.mxu0
    %v1011 = vadd.f32 0.0, %v1010
    %1012 = vdwg.mxu0
    %v1013 = vadd.f32 %v99, %v1002
    %v1014 = vadd.f32 %v104, %v1005
    %v1015 = vadd.f32 %v109, %v1008
    %v1016 = vadd.f32 %v114, %v1011
    %v1017 = vxor.u32 %v1013, 2147483648
    %v1018 = vmul.f32 %v1017, 1.442695
    %v1019 = vpow.pop %v1018
    %v1020 = vadd.f32 %v1019, 1.0
    %v1021 = vrcp.pop %v1020
    %v1022 = vmul.f32 %v1020, %v1021
    %v1023 = vsub.f32 1.0, %v1022
    %v1024 = vmul.f32 %v1021, %v1023
    %v1025 = vadd.f32 %v1021, %v1024
    %vm1026 = vweird.f32 %v1020
    %vm1027 = vweird.f32 %v1021
    %vm1028 = vmor %vm1026, %vm1027
    %v1029 = vsel %vm1028, %v1021, %v1025
    %v1030 = vand.u32 2147483647, %v1020
    %vm1031 = vcmp.eq.f32.partialorder %v1030, 8.507059e+37
    %v1032 = vand.u32 %v1020, 2147483648
    %v1033 = vor.u32 1.1754944e-38, %v1032
    %v1034 = vsel %vm1031, %v1033, %v1029
    %v1035 = vmul.f32 1.0, %v1034
    %v1036 = vxor.u32 %v1014, 2147483648
    %v1037 = vmul.f32 %v1036, 1.442695
    %v1038 = vpow.pop %v1037
    %v1039 = vadd.f32 %v1038, 1.0
    %v1040 = vrcp.pop %v1039
    %v1041 = vmul.f32 %v1039, %v1040
    %v1042 = vsub.f32 1.0, %v1041
    %v1043 = vmul.f32 %v1040, %v1042
    %v1044 = vadd.f32 %v1040, %v1043
    %vm1045 = vweird.f32 %v1039
    %vm1046 = vweird.f32 %v1040
    %vm1047 = vmor %vm1045, %vm1046
    %v1048 = vsel %vm1047, %v1040, %v1044
    %v1049 = vand.u32 2147483647, %v1039
    %vm1050 = vcmp.eq.f32.partialorder %v1049, 8.507059e+37
    %v1051 = vand.u32 %v1039, 2147483648
    %v1052 = vor.u32 1.1754944e-38, %v1051
    %v1053 = vsel %vm1050, %v1052, %v1048
    %v1054 = vmul.f32 1.0, %v1053
    %v1055 = vtanh.pop %v1015
    %v1056 = vxor.u32 %v1016, 2147483648
    %v1057 = vmul.f32 %v1056, 1.442695
    %v1058 = vpow.pop %v1057
    %v1059 = vadd.f32 %v1058, 1.0
    %v1060 = vrcp.pop %v1059
    %v1061 = vmul.f32 %v1059, %v1060
    %v1062 = vsub.f32 1.0, %v1061
    %v1063 = vmul.f32 %v1060, %v1062
    %v1064 = vadd.f32 %v1060, %v1063
    %vm1065 = vweird.f32 %v1059
    %vm1066 = vweird.f32 %v1060
    %vm1067 = vmor %vm1065, %vm1066
    %v1068 = vsel %vm1067, %v1060, %v1064
    %v1069 = vand.u32 2147483647, %v1059
    %vm1070 = vcmp.eq.f32.partialorder %v1069, 8.507059e+37
    %v1071 = vand.u32 %v1059, 2147483648
    %v1072 = vor.u32 1.1754944e-38, %v1071
    %v1073 = vsel %vm1070, %v1072, %v1068
    %v1074 = vmul.f32 1.0, %v1073
    %v1075 = vmul.f32 %v1054, %v776
    %v1076 = vmul.f32 %v1035, %v1055
    %v1077 = vadd.f32 %v1075, %v1076
    %v1078 = vtanh.pop %v1077
    %v1079 = vmul.f32 %v1074, %v1078
    %s1080 = scalar_lea.vmem %s0, 3
    %v1081 = vld [vmem:[%s1080] sm:$0x1]
    %v1083 = vperm.slane %v1081, 0
    %v1085 = vmul.f32 %v123, %v1083
    %v1086 = vmul.f32 %v128, %v1083
    %v1087 = vmul.f32 %v133, %v1083
    %v1088 = vmul.f32 %v138, %v1083
    %v1089 = vadd.f32 %v1085, %v49
    %v1090 = vadd.f32 %v1086, %v54
    %v1091 = vadd.f32 %v1087, %v59
    %v1092 = vadd.f32 %v1088, %v64
    %1093 = vmatpush.msra.mxu0 0.0
    %1094 = vmatpush.msra.mxu0 0.0
    %1095 = vmatpush.msra.mxu0 0.0
    %1096 = vmatpush.msra.mxu0 0.0
    %1097 = vmatpush.msra.mxu0 0.0
    %1098 = vmatpush.msra.mxu0 0.0
    %1099 = vmatpush.msra.mxu0 0.0
    %1100 = vmatpush.msra.mxu0 0.0
    %1101 = vmatpush.msra.mxu0 0.0
    %1102 = vmatpush.msra.mxu0 0.0
    %1103 = vmatpush.msra.mxu0 0.0
    %1104 = vmatpush.msra.mxu0 0.0
    %1105 = vmatpush.msra.mxu0 0.0
    %1106 = vmatpush.msra.mxu0 0.0
    %1107 = vmatpush.msra.mxu0 0.0
    %1108 = vmatpush.msra.mxu0 %v887
    %1109 = vmatmul.f32.gmra.mxu0 %v154
    %v1110 = vpop.f32.mrf.mxu0
    %v1111 = vadd.f32 0.0, %v1110
    %1112 = vmatmul.f32.gmra.mxu0 %v157
    %v1113 = vpop.f32.mrf.mxu0
    %v1114 = vadd.f32 0.0, %v1113
    %1115 = vmatmul.f32.gmra.mxu0 %v160
    %v1116 = vpop.f32.mrf.mxu0
    %v1117 = vadd.f32 0.0, %v1116
    %1118 = vmatmul.f32.gmra.mxu0 %v163
    %v1119 = vpop.f32.mrf.mxu0
    %v1120 = vadd.f32 0.0, %v1119
    %1121 = vdwg.mxu0
    %v1122 = vadd.f32 %v1089, %v1111
    %v1123 = vadd.f32 %v1090, %v1114
    %v1124 = vadd.f32 %v1091, %v1117
    %v1125 = vadd.f32 %v1092, %v1120
    %v1126 = vxor.u32 %v1122, 2147483648
    %v1127 = vmul.f32 %v1126, 1.442695
    %v1128 = vpow.pop %v1127
    %v1129 = vadd.f32 %v1128, 1.0
    %v1130 = vrcp.pop %v1129
    %v1131 = vmul.f32 %v1129, %v1130
    %v1132 = vsub.f32 1.0, %v1131
    %v1133 = vmul.f32 %v1130, %v1132
    %v1134 = vadd.f32 %v1130, %v1133
    %vm1135 = vweird.f32 %v1129
    %vm1136 = vweird.f32 %v1130
    %vm1137 = vmor %vm1135, %vm1136
    %v1138 = vsel %vm1137, %v1130, %v1134
    %v1139 = vand.u32 2147483647, %v1129
    %vm1140 = vcmp.eq.f32.partialorder %v1139, 8.507059e+37
    %v1141 = vand.u32 %v1129, 2147483648
    %v1142 = vor.u32 1.1754944e-38, %v1141
    %v1143 = vsel %vm1140, %v1142, %v1138
    %v1144 = vmul.f32 1.0, %v1143
    %v1145 = vxor.u32 %v1123, 2147483648
    %v1146 = vmul.f32 %v1145, 1.442695
    %v1147 = vpow.pop %v1146
    %v1148 = vadd.f32 %v1147, 1.0
    %v1149 = vrcp.pop %v1148
    %v1150 = vmul.f32 %v1148, %v1149
    %v1151 = vsub.f32 1.0, %v1150
    %v1152 = vmul.f32 %v1149, %v1151
    %v1153 = vadd.f32 %v1149, %v1152
    %vm1154 = vweird.f32 %v1148
    %vm1155 = vweird.f32 %v1149
    %vm1156 = vmor %vm1154, %vm1155
    %v1157 = vsel %vm1156, %v1149, %v1153
    %v1158 = vand.u32 2147483647, %v1148
    %vm1159 = vcmp.eq.f32.partialorder %v1158, 8.507059e+37
    %v1160 = vand.u32 %v1148, 2147483648
    %v1161 = vor.u32 1.1754944e-38, %v1160
    %v1162 = vsel %vm1159, %v1161, %v1157
    %v1163 = vmul.f32 1.0, %v1162
    %v1164 = vtanh.pop %v1124
    %v1165 = vxor.u32 %v1125, 2147483648
    %v1166 = vmul.f32 %v1165, 1.442695
    %v1167 = vpow.pop %v1166
    %v1168 = vadd.f32 %v1167, 1.0
    %v1169 = vrcp.pop %v1168
    %v1170 = vmul.f32 %v1168, %v1169
    %v1171 = vsub.f32 1.0, %v1170
    %v1172 = vmul.f32 %v1169, %v1171
    %v1173 = vadd.f32 %v1169, %v1172
    %vm1174 = vweird.f32 %v1168
    %vm1175 = vweird.f32 %v1169
    %vm1176 = vmor %vm1174, %vm1175
    %v1177 = vsel %vm1176, %v1169, %v1173
    %v1178 = vand.u32 2147483647, %v1168
    %vm1179 = vcmp.eq.f32.partialorder %v1178, 8.507059e+37
    %v1180 = vand.u32 %v1168, 2147483648
    %v1181 = vor.u32 1.1754944e-38, %v1180
    %v1182 = vsel %vm1179, %v1181, %v1177
    %v1183 = vmul.f32 1.0, %v1182
    %v1184 = vmul.f32 %v1163, %v885
    %v1185 = vmul.f32 %v1144, %v1164
    %v1186 = vadd.f32 %v1184, %v1185
    %v1187 = vtanh.pop %v1186
    %v1188 = vmul.f32 %v1183, %v1187
    %1189 = vmatpush.msra.mxu0 0.0
    %1190 = vmatpush.msra.mxu0 0.0
    %1191 = vmatpush.msra.mxu0 0.0
    %1192 = vmatpush.msra.mxu0 0.0
    %1193 = vmatpush.msra.mxu0 0.0
    %1194 = vmatpush.msra.mxu0 0.0
    %1195 = vmatpush.msra.mxu0 0.0
    %1196 = vmatpush.msra.mxu0 0.0
    %1197 = vmatpush.msra.mxu0 0.0
    %1198 = vmatpush.msra.mxu0 0.0
    %1199 = vmatpush.msra.mxu0 0.0
    %1200 = vmatpush.msra.mxu0 0.0
    %1201 = vmatpush.msra.mxu0 0.0
    %1202 = vmatpush.msra.mxu0 0.0
    %1203 = vmatpush.msra.mxu0 %v983
    %1204 = vmatpush.msra.mxu0 %v1188
    %1205 = vmatmul.f32.gmra.mxu0 %v263
    %v1206 = vpop.f32.mrf.mxu0
    %v1207 = vadd.f32 0.0, %v1206
    %1208 = vmatmul.f32.gmra.mxu0 %v266
    %v1209 = vpop.f32.mrf.mxu0
    %v1210 = vadd.f32 0.0, %v1209
    %1211 = vmatmul.f32.gmra.mxu0 %v269
    %v1212 = vpop.f32.mrf.mxu0
    %v1213 = vadd.f32 0.0, %v1212
    %1214 = vmatmul.f32.gmra.mxu0 %v272
    %v1215 = vpop.f32.mrf.mxu0
    %v1216 = vadd.f32 0.0, %v1215
    %1217 = vdwg.mxu0
    %v1218 = vadd.f32 %v74, %v1207
    %v1219 = vadd.f32 %v79, %v1210
    %v1220 = vadd.f32 %v84, %v1213
    %v1221 = vadd.f32 %v89, %v1216
    %v1222 = vxor.u32 %v1218, 2147483648
    %v1223 = vmul.f32 %v1222, 1.442695
    %v1224 = vpow.pop %v1223
    %v1225 = vadd.f32 %v1224, 1.0
    %v1226 = vrcp.pop %v1225
    %v1227 = vmul.f32 %v1225, %v1226
    %v1228 = vsub.f32 1.0, %v1227
    %v1229 = vmul.f32 %v1226, %v1228
    %v1230 = vadd.f32 %v1226, %v1229
    %vm1231 = vweird.f32 %v1225
    %vm1232 = vweird.f32 %v1226
    %vm1233 = vmor %vm1231, %vm1232
    %v1234 = vsel %vm1233, %v1226, %v1230
    %v1235 = vand.u32 2147483647, %v1225
    %vm1236 = vcmp.eq.f32.partialorder %v1235, 8.507059e+37
    %v1237 = vand.u32 %v1225, 2147483648
    %v1238 = vor.u32 1.1754944e-38, %v1237
    %v1239 = vsel %vm1236, %v1238, %v1234
    %v1240 = vmul.f32 1.0, %v1239
    %v1241 = vxor.u32 %v1219, 2147483648
    %v1242 = vmul.f32 %v1241, 1.442695
    %v1243 = vpow.pop %v1242
    %v1244 = vadd.f32 %v1243, 1.0
    %v1245 = vrcp.pop %v1244
    %v1246 = vmul.f32 %v1244, %v1245
    %v1247 = vsub.f32 1.0, %v1246
    %v1248 = vmul.f32 %v1245, %v1247
    %v1249 = vadd.f32 %v1245, %v1248
    %vm1250 = vweird.f32 %v1244
    %vm1251 = vweird.f32 %v1245
    %vm1252 = vmor %vm1250, %vm1251
    %v1253 = vsel %vm1252, %v1245, %v1249
    %v1254 = vand.u32 2147483647, %v1244
    %vm1255 = vcmp.eq.f32.partialorder %v1254, 8.507059e+37
    %v1256 = vand.u32 %v1244, 2147483648
    %v1257 = vor.u32 1.1754944e-38, %v1256
    %v1258 = vsel %vm1255, %v1257, %v1253
    %v1259 = vmul.f32 1.0, %v1258
    %v1260 = vtanh.pop %v1220
    %v1261 = vxor.u32 %v1221, 2147483648
    %v1262 = vmul.f32 %v1261, 1.442695
    %v1263 = vpow.pop %v1262
    %v1264 = vadd.f32 %v1263, 1.0
    %v1265 = vrcp.pop %v1264
    %v1266 = vmul.f32 %v1264, %v1265
    %v1267 = vsub.f32 1.0, %v1266
    %v1268 = vmul.f32 %v1265, %v1267
    %v1269 = vadd.f32 %v1265, %v1268
    %vm1270 = vweird.f32 %v1264
    %vm1271 = vweird.f32 %v1265
    %vm1272 = vmor %vm1270, %vm1271
    %v1273 = vsel %vm1272, %v1265, %v1269
    %v1274 = vand.u32 2147483647, %v1264
    %vm1275 = vcmp.eq.f32.partialorder %v1274, 8.507059e+37
    %v1276 = vand.u32 %v1264, 2147483648
    %v1277 = vor.u32 1.1754944e-38, %v1276
    %v1278 = vsel %vm1275, %v1277, %v1273
    %v1279 = vmul.f32 1.0, %v1278
    %v1280 = vmul.f32 %v1259, %v981
    %v1281 = vmul.f32 %v1240, %v1260
    %v1282 = vadd.f32 %v1280, %v1281
    %v1283 = vtanh.pop %v1282
    %v1284 = vmul.f32 %v1279, %v1283
    %1285 = vmatpush.msra.mxu0 0.0
    %1286 = vmatpush.msra.mxu0 0.0
    %1287 = vmatpush.msra.mxu0 0.0
    %1288 = vmatpush.msra.mxu0 0.0
    %1289 = vmatpush.msra.mxu0 0.0
    %1290 = vmatpush.msra.mxu0 0.0
    %1291 = vmatpush.msra.mxu0 0.0
    %1292 = vmatpush.msra.mxu0 0.0
    %1293 = vmatpush.msra.mxu0 0.0
    %1294 = vmatpush.msra.mxu0 0.0
    %1295 = vmatpush.msra.mxu0 0.0
    %1296 = vmatpush.msra.mxu0 0.0
    %1297 = vmatpush.msra.mxu0 0.0
    %1298 = vmatpush.msra.mxu0 0.0
    %1299 = vmatpush.msra.mxu0 %v1079
    %1300 = vmatpush.msra.mxu0 %v1284
    %1301 = vmatmul.f32.gmra.mxu0 %v371
    %v1302 = vpop.f32.mrf.mxu0
    %v1303 = vadd.f32 0.0, %v1302
    %1304 = vmatmul.f32.gmra.mxu0 %v374
    %v1305 = vpop.f32.mrf.mxu0
    %v1306 = vadd.f32 0.0, %v1305
    %1307 = vmatmul.f32.gmra.mxu0 %v377
    %v1308 = vpop.f32.mrf.mxu0
    %v1309 = vadd.f32 0.0, %v1308
    %1310 = vmatmul.f32.gmra.mxu0 %v380
    %v1311 = vpop.f32.mrf.mxu0
    %v1312 = vadd.f32 0.0, %v1311
    %1313 = vdwg.mxu0
    %v1314 = vadd.f32 %v99, %v1303
    %v1315 = vadd.f32 %v104, %v1306
    %v1316 = vadd.f32 %v109, %v1309
    %v1317 = vadd.f32 %v114, %v1312
    %v1318 = vxor.u32 %v1314, 2147483648
    %v1319 = vmul.f32 %v1318, 1.442695
    %v1320 = vpow.pop %v1319
    %v1321 = vadd.f32 %v1320, 1.0
    %v1322 = vrcp.pop %v1321
    %v1323 = vmul.f32 %v1321, %v1322
    %v1324 = vsub.f32 1.0, %v1323
    %v1325 = vmul.f32 %v1322, %v1324
    %v1326 = vadd.f32 %v1322, %v1325
    %vm1327 = vweird.f32 %v1321
    %vm1328 = vweird.f32 %v1322
    %vm1329 = vmor %vm1327, %vm1328
    %v1330 = vsel %vm1329, %v1322, %v1326
    %v1331 = vand.u32 2147483647, %v1321
    %vm1332 = vcmp.eq.f32.partialorder %v1331, 8.507059e+37
    %v1333 = vand.u32 %v1321, 2147483648
    %v1334 = vor.u32 1.1754944e-38, %v1333
    %v1335 = vsel %vm1332, %v1334, %v1330
    %v1336 = vmul.f32 1.0, %v1335
    %v1337 = vxor.u32 %v1315, 2147483648
    %v1338 = vmul.f32 %v1337, 1.442695
    %v1339 = vpow.pop %v1338
    %v1340 = vadd.f32 %v1339, 1.0
    %v1341 = vrcp.pop %v1340
    %v1342 = vmul.f32 %v1340, %v1341
    %v1343 = vsub.f32 1.0, %v1342
    %v1344 = vmul.f32 %v1341, %v1343
    %v1345 = vadd.f32 %v1341, %v1344
    %vm1346 = vweird.f32 %v1340
    %vm1347 = vweird.f32 %v1341
    %vm1348 = vmor %vm1346, %vm1347
    %v1349 = vsel %vm1348, %v1341, %v1345
    %v1350 = vand.u32 2147483647, %v1340
    %vm1351 = vcmp.eq.f32.partialorder %v1350, 8.507059e+37
    %v1352 = vand.u32 %v1340, 2147483648
    %v1353 = vor.u32 1.1754944e-38, %v1352
    %v1354 = vsel %vm1351, %v1353, %v1349
    %v1355 = vmul.f32 1.0, %v1354
    %v1356 = vtanh.pop %v1316
    %v1357 = vxor.u32 %v1317, 2147483648
    %v1358 = vmul.f32 %v1357, 1.442695
    %v1359 = vpow.pop %v1358
    %v1360 = vadd.f32 %v1359, 1.0
    %v1361 = vrcp.pop %v1360
    %v1362 = vmul.f32 %v1360, %v1361
    %v1363 = vsub.f32 1.0, %v1362
    %v1364 = vmul.f32 %v1361, %v1363
    %v1365 = vadd.f32 %v1361, %v1364
    %vm1366 = vweird.f32 %v1360
    %vm1367 = vweird.f32 %v1361
    %vm1368 = vmor %vm1366, %vm1367
    %v1369 = vsel %vm1368, %v1361, %v1365
    %v1370 = vand.u32 2147483647, %v1360
    %vm1371 = vcmp.eq.f32.partialorder %v1370, 8.507059e+37
    %v1372 = vand.u32 %v1360, 2147483648
    %v1373 = vor.u32 1.1754944e-38, %v1372
    %v1374 = vsel %vm1371, %v1373, %v1369
    %v1375 = vmul.f32 1.0, %v1374
    %v1376 = vmul.f32 %v1355, %v1077
    %v1377 = vmul.f32 %v1336, %v1356
    %v1378 = vadd.f32 %v1376, %v1377
    %v1379 = vtanh.pop %v1378
    %v1380 = vmul.f32 %v1375, %v1379
    %s1381 = scalar_lea.vmem %s0, 4
    %v1382 = vld [vmem:[%s1381] sm:$0x1]
    %v1384 = vperm.slane %v1382, 0
    %v1386 = vmul.f32 %v123, %v1384
    %v1387 = vmul.f32 %v128, %v1384
    %v1388 = vmul.f32 %v133, %v1384
    %v1389 = vmul.f32 %v138, %v1384
    %v1390 = vadd.f32 %v1386, %v49
    %v1391 = vadd.f32 %v1387, %v54
    %v1392 = vadd.f32 %v1388, %v59
    %v1393 = vadd.f32 %v1389, %v64
    %1394 = vmatpush.msra.mxu0 0.0
    %1395 = vmatpush.msra.mxu0 0.0
    %1396 = vmatpush.msra.mxu0 0.0
    %1397 = vmatpush.msra.mxu0 0.0
    %1398 = vmatpush.msra.mxu0 0.0
    %1399 = vmatpush.msra.mxu0 0.0
    %1400 = vmatpush.msra.mxu0 0.0
    %1401 = vmatpush.msra.mxu0 0.0
    %1402 = vmatpush.msra.mxu0 0.0
    %1403 = vmatpush.msra.mxu0 0.0
    %1404 = vmatpush.msra.mxu0 0.0
    %1405 = vmatpush.msra.mxu0 0.0
    %1406 = vmatpush.msra.mxu0 0.0
    %1407 = vmatpush.msra.mxu0 0.0
    %1408 = vmatpush.msra.mxu0 0.0
    %1409 = vmatpush.msra.mxu0 %v1188
    %1410 = vmatmul.f32.gmra.mxu0 %v154
    %v1411 = vpop.f32.mrf.mxu0
    %v1412 = vadd.f32 0.0, %v1411
    %1413 = vmatmul.f32.gmra.mxu0 %v157
    %v1414 = vpop.f32.mrf.mxu0
    %v1415 = vadd.f32 0.0, %v1414
    %1416 = vmatmul.f32.gmra.mxu0 %v160
    %v1417 = vpop.f32.mrf.mxu0
    %v1418 = vadd.f32 0.0, %v1417
    %1419 = vmatmul.f32.gmra.mxu0 %v163
    %v1420 = vpop.f32.mrf.mxu0
    %v1421 = vadd.f32 0.0, %v1420
    %1422 = vdwg.mxu0
    %v1423 = vadd.f32 %v1390, %v1412
    %v1424 = vadd.f32 %v1391, %v1415
    %v1425 = vadd.f32 %v1392, %v1418
    %v1426 = vadd.f32 %v1393, %v1421
    %v1427 = vxor.u32 %v1423, 2147483648
    %v1428 = vmul.f32 %v1427, 1.442695
    %v1429 = vpow.pop %v1428
    %v1430 = vadd.f32 %v1429, 1.0
    %v1431 = vrcp.pop %v1430
    %v1432 = vmul.f32 %v1430, %v1431
    %v1433 = vsub.f32 1.0, %v1432
    %v1434 = vmul.f32 %v1431, %v1433
    %v1435 = vadd.f32 %v1431, %v1434
    %vm1436 = vweird.f32 %v1430
    %vm1437 = vweird.f32 %v1431
    %vm1438 = vmor %vm1436, %vm1437
    %v1439 = vsel %vm1438, %v1431, %v1435
    %v1440 = vand.u32 2147483647, %v1430
    %vm1441 = vcmp.eq.f32.partialorder %v1440, 8.507059e+37
    %v1442 = vand.u32 %v1430, 2147483648
    %v1443 = vor.u32 1.1754944e-38, %v1442
    %v1444 = vsel %vm1441, %v1443, %v1439
    %v1445 = vmul.f32 1.0, %v1444
    %v1446 = vxor.u32 %v1424, 2147483648
    %v1447 = vmul.f32 %v1446, 1.442695
    %v1448 = vpow.pop %v1447
    %v1449 = vadd.f32 %v1448, 1.0
    %v1450 = vrcp.pop %v1449
    %v1451 = vmul.f32 %v1449, %v1450
    %v1452 = vsub.f32 1.0, %v1451
    %v1453 = vmul.f32 %v1450, %v1452
    %v1454 = vadd.f32 %v1450, %v1453
    %vm1455 = vweird.f32 %v1449
    %vm1456 = vweird.f32 %v1450
    %vm1457 = vmor %vm1455, %vm1456
    %v1458 = vsel %vm1457, %v1450, %v1454
    %v1459 = vand.u32 2147483647, %v1449
    %vm1460 = vcmp.eq.f32.partialorder %v1459, 8.507059e+37
    %v1461 = vand.u32 %v1449, 2147483648
    %v1462 = vor.u32 1.1754944e-38, %v1461
    %v1463 = vsel %vm1460, %v1462, %v1458
    %v1464 = vmul.f32 1.0, %v1463
    %v1465 = vtanh.pop %v1425
    %v1466 = vxor.u32 %v1426, 2147483648
    %v1467 = vmul.f32 %v1466, 1.442695
    %v1468 = vpow.pop %v1467
    %v1469 = vadd.f32 %v1468, 1.0
    %v1470 = vrcp.pop %v1469
    %v1471 = vmul.f32 %v1469, %v1470
    %v1472 = vsub.f32 1.0, %v1471
    %v1473 = vmul.f32 %v1470, %v1472
    %v1474 = vadd.f32 %v1470, %v1473
    %vm1475 = vweird.f32 %v1469
    %vm1476 = vweird.f32 %v1470
    %vm1477 = vmor %vm1475, %vm1476
    %v1478 = vsel %vm1477, %v1470, %v1474
    %v1479 = vand.u32 2147483647, %v1469
    %vm1480 = vcmp.eq.f32.partialorder %v1479, 8.507059e+37
    %v1481 = vand.u32 %v1469, 2147483648
    %v1482 = vor.u32 1.1754944e-38, %v1481
    %v1483 = vsel %vm1480, %v1482, %v1478
    %v1484 = vmul.f32 1.0, %v1483
    %v1485 = vmul.f32 %v1464, %v1186
    %v1486 = vmul.f32 %v1445, %v1465
    %v1487 = vadd.f32 %v1485, %v1486
    %v1488 = vtanh.pop %v1487
    %v1489 = vmul.f32 %v1484, %v1488
    %1490 = vmatpush.msra.mxu0 0.0
    %1491 = vmatpush.msra.mxu0 0.0
    %1492 = vmatpush.msra.mxu0 0.0
    %1493 = vmatpush.msra.mxu0 0.0
    %1494 = vmatpush.msra.mxu0 0.0
    %1495 = vmatpush.msra.mxu0 0.0
    %1496 = vmatpush.msra.mxu0 0.0
    %1497 = vmatpush.msra.mxu0 0.0
    %1498 = vmatpush.msra.mxu0 0.0
    %1499 = vmatpush.msra.mxu0 0.0
    %1500 = vmatpush.msra.mxu0 0.0
    %1501 = vmatpush.msra.mxu0 0.0
    %1502 = vmatpush.msra.mxu0 0.0
    %1503 = vmatpush.msra.mxu0 0.0
    %1504 = vmatpush.msra.mxu0 %v1284
    %1505 = vmatpush.msra.mxu0 %v1489
    %1506 = vmatmul.f32.gmra.mxu0 %v263
    %v1507 = vpop.f32.mrf.mxu0
    %v1508 = vadd.f32 0.0, %v1507
    %1509 = vmatmul.f32.gmra.mxu0 %v266
    %v1510 = vpop.f32.mrf.mxu0
    %v1511 = vadd.f32 0.0, %v1510
    %1512 = vmatmul.f32.gmra.mxu0 %v269
    %v1513 = vpop.f32.mrf.mxu0
    %v1514 = vadd.f32 0.0, %v1513
    %1515 = vmatmul.f32.gmra.mxu0 %v272
    %v1516 = vpop.f32.mrf.mxu0
    %v1517 = vadd.f32 0.0, %v1516
    %1518 = vdwg.mxu0
    %v1519 = vadd.f32 %v74, %v1508
    %v1520 = vadd.f32 %v79, %v1511
    %v1521 = vadd.f32 %v84, %v1514
    %v1522 = vadd.f32 %v89, %v1517
    %v1523 = vxor.u32 %v1519, 2147483648
    %v1524 = vmul.f32 %v1523, 1.442695
    %v1525 = vpow.pop %v1524
    %v1526 = vadd.f32 %v1525, 1.0
    %v1527 = vrcp.pop %v1526
    %v1528 = vmul.f32 %v1526, %v1527
    %v1529 = vsub.f32 1.0, %v1528
    %v1530 = vmul.f32 %v1527, %v1529
    %v1531 = vadd.f32 %v1527, %v1530
    %vm1532 = vweird.f32 %v1526
    %vm1533 = vweird.f32 %v1527
    %vm1534 = vmor %vm1532, %vm1533
    %v1535 = vsel %vm1534, %v1527, %v1531
    %v1536 = vand.u32 2147483647, %v1526
    %vm1537 = vcmp.eq.f32.partialorder %v1536, 8.507059e+37
    %v1538 = vand.u32 %v1526, 2147483648
    %v1539 = vor.u32 1.1754944e-38, %v1538
    %v1540 = vsel %vm1537, %v1539, %v1535
    %v1541 = vmul.f32 1.0, %v1540
    %v1542 = vxor.u32 %v1520, 2147483648
    %v1543 = vmul.f32 %v1542, 1.442695
    %v1544 = vpow.pop %v1543
    %v1545 = vadd.f32 %v1544, 1.0
    %v1546 = vrcp.pop %v1545
    %v1547 = vmul.f32 %v1545, %v1546
    %v1548 = vsub.f32 1.0, %v1547
    %v1549 = vmul.f32 %v1546, %v1548
    %v1550 = vadd.f32 %v1546, %v1549
    %vm1551 = vweird.f32 %v1545
    %vm1552 = vweird.f32 %v1546
    %vm1553 = vmor %vm1551, %vm1552
    %v1554 = vsel %vm1553, %v1546, %v1550
    %v1555 = vand.u32 2147483647, %v1545
    %vm1556 = vcmp.eq.f32.partialorder %v1555, 8.507059e+37
    %v1557 = vand.u32 %v1545, 2147483648
    %v1558 = vor.u32 1.1754944e-38, %v1557
    %v1559 = vsel %vm1556, %v1558, %v1554
    %v1560 = vmul.f32 1.0, %v1559
    %v1561 = vtanh.pop %v1521
    %v1562 = vxor.u32 %v1522, 2147483648
    %v1563 = vmul.f32 %v1562, 1.442695
    %v1564 = vpow.pop %v1563
    %v1565 = vadd.f32 %v1564, 1.0
    %v1566 = vrcp.pop %v1565
    %v1567 = vmul.f32 %v1565, %v1566
    %v1568 = vsub.f32 1.0, %v1567
    %v1569 = vmul.f32 %v1566, %v1568
    %v1570 = vadd.f32 %v1566, %v1569
    %vm1571 = vweird.f32 %v1565
    %vm1572 = vweird.f32 %v1566
    %vm1573 = vmor %vm1571, %vm1572
    %v1574 = vsel %vm1573, %v1566, %v1570
    %v1575 = vand.u32 2147483647, %v1565
    %vm1576 = vcmp.eq.f32.partialorder %v1575, 8.507059e+37
    %v1577 = vand.u32 %v1565, 2147483648
    %v1578 = vor.u32 1.1754944e-38, %v1577
    %v1579 = vsel %vm1576, %v1578, %v1574
    %v1580 = vmul.f32 1.0, %v1579
    %v1581 = vmul.f32 %v1560, %v1282
    %v1582 = vmul.f32 %v1541, %v1561
    %v1583 = vadd.f32 %v1581, %v1582
    %v1584 = vtanh.pop %v1583
    %v1585 = vmul.f32 %v1580, %v1584
    %1586 = vmatpush.msra.mxu0 0.0
    %1587 = vmatpush.msra.mxu0 0.0
    %1588 = vmatpush.msra.mxu0 0.0
    %1589 = vmatpush.msra.mxu0 0.0
    %1590 = vmatpush.msra.mxu0 0.0
    %1591 = vmatpush.msra.mxu0 0.0
    %1592 = vmatpush.msra.mxu0 0.0
    %1593 = vmatpush.msra.mxu0 0.0
    %1594 = vmatpush.msra.mxu0 0.0
    %1595 = vmatpush.msra.mxu0 0.0
    %1596 = vmatpush.msra.mxu0 0.0
    %1597 = vmatpush.msra.mxu0 0.0
    %1598 = vmatpush.msra.mxu0 0.0
    %1599 = vmatpush.msra.mxu0 0.0
    %1600 = vmatpush.msra.mxu0 %v1380
    %1601 = vmatpush.msra.mxu0 %v1585
    %1602 = vmatmul.f32.gmra.mxu0 %v371
    %v1603 = vpop.f32.mrf.mxu0
    %v1604 = vadd.f32 0.0, %v1603
    %1605 = vmatmul.f32.gmra.mxu0 %v374
    %v1606 = vpop.f32.mrf.mxu0
    %v1607 = vadd.f32 0.0, %v1606
    %1608 = vmatmul.f32.gmra.mxu0 %v377
    %v1609 = vpop.f32.mrf.mxu0
    %v1610 = vadd.f32 0.0, %v1609
    %1611 = vmatmul.f32.gmra.mxu0 %v380
    %v1612 = vpop.f32.mrf.mxu0
    %v1613 = vadd.f32 0.0, %v1612
    %1614 = vdwg.mxu0
    %v1615 = vadd.f32 %v99, %v1604
    %v1616 = vadd.f32 %v104, %v1607
    %v1617 = vadd.f32 %v109, %v1610
    %v1618 = vadd.f32 %v114, %v1613
    %v1619 = vxor.u32 %v1615, 2147483648
    %v1620 = vmul.f32 %v1619, 1.442695
    %v1621 = vpow.pop %v1620
    %v1622 = vadd.f32 %v1621, 1.0
    %v1623 = vrcp.pop %v1622
    %v1624 = vmul.f32 %v1622, %v1623
    %v1625 = vsub.f32 1.0, %v1624
    %v1626 = vmul.f32 %v1623, %v1625
    %v1627 = vadd.f32 %v1623, %v1626
    %vm1628 = vweird.f32 %v1622
    %vm1629 = vweird.f32 %v1623
    %vm1630 = vmor %vm1628, %vm1629
    %v1631 = vsel %vm1630, %v1623, %v1627
    %v1632 = vand.u32 2147483647, %v1622
    %vm1633 = vcmp.eq.f32.partialorder %v1632, 8.507059e+37
    %v1634 = vand.u32 %v1622, 2147483648
    %v1635 = vor.u32 1.1754944e-38, %v1634
    %v1636 = vsel %vm1633, %v1635, %v1631
    %v1637 = vmul.f32 1.0, %v1636
    %v1638 = vxor.u32 %v1616, 2147483648
    %v1639 = vmul.f32 %v1638, 1.442695
    %v1640 = vpow.pop %v1639
    %v1641 = vadd.f32 %v1640, 1.0
    %v1642 = vrcp.pop %v1641
    %v1643 = vmul.f32 %v1641, %v1642
    %v1644 = vsub.f32 1.0, %v1643
    %v1645 = vmul.f32 %v1642, %v1644
    %v1646 = vadd.f32 %v1642, %v1645
    %vm1647 = vweird.f32 %v1641
    %vm1648 = vweird.f32 %v1642
    %vm1649 = vmor %vm1647, %vm1648
    %v1650 = vsel %vm1649, %v1642, %v1646
    %v1651 = vand.u32 2147483647, %v1641
    %vm1652 = vcmp.eq.f32.partialorder %v1651, 8.507059e+37
    %v1653 = vand.u32 %v1641, 2147483648
    %v1654 = vor.u32 1.1754944e-38, %v1653
    %v1655 = vsel %vm1652, %v1654, %v1650
    %v1656 = vmul.f32 1.0, %v1655
    %v1657 = vtanh.pop %v1617
    %v1658 = vxor.u32 %v1618, 2147483648
    %v1659 = vmul.f32 %v1658, 1.442695
    %v1660 = vpow.pop %v1659
    %v1661 = vadd.f32 %v1660, 1.0
    %v1662 = vrcp.pop %v1661
    %v1663 = vmul.f32 %v1661, %v1662
    %v1664 = vsub.f32 1.0, %v1663
    %v1665 = vmul.f32 %v1662, %v1664
    %v1666 = vadd.f32 %v1662, %v1665
    %vm1667 = vweird.f32 %v1661
    %vm1668 = vweird.f32 %v1662
    %vm1669 = vmor %vm1667, %vm1668
    %v1670 = vsel %vm1669, %v1662, %v1666
    %v1671 = vand.u32 2147483647, %v1661
    %vm1672 = vcmp.eq.f32.partialorder %v1671, 8.507059e+37
    %v1673 = vand.u32 %v1661, 2147483648
    %v1674 = vor.u32 1.1754944e-38, %v1673
    %v1675 = vsel %vm1672, %v1674, %v1670
    %v1676 = vmul.f32 1.0, %v1675
    %v1677 = vmul.f32 %v1656, %v1378
    %v1678 = vmul.f32 %v1637, %v1657
    %v1679 = vadd.f32 %v1677, %v1678
    %v1680 = vtanh.pop %v1679
    %v1681 = vmul.f32 %v1676, %v1680
    %s1682 = scalar_lea.vmem %s0, 5
    %v1683 = vld [vmem:[%s1682] sm:$0x1]
    %v1685 = vperm.slane %v1683, 0
    %v1687 = vmul.f32 %v123, %v1685
    %v1688 = vmul.f32 %v128, %v1685
    %v1689 = vmul.f32 %v133, %v1685
    %v1690 = vmul.f32 %v138, %v1685
    %v1691 = vadd.f32 %v1687, %v49
    %v1692 = vadd.f32 %v1688, %v54
    %v1693 = vadd.f32 %v1689, %v59
    %v1694 = vadd.f32 %v1690, %v64
    %1695 = vmatpush.msra.mxu0 0.0
    %1696 = vmatpush.msra.mxu0 0.0
    %1697 = vmatpush.msra.mxu0 0.0
    %1698 = vmatpush.msra.mxu0 0.0
    %1699 = vmatpush.msra.mxu0 0.0
    %1700 = vmatpush.msra.mxu0 0.0
    %1701 = vmatpush.msra.mxu0 0.0
    %1702 = vmatpush.msra.mxu0 0.0
    %1703 = vmatpush.msra.mxu0 0.0
    %1704 = vmatpush.msra.mxu0 0.0
    %1705 = vmatpush.msra.mxu0 0.0
    %1706 = vmatpush.msra.mxu0 0.0
    %1707 = vmatpush.msra.mxu0 0.0
    %1708 = vmatpush.msra.mxu0 0.0
    %1709 = vmatpush.msra.mxu0 0.0
    %1710 = vmatpush.msra.mxu0 %v1489
    %1711 = vmatmul.f32.gmra.mxu0 %v154
    %v1712 = vpop.f32.mrf.mxu0
    %v1713 = vadd.f32 0.0, %v1712
    %1714 = vmatmul.f32.gmra.mxu0 %v157
    %v1715 = vpop.f32.mrf.mxu0
    %v1716 = vadd.f32 0.0, %v1715
    %1717 = vmatmul.f32.gmra.mxu0 %v160
    %v1718 = vpop.f32.mrf.mxu0
    %v1719 = vadd.f32 0.0, %v1718
    %1720 = vmatmul.f32.gmra.mxu0 %v163
    %v1721 = vpop.f32.mrf.mxu0
    %v1722 = vadd.f32 0.0, %v1721
    %1723 = vdwg.mxu0
    %v1724 = vadd.f32 %v1691, %v1713
    %v1725 = vadd.f32 %v1692, %v1716
    %v1726 = vadd.f32 %v1693, %v1719
    %v1727 = vadd.f32 %v1694, %v1722
    %v1728 = vxor.u32 %v1724, 2147483648
    %v1729 = vmul.f32 %v1728, 1.442695
    %v1730 = vpow.pop %v1729
    %v1731 = vadd.f32 %v1730, 1.0
    %v1732 = vrcp.pop %v1731
    %v1733 = vmul.f32 %v1731, %v1732
    %v1734 = vsub.f32 1.0, %v1733
    %v1735 = vmul.f32 %v1732, %v1734
    %v1736 = vadd.f32 %v1732, %v1735
    %vm1737 = vweird.f32 %v1731
    %vm1738 = vweird.f32 %v1732
    %vm1739 = vmor %vm1737, %vm1738
    %v1740 = vsel %vm1739, %v1732, %v1736
    %v1741 = vand.u32 2147483647, %v1731
    %vm1742 = vcmp.eq.f32.partialorder %v1741, 8.507059e+37
    %v1743 = vand.u32 %v1731, 2147483648
    %v1744 = vor.u32 1.1754944e-38, %v1743
    %v1745 = vsel %vm1742, %v1744, %v1740
    %v1746 = vmul.f32 1.0, %v1745
    %v1747 = vxor.u32 %v1725, 2147483648
    %v1748 = vmul.f32 %v1747, 1.442695
    %v1749 = vpow.pop %v1748
    %v1750 = vadd.f32 %v1749, 1.0
    %v1751 = vrcp.pop %v1750
    %v1752 = vmul.f32 %v1750, %v1751
    %v1753 = vsub.f32 1.0, %v1752
    %v1754 = vmul.f32 %v1751, %v1753
    %v1755 = vadd.f32 %v1751, %v1754
    %vm1756 = vweird.f32 %v1750
    %vm1757 = vweird.f32 %v1751
    %vm1758 = vmor %vm1756, %vm1757
    %v1759 = vsel %vm1758, %v1751, %v1755
    %v1760 = vand.u32 2147483647, %v1750
    %vm1761 = vcmp.eq.f32.partialorder %v1760, 8.507059e+37
    %v1762 = vand.u32 %v1750, 2147483648
    %v1763 = vor.u32 1.1754944e-38, %v1762
    %v1764 = vsel %vm1761, %v1763, %v1759
    %v1765 = vmul.f32 1.0, %v1764
    %v1766 = vtanh.pop %v1726
    %v1767 = vxor.u32 %v1727, 2147483648
    %v1768 = vmul.f32 %v1767, 1.442695
    %v1769 = vpow.pop %v1768
    %v1770 = vadd.f32 %v1769, 1.0
    %v1771 = vrcp.pop %v1770
    %v1772 = vmul.f32 %v1770, %v1771
    %v1773 = vsub.f32 1.0, %v1772
    %v1774 = vmul.f32 %v1771, %v1773
    %v1775 = vadd.f32 %v1771, %v1774
    %vm1776 = vweird.f32 %v1770
    %vm1777 = vweird.f32 %v1771
    %vm1778 = vmor %vm1776, %vm1777
    %v1779 = vsel %vm1778, %v1771, %v1775
    %v1780 = vand.u32 2147483647, %v1770
    %vm1781 = vcmp.eq.f32.partialorder %v1780, 8.507059e+37
    %v1782 = vand.u32 %v1770, 2147483648
    %v1783 = vor.u32 1.1754944e-38, %v1782
    %v1784 = vsel %vm1781, %v1783, %v1779
    %v1785 = vmul.f32 1.0, %v1784
    %v1786 = vmul.f32 %v1765, %v1487
    %v1787 = vmul.f32 %v1746, %v1766
    %v1788 = vadd.f32 %v1786, %v1787
    %v1789 = vtanh.pop %v1788
    %v1790 = vmul.f32 %v1785, %v1789
    %1791 = vmatpush.msra.mxu0 0.0
    %1792 = vmatpush.msra.mxu0 0.0
    %1793 = vmatpush.msra.mxu0 0.0
    %1794 = vmatpush.msra.mxu0 0.0
    %1795 = vmatpush.msra.mxu0 0.0
    %1796 = vmatpush.msra.mxu0 0.0
    %1797 = vmatpush.msra.mxu0 0.0
    %1798 = vmatpush.msra.mxu0 0.0
    %1799 = vmatpush.msra.mxu0 0.0
    %1800 = vmatpush.msra.mxu0 0.0
    %1801 = vmatpush.msra.mxu0 0.0
    %1802 = vmatpush.msra.mxu0 0.0
    %1803 = vmatpush.msra.mxu0 0.0
    %1804 = vmatpush.msra.mxu0 0.0
    %1805 = vmatpush.msra.mxu0 %v1585
    %1806 = vmatpush.msra.mxu0 %v1790
    %1807 = vmatmul.f32.gmra.mxu0 %v263
    %v1808 = vpop.f32.mrf.mxu0
    %v1809 = vadd.f32 0.0, %v1808
    %1810 = vmatmul.f32.gmra.mxu0 %v266
    %v1811 = vpop.f32.mrf.mxu0
    %v1812 = vadd.f32 0.0, %v1811
    %1813 = vmatmul.f32.gmra.mxu0 %v269
    %v1814 = vpop.f32.mrf.mxu0
    %v1815 = vadd.f32 0.0, %v1814
    %1816 = vmatmul.f32.gmra.mxu0 %v272
    %v1817 = vpop.f32.mrf.mxu0
    %v1818 = vadd.f32 0.0, %v1817
    %1819 = vdwg.mxu0
    %v1820 = vadd.f32 %v74, %v1809
    %v1821 = vadd.f32 %v79, %v1812
    %v1822 = vadd.f32 %v84, %v1815
    %v1823 = vadd.f32 %v89, %v1818
    %v1824 = vxor.u32 %v1820, 2147483648
    %v1825 = vmul.f32 %v1824, 1.442695
    %v1826 = vpow.pop %v1825
    %v1827 = vadd.f32 %v1826, 1.0
    %v1828 = vrcp.pop %v1827
    %v1829 = vmul.f32 %v1827, %v1828
    %v1830 = vsub.f32 1.0, %v1829
    %v1831 = vmul.f32 %v1828, %v1830
    %v1832 = vadd.f32 %v1828, %v1831
    %vm1833 = vweird.f32 %v1827
    %vm1834 = vweird.f32 %v1828
    %vm1835 = vmor %vm1833, %vm1834
    %v1836 = vsel %vm1835, %v1828, %v1832
    %v1837 = vand.u32 2147483647, %v1827
    %vm1838 = vcmp.eq.f32.partialorder %v1837, 8.507059e+37
    %v1839 = vand.u32 %v1827, 2147483648
    %v1840 = vor.u32 1.1754944e-38, %v1839
    %v1841 = vsel %vm1838, %v1840, %v1836
    %v1842 = vmul.f32 1.0, %v1841
    %v1843 = vxor.u32 %v1821, 2147483648
    %v1844 = vmul.f32 %v1843, 1.442695
    %v1845 = vpow.pop %v1844
    %v1846 = vadd.f32 %v1845, 1.0
    %v1847 = vrcp.pop %v1846
    %v1848 = vmul.f32 %v1846, %v1847
    %v1849 = vsub.f32 1.0, %v1848
    %v1850 = vmul.f32 %v1847, %v1849
    %v1851 = vadd.f32 %v1847, %v1850
    %vm1852 = vweird.f32 %v1846
    %vm1853 = vweird.f32 %v1847
    %vm1854 = vmor %vm1852, %vm1853
    %v1855 = vsel %vm1854, %v1847, %v1851
    %v1856 = vand.u32 2147483647, %v1846
    %vm1857 = vcmp.eq.f32.partialorder %v1856, 8.507059e+37
    %v1858 = vand.u32 %v1846, 2147483648
    %v1859 = vor.u32 1.1754944e-38, %v1858
    %v1860 = vsel %vm1857, %v1859, %v1855
    %v1861 = vmul.f32 1.0, %v1860
    %v1862 = vtanh.pop %v1822
    %v1863 = vxor.u32 %v1823, 2147483648
    %v1864 = vmul.f32 %v1863, 1.442695
    %v1865 = vpow.pop %v1864
    %v1866 = vadd.f32 %v1865, 1.0
    %v1867 = vrcp.pop %v1866
    %v1868 = vmul.f32 %v1866, %v1867
    %v1869 = vsub.f32 1.0, %v1868
    %v1870 = vmul.f32 %v1867, %v1869
    %v1871 = vadd.f32 %v1867, %v1870
    %vm1872 = vweird.f32 %v1866
    %vm1873 = vweird.f32 %v1867
    %vm1874 = vmor %vm1872, %vm1873
    %v1875 = vsel %vm1874, %v1867, %v1871
    %v1876 = vand.u32 2147483647, %v1866
    %vm1877 = vcmp.eq.f32.partialorder %v1876, 8.507059e+37
    %v1878 = vand.u32 %v1866, 2147483648
    %v1879 = vor.u32 1.1754944e-38, %v1878
    %v1880 = vsel %vm1877, %v1879, %v1875
    %v1881 = vmul.f32 1.0, %v1880
    %v1882 = vmul.f32 %v1861, %v1583
    %v1883 = vmul.f32 %v1842, %v1862
    %v1884 = vadd.f32 %v1882, %v1883
    %v1885 = vtanh.pop %v1884
    %v1886 = vmul.f32 %v1881, %v1885
    %1887 = vmatpush.msra.mxu0 0.0
    %1888 = vmatpush.msra.mxu0 0.0
    %1889 = vmatpush.msra.mxu0 0.0
    %1890 = vmatpush.msra.mxu0 0.0
    %1891 = vmatpush.msra.mxu0 0.0
    %1892 = vmatpush.msra.mxu0 0.0
    %1893 = vmatpush.msra.mxu0 0.0
    %1894 = vmatpush.msra.mxu0 0.0
    %1895 = vmatpush.msra.mxu0 0.0
    %1896 = vmatpush.msra.mxu0 0.0
    %1897 = vmatpush.msra.mxu0 0.0
    %1898 = vmatpush.msra.mxu0 0.0
    %1899 = vmatpush.msra.mxu0 0.0
    %1900 = vmatpush.msra.mxu0 0.0
    %1901 = vmatpush.msra.mxu0 %v1681
    %1902 = vmatpush.msra.mxu0 %v1886
    %1903 = vmatmul.f32.gmra.mxu0 %v371
    %v1904 = vpop.f32.mrf.mxu0
    %v1905 = vadd.f32 0.0, %v1904
    %1906 = vmatmul.f32.gmra.mxu0 %v374
    %v1907 = vpop.f32.mrf.mxu0
    %v1908 = vadd.f32 0.0, %v1907
    %1909 = vmatmul.f32.gmra.mxu0 %v377
    %v1910 = vpop.f32.mrf.mxu0
    %v1911 = vadd.f32 0.0, %v1910
    %1912 = vmatmul.f32.gmra.mxu0 %v380
    %v1913 = vpop.f32.mrf.mxu0
    %v1914 = vadd.f32 0.0, %v1913
    %1915 = vdwg.mxu0
    %v1916 = vadd.f32 %v99, %v1905
    %v1917 = vadd.f32 %v104, %v1908
    %v1918 = vadd.f32 %v109, %v1911
    %v1919 = vadd.f32 %v114, %v1914
    %v1920 = vxor.u32 %v1916, 2147483648
    %v1921 = vmul.f32 %v1920, 1.442695
    %v1922 = vpow.pop %v1921
    %v1923 = vadd.f32 %v1922, 1.0
    %v1924 = vrcp.pop %v1923
    %v1925 = vmul.f32 %v1923, %v1924
    %v1926 = vsub.f32 1.0, %v1925
    %v1927 = vmul.f32 %v1924, %v1926
    %v1928 = vadd.f32 %v1924, %v1927
    %vm1929 = vweird.f32 %v1923
    %vm1930 = vweird.f32 %v1924
    %vm1931 = vmor %vm1929, %vm1930
    %v1932 = vsel %vm1931, %v1924, %v1928
    %v1933 = vand.u32 2147483647, %v1923
    %vm1934 = vcmp.eq.f32.partialorder %v1933, 8.507059e+37
    %v1935 = vand.u32 %v1923, 2147483648
    %v1936 = vor.u32 1.1754944e-38, %v1935
    %v1937 = vsel %vm1934, %v1936, %v1932
    %v1938 = vmul.f32 1.0, %v1937
    %v1939 = vxor.u32 %v1917, 2147483648
    %v1940 = vmul.f32 %v1939, 1.442695
    %v1941 = vpow.pop %v1940
    %v1942 = vadd.f32 %v1941, 1.0
    %v1943 = vrcp.pop %v1942
    %v1944 = vmul.f32 %v1942, %v1943
    %v1945 = vsub.f32 1.0, %v1944
    %v1946 = vmul.f32 %v1943, %v1945
    %v1947 = vadd.f32 %v1943, %v1946
    %vm1948 = vweird.f32 %v1942
    %vm1949 = vweird.f32 %v1943
    %vm1950 = vmor %vm1948, %vm1949
    %v1951 = vsel %vm1950, %v1943, %v1947
    %v1952 = vand.u32 2147483647, %v1942
    %vm1953 = vcmp.eq.f32.partialorder %v1952, 8.507059e+37
    %v1954 = vand.u32 %v1942, 2147483648
    %v1955 = vor.u32 1.1754944e-38, %v1954
    %v1956 = vsel %vm1953, %v1955, %v1951
    %v1957 = vmul.f32 1.0, %v1956
    %v1958 = vtanh.pop %v1918
    %v1959 = vxor.u32 %v1919, 2147483648
    %v1960 = vmul.f32 %v1959, 1.442695
    %v1961 = vpow.pop %v1960
    %v1962 = vadd.f32 %v1961, 1.0
    %v1963 = vrcp.pop %v1962
    %v1964 = vmul.f32 %v1962, %v1963
    %v1965 = vsub.f32 1.0, %v1964
    %v1966 = vmul.f32 %v1963, %v1965
    %v1967 = vadd.f32 %v1963, %v1966
    %vm1968 = vweird.f32 %v1962
    %vm1969 = vweird.f32 %v1963
    %vm1970 = vmor %vm1968, %vm1969
    %v1971 = vsel %vm1970, %v1963, %v1967
    %v1972 = vand.u32 2147483647, %v1962
    %vm1973 = vcmp.eq.f32.partialorder %v1972, 8.507059e+37
    %v1974 = vand.u32 %v1962, 2147483648
    %v1975 = vor.u32 1.1754944e-38, %v1974
    %v1976 = vsel %vm1973, %v1975, %v1971
    %v1977 = vmul.f32 1.0, %v1976
    %v1978 = vmul.f32 %v1957, %v1679
    %v1979 = vmul.f32 %v1938, %v1958
    %v1980 = vadd.f32 %v1978, %v1979
    %v1981 = vtanh.pop %v1980
    %v1982 = vmul.f32 %v1977, %v1981
    %s1983 = scalar_lea.vmem %s0, 6
    %v1984 = vld [vmem:[%s1983] sm:$0x1]
    %v1986 = vperm.slane %v1984, 0
    %v1988 = vmul.f32 %v123, %v1986
    %v1989 = vmul.f32 %v128, %v1986
    %v1990 = vmul.f32 %v133, %v1986
    %v1991 = vmul.f32 %v138, %v1986
    %v1992 = vadd.f32 %v1988, %v49
    %v1993 = vadd.f32 %v1989, %v54
    %v1994 = vadd.f32 %v1990, %v59
    %v1995 = vadd.f32 %v1991, %v64
    %1996 = vmatpush.msra.mxu0 0.0
    %1997 = vmatpush.msra.mxu0 0.0
    %1998 = vmatpush.msra.mxu0 0.0
    %1999 = vmatpush.msra.mxu0 0.0
    %2000 = vmatpush.msra.mxu0 0.0
    %2001 = vmatpush.msra.mxu0 0.0
    %2002 = vmatpush.msra.mxu0 0.0
    %2003 = vmatpush.msra.mxu0 0.0
    %2004 = vmatpush.msra.mxu0 0.0
    %2005 = vmatpush.msra.mxu0 0.0
    %2006 = vmatpush.msra.mxu0 0.0
    %2007 = vmatpush.msra.mxu0 0.0
    %2008 = vmatpush.msra.mxu0 0.0
    %2009 = vmatpush.msra.mxu0 0.0
    %2010 = vmatpush.msra.mxu0 0.0
    %2011 = vmatpush.msra.mxu0 %v1790
    %2012 = vmatmul.f32.gmra.mxu0 %v154
    %v2013 = vpop.f32.mrf.mxu0
    %v2014 = vadd.f32 0.0, %v2013
    %2015 = vmatmul.f32.gmra.mxu0 %v157
    %v2016 = vpop.f32.mrf.mxu0
    %v2017 = vadd.f32 0.0, %v2016
    %2018 = vmatmul.f32.gmra.mxu0 %v160
    %v2019 = vpop.f32.mrf.mxu0
    %v2020 = vadd.f32 0.0, %v2019
    %2021 = vmatmul.f32.gmra.mxu0 %v163
    %v2022 = vpop.f32.mrf.mxu0
    %v2023 = vadd.f32 0.0, %v2022
    %2024 = vdwg.mxu0
    %v2025 = vadd.f32 %v1992, %v2014
    %v2026 = vadd.f32 %v1993, %v2017
    %v2027 = vadd.f32 %v1994, %v2020
    %v2028 = vadd.f32 %v1995, %v2023
    %v2029 = vxor.u32 %v2025, 2147483648
    %v2030 = vmul.f32 %v2029, 1.442695
    %v2031 = vpow.pop %v2030
    %v2032 = vadd.f32 %v2031, 1.0
    %v2033 = vrcp.pop %v2032
    %v2034 = vmul.f32 %v2032, %v2033
    %v2035 = vsub.f32 1.0, %v2034
    %v2036 = vmul.f32 %v2033, %v2035
    %v2037 = vadd.f32 %v2033, %v2036
    %vm2038 = vweird.f32 %v2032
    %vm2039 = vweird.f32 %v2033
    %vm2040 = vmor %vm2038, %vm2039
    %v2041 = vsel %vm2040, %v2033, %v2037
    %v2042 = vand.u32 2147483647, %v2032
    %vm2043 = vcmp.eq.f32.partialorder %v2042, 8.507059e+37
    %v2044 = vand.u32 %v2032, 2147483648
    %v2045 = vor.u32 1.1754944e-38, %v2044
    %v2046 = vsel %vm2043, %v2045, %v2041
    %v2047 = vmul.f32 1.0, %v2046
    %v2048 = vxor.u32 %v2026, 2147483648
    %v2049 = vmul.f32 %v2048, 1.442695
    %v2050 = vpow.pop %v2049
    %v2051 = vadd.f32 %v2050, 1.0
    %v2052 = vrcp.pop %v2051
    %v2053 = vmul.f32 %v2051, %v2052
    %v2054 = vsub.f32 1.0, %v2053
    %v2055 = vmul.f32 %v2052, %v2054
    %v2056 = vadd.f32 %v2052, %v2055
    %vm2057 = vweird.f32 %v2051
    %vm2058 = vweird.f32 %v2052
    %vm2059 = vmor %vm2057, %vm2058
    %v2060 = vsel %vm2059, %v2052, %v2056
    %v2061 = vand.u32 2147483647, %v2051
    %vm2062 = vcmp.eq.f32.partialorder %v2061, 8.507059e+37
    %v2063 = vand.u32 %v2051, 2147483648
    %v2064 = vor.u32 1.1754944e-38, %v2063
    %v2065 = vsel %vm2062, %v2064, %v2060
    %v2066 = vmul.f32 1.0, %v2065
    %v2067 = vtanh.pop %v2027
    %v2068 = vxor.u32 %v2028, 2147483648
    %v2069 = vmul.f32 %v2068, 1.442695
    %v2070 = vpow.pop %v2069
    %v2071 = vadd.f32 %v2070, 1.0
    %v2072 = vrcp.pop %v2071
    %v2073 = vmul.f32 %v2071, %v2072
    %v2074 = vsub.f32 1.0, %v2073
    %v2075 = vmul.f32 %v2072, %v2074
    %v2076 = vadd.f32 %v2072, %v2075
    %vm2077 = vweird.f32 %v2071
    %vm2078 = vweird.f32 %v2072
    %vm2079 = vmor %vm2077, %vm2078
    %v2080 = vsel %vm2079, %v2072, %v2076
    %v2081 = vand.u32 2147483647, %v2071
    %vm2082 = vcmp.eq.f32.partialorder %v2081, 8.507059e+37
    %v2083 = vand.u32 %v2071, 2147483648
    %v2084 = vor.u32 1.1754944e-38, %v2083
    %v2085 = vsel %vm2082, %v2084, %v2080
    %v2086 = vmul.f32 1.0, %v2085
    %v2087 = vmul.f32 %v2066, %v1788
    %v2088 = vmul.f32 %v2047, %v2067
    %v2089 = vadd.f32 %v2087, %v2088
    %v2090 = vtanh.pop %v2089
    %v2091 = vmul.f32 %v2086, %v2090
    %2092 = vmatpush.msra.mxu0 0.0
    %2093 = vmatpush.msra.mxu0 0.0
    %2094 = vmatpush.msra.mxu0 0.0
    %2095 = vmatpush.msra.mxu0 0.0
    %2096 = vmatpush.msra.mxu0 0.0
    %2097 = vmatpush.msra.mxu0 0.0
    %2098 = vmatpush.msra.mxu0 0.0
    %2099 = vmatpush.msra.mxu0 0.0
    %2100 = vmatpush.msra.mxu0 0.0
    %2101 = vmatpush.msra.mxu0 0.0
    %2102 = vmatpush.msra.mxu0 0.0
    %2103 = vmatpush.msra.mxu0 0.0
    %2104 = vmatpush.msra.mxu0 0.0
    %2105 = vmatpush.msra.mxu0 0.0
    %2106 = vmatpush.msra.mxu0 %v1886
    %2107 = vmatpush.msra.mxu0 %v2091
    %2108 = vmatmul.f32.gmra.mxu0 %v263
    %v2109 = vpop.f32.mrf.mxu0
    %v2110 = vadd.f32 0.0, %v2109
    %2111 = vmatmul.f32.gmra.mxu0 %v266
    %v2112 = vpop.f32.mrf.mxu0
    %v2113 = vadd.f32 0.0, %v2112
    %2114 = vmatmul.f32.gmra.mxu0 %v269
    %v2115 = vpop.f32.mrf.mxu0
    %v2116 = vadd.f32 0.0, %v2115
    %2117 = vmatmul.f32.gmra.mxu0 %v272
    %v2118 = vpop.f32.mrf.mxu0
    %v2119 = vadd.f32 0.0, %v2118
    %2120 = vdwg.mxu0
    %v2121 = vadd.f32 %v74, %v2110
    %v2122 = vadd.f32 %v79, %v2113
    %v2123 = vadd.f32 %v84, %v2116
    %v2124 = vadd.f32 %v89, %v2119
    %v2125 = vxor.u32 %v2121, 2147483648
    %v2126 = vmul.f32 %v2125, 1.442695
    %v2127 = vpow.pop %v2126
    %v2128 = vadd.f32 %v2127, 1.0
    %v2129 = vrcp.pop %v2128
    %v2130 = vmul.f32 %v2128, %v2129
    %v2131 = vsub.f32 1.0, %v2130
    %v2132 = vmul.f32 %v2129, %v2131
    %v2133 = vadd.f32 %v2129, %v2132
    %vm2134 = vweird.f32 %v2128
    %vm2135 = vweird.f32 %v2129
    %vm2136 = vmor %vm2134, %vm2135
    %v2137 = vsel %vm2136, %v2129, %v2133
    %v2138 = vand.u32 2147483647, %v2128
    %vm2139 = vcmp.eq.f32.partialorder %v2138, 8.507059e+37
    %v2140 = vand.u32 %v2128, 2147483648
    %v2141 = vor.u32 1.1754944e-38, %v2140
    %v2142 = vsel %vm2139, %v2141, %v2137
    %v2143 = vmul.f32 1.0, %v2142
    %v2144 = vxor.u32 %v2122, 2147483648
    %v2145 = vmul.f32 %v2144, 1.442695
    %v2146 = vpow.pop %v2145
    %v2147 = vadd.f32 %v2146, 1.0
    %v2148 = vrcp.pop %v2147
    %v2149 = vmul.f32 %v2147, %v2148
    %v2150 = vsub.f32 1.0, %v2149
    %v2151 = vmul.f32 %v2148, %v2150
    %v2152 = vadd.f32 %v2148, %v2151
    %vm2153 = vweird.f32 %v2147
    %vm2154 = vweird.f32 %v2148
    %vm2155 = vmor %vm2153, %vm2154
    %v2156 = vsel %vm2155, %v2148, %v2152
    %v2157 = vand.u32 2147483647, %v2147
    %vm2158 = vcmp.eq.f32.partialorder %v2157, 8.507059e+37
    %v2159 = vand.u32 %v2147, 2147483648
    %v2160 = vor.u32 1.1754944e-38, %v2159
    %v2161 = vsel %vm2158, %v2160, %v2156
    %v2162 = vmul.f32 1.0, %v2161
    %v2163 = vtanh.pop %v2123
    %v2164 = vxor.u32 %v2124, 2147483648
    %v2165 = vmul.f32 %v2164, 1.442695
    %v2166 = vpow.pop %v2165
    %v2167 = vadd.f32 %v2166, 1.0
    %v2168 = vrcp.pop %v2167
    %v2169 = vmul.f32 %v2167, %v2168
    %v2170 = vsub.f32 1.0, %v2169
    %v2171 = vmul.f32 %v2168, %v2170
    %v2172 = vadd.f32 %v2168, %v2171
    %vm2173 = vweird.f32 %v2167
    %vm2174 = vweird.f32 %v2168
    %vm2175 = vmor %vm2173, %vm2174
    %v2176 = vsel %vm2175, %v2168, %v2172
    %v2177 = vand.u32 2147483647, %v2167
    %vm2178 = vcmp.eq.f32.partialorder %v2177, 8.507059e+37
    %v2179 = vand.u32 %v2167, 2147483648
    %v2180 = vor.u32 1.1754944e-38, %v2179
    %v2181 = vsel %vm2178, %v2180, %v2176
    %v2182 = vmul.f32 1.0, %v2181
    %v2183 = vmul.f32 %v2162, %v1884
    %v2184 = vmul.f32 %v2143, %v2163
    %v2185 = vadd.f32 %v2183, %v2184
    %v2186 = vtanh.pop %v2185
    %v2187 = vmul.f32 %v2182, %v2186
    %2188 = vmatpush.msra.mxu0 0.0
    %2189 = vmatpush.msra.mxu0 0.0
    %2190 = vmatpush.msra.mxu0 0.0
    %2191 = vmatpush.msra.mxu0 0.0
    %2192 = vmatpush.msra.mxu0 0.0
    %2193 = vmatpush.msra.mxu0 0.0
    %2194 = vmatpush.msra.mxu0 0.0
    %2195 = vmatpush.msra.mxu0 0.0
    %2196 = vmatpush.msra.mxu0 0.0
    %2197 = vmatpush.msra.mxu0 0.0
    %2198 = vmatpush.msra.mxu0 0.0
    %2199 = vmatpush.msra.mxu0 0.0
    %2200 = vmatpush.msra.mxu0 0.0
    %2201 = vmatpush.msra.mxu0 0.0
    %2202 = vmatpush.msra.mxu0 %v1982
    %2203 = vmatpush.msra.mxu0 %v2187
    %2204 = vmatmul.f32.gmra.mxu0 %v371
    %v2205 = vpop.f32.mrf.mxu0
    %v2206 = vadd.f32 0.0, %v2205
    %2207 = vmatmul.f32.gmra.mxu0 %v374
    %v2208 = vpop.f32.mrf.mxu0
    %v2209 = vadd.f32 0.0, %v2208
    %2210 = vmatmul.f32.gmra.mxu0 %v377
    %v2211 = vpop.f32.mrf.mxu0
    %v2212 = vadd.f32 0.0, %v2211
    %2213 = vmatmul.f32.gmra.mxu0 %v380
    %v2214 = vpop.f32.mrf.mxu0
    %v2215 = vadd.f32 0.0, %v2214
    %2216 = vdwg.mxu0
    %v2217 = vadd.f32 %v99, %v2206
    %v2218 = vadd.f32 %v104, %v2209
    %v2219 = vadd.f32 %v109, %v2212
    %v2220 = vadd.f32 %v114, %v2215
    %v2221 = vxor.u32 %v2217, 2147483648
    %v2222 = vmul.f32 %v2221, 1.442695
    %v2223 = vpow.pop %v2222
    %v2224 = vadd.f32 %v2223, 1.0
    %v2225 = vrcp.pop %v2224
    %v2226 = vmul.f32 %v2224, %v2225
    %v2227 = vsub.f32 1.0, %v2226
    %v2228 = vmul.f32 %v2225, %v2227
    %v2229 = vadd.f32 %v2225, %v2228
    %vm2230 = vweird.f32 %v2224
    %vm2231 = vweird.f32 %v2225
    %vm2232 = vmor %vm2230, %vm2231
    %v2233 = vsel %vm2232, %v2225, %v2229
    %v2234 = vand.u32 2147483647, %v2224
    %vm2235 = vcmp.eq.f32.partialorder %v2234, 8.507059e+37
    %v2236 = vand.u32 %v2224, 2147483648
    %v2237 = vor.u32 1.1754944e-38, %v2236
    %v2238 = vsel %vm2235, %v2237, %v2233
    %v2239 = vmul.f32 1.0, %v2238
    %v2240 = vxor.u32 %v2218, 2147483648
    %v2241 = vmul.f32 %v2240, 1.442695
    %v2242 = vpow.pop %v2241
    %v2243 = vadd.f32 %v2242, 1.0
    %v2244 = vrcp.pop %v2243
    %v2245 = vmul.f32 %v2243, %v2244
    %v2246 = vsub.f32 1.0, %v2245
    %v2247 = vmul.f32 %v2244, %v2246
    %v2248 = vadd.f32 %v2244, %v2247
    %vm2249 = vweird.f32 %v2243
    %vm2250 = vweird.f32 %v2244
    %vm2251 = vmor %vm2249, %vm2250
    %v2252 = vsel %vm2251, %v2244, %v2248
    %v2253 = vand.u32 2147483647, %v2243
    %vm2254 = vcmp.eq.f32.partialorder %v2253, 8.507059e+37
    %v2255 = vand.u32 %v2243, 2147483648
    %v2256 = vor.u32 1.1754944e-38, %v2255
    %v2257 = vsel %vm2254, %v2256, %v2252
    %v2258 = vmul.f32 1.0, %v2257
    %v2259 = vtanh.pop %v2219
    %v2260 = vxor.u32 %v2220, 2147483648
    %v2261 = vmul.f32 %v2260, 1.442695
    %v2262 = vpow.pop %v2261
    %v2263 = vadd.f32 %v2262, 1.0
    %v2264 = vrcp.pop %v2263
    %v2265 = vmul.f32 %v2263, %v2264
    %v2266 = vsub.f32 1.0, %v2265
    %v2267 = vmul.f32 %v2264, %v2266
    %v2268 = vadd.f32 %v2264, %v2267
    %vm2269 = vweird.f32 %v2263
    %vm2270 = vweird.f32 %v2264
    %vm2271 = vmor %vm2269, %vm2270
    %v2272 = vsel %vm2271, %v2264, %v2268
    %v2273 = vand.u32 2147483647, %v2263
    %vm2274 = vcmp.eq.f32.partialorder %v2273, 8.507059e+37
    %v2275 = vand.u32 %v2263, 2147483648
    %v2276 = vor.u32 1.1754944e-38, %v2275
    %v2277 = vsel %vm2274, %v2276, %v2272
    %v2278 = vmul.f32 1.0, %v2277
    %v2279 = vmul.f32 %v2258, %v1980
    %v2280 = vmul.f32 %v2239, %v2259
    %v2281 = vadd.f32 %v2279, %v2280
    %v2282 = vtanh.pop %v2281
    %v2283 = vmul.f32 %v2278, %v2282
    %s2284 = scalar_lea.vmem %s0, 7
    %v2285 = vld [vmem:[%s2284] sm:$0x1]
    %v2287 = vperm.slane %v2285, 0
    %v2289 = vmul.f32 %v123, %v2287
    %v2290 = vmul.f32 %v128, %v2287
    %v2291 = vmul.f32 %v133, %v2287
    %v2292 = vmul.f32 %v138, %v2287
    %v2293 = vadd.f32 %v2289, %v49
    %v2294 = vadd.f32 %v2290, %v54
    %v2295 = vadd.f32 %v2291, %v59
    %v2296 = vadd.f32 %v2292, %v64
    %2297 = vmatpush.msra.mxu0 0.0
    %2298 = vmatpush.msra.mxu0 0.0
    %2299 = vmatpush.msra.mxu0 0.0
    %2300 = vmatpush.msra.mxu0 0.0
    %2301 = vmatpush.msra.mxu0 0.0
    %2302 = vmatpush.msra.mxu0 0.0
    %2303 = vmatpush.msra.mxu0 0.0
    %2304 = vmatpush.msra.mxu0 0.0
    %2305 = vmatpush.msra.mxu0 0.0
    %2306 = vmatpush.msra.mxu0 0.0
    %2307 = vmatpush.msra.mxu0 0.0
    %2308 = vmatpush.msra.mxu0 0.0
    %2309 = vmatpush.msra.mxu0 0.0
    %2310 = vmatpush.msra.mxu0 0.0
    %2311 = vmatpush.msra.mxu0 0.0
    %2312 = vmatpush.msra.mxu0 %v2091
    %2313 = vmatmul.f32.gmra.mxu0 %v154
    %v2314 = vpop.f32.mrf.mxu0
    %v2315 = vadd.f32 0.0, %v2314
    %2316 = vmatmul.f32.gmra.mxu0 %v157
    %v2317 = vpop.f32.mrf.mxu0
    %v2318 = vadd.f32 0.0, %v2317
    %2319 = vmatmul.f32.gmra.mxu0 %v160
    %v2320 = vpop.f32.mrf.mxu0
    %v2321 = vadd.f32 0.0, %v2320
    %2322 = vmatmul.f32.gmra.mxu0 %v163
    %v2323 = vpop.f32.mrf.mxu0
    %v2324 = vadd.f32 0.0, %v2323
    %2325 = vdwg.mxu0
    %v2326 = vadd.f32 %v2293, %v2315
    %v2327 = vadd.f32 %v2294, %v2318
    %v2328 = vadd.f32 %v2295, %v2321
    %v2329 = vadd.f32 %v2296, %v2324
    %v2330 = vxor.u32 %v2326, 2147483648
    %v2331 = vmul.f32 %v2330, 1.442695
    %v2332 = vpow.pop %v2331
    %v2333 = vadd.f32 %v2332, 1.0
    %v2334 = vrcp.pop %v2333
    %v2335 = vmul.f32 %v2333, %v2334
    %v2336 = vsub.f32 1.0, %v2335
    %v2337 = vmul.f32 %v2334, %v2336
    %v2338 = vadd.f32 %v2334, %v2337
    %vm2339 = vweird.f32 %v2333
    %vm2340 = vweird.f32 %v2334
    %vm2341 = vmor %vm2339, %vm2340
    %v2342 = vsel %vm2341, %v2334, %v2338
    %v2343 = vand.u32 2147483647, %v2333
    %vm2344 = vcmp.eq.f32.partialorder %v2343, 8.507059e+37
    %v2345 = vand.u32 %v2333, 2147483648
    %v2346 = vor.u32 1.1754944e-38, %v2345
    %v2347 = vsel %vm2344, %v2346, %v2342
    %v2348 = vmul.f32 1.0, %v2347
    %v2349 = vxor.u32 %v2327, 2147483648
    %v2350 = vmul.f32 %v2349, 1.442695
    %v2351 = vpow.pop %v2350
    %v2352 = vadd.f32 %v2351, 1.0
    %v2353 = vrcp.pop %v2352
    %v2354 = vmul.f32 %v2352, %v2353
    %v2355 = vsub.f32 1.0, %v2354
    %v2356 = vmul.f32 %v2353, %v2355
    %v2357 = vadd.f32 %v2353, %v2356
    %vm2358 = vweird.f32 %v2352
    %vm2359 = vweird.f32 %v2353
    %vm2360 = vmor %vm2358, %vm2359
    %v2361 = vsel %vm2360, %v2353, %v2357
    %v2362 = vand.u32 2147483647, %v2352
    %vm2363 = vcmp.eq.f32.partialorder %v2362, 8.507059e+37
    %v2364 = vand.u32 %v2352, 2147483648
    %v2365 = vor.u32 1.1754944e-38, %v2364
    %v2366 = vsel %vm2363, %v2365, %v2361
    %v2367 = vmul.f32 1.0, %v2366
    %v2368 = vtanh.pop %v2328
    %v2369 = vxor.u32 %v2329, 2147483648
    %v2370 = vmul.f32 %v2369, 1.442695
    %v2371 = vpow.pop %v2370
    %v2372 = vadd.f32 %v2371, 1.0
    %v2373 = vrcp.pop %v2372
    %v2374 = vmul.f32 %v2372, %v2373
    %v2375 = vsub.f32 1.0, %v2374
    %v2376 = vmul.f32 %v2373, %v2375
    %v2377 = vadd.f32 %v2373, %v2376
    %vm2378 = vweird.f32 %v2372
    %vm2379 = vweird.f32 %v2373
    %vm2380 = vmor %vm2378, %vm2379
    %v2381 = vsel %vm2380, %v2373, %v2377
    %v2382 = vand.u32 2147483647, %v2372
    %vm2383 = vcmp.eq.f32.partialorder %v2382, 8.507059e+37
    %v2384 = vand.u32 %v2372, 2147483648
    %v2385 = vor.u32 1.1754944e-38, %v2384
    %v2386 = vsel %vm2383, %v2385, %v2381
    %v2387 = vmul.f32 1.0, %v2386
    %v2388 = vmul.f32 %v2367, %v2089
    %v2389 = vmul.f32 %v2348, %v2368
    %v2390 = vadd.f32 %v2388, %v2389
    %v2391 = vtanh.pop %v2390
    %v2392 = vmul.f32 %v2387, %v2391
    %2393 = vmatpush.msra.mxu0 0.0
    %2394 = vmatpush.msra.mxu0 0.0
    %2395 = vmatpush.msra.mxu0 0.0
    %2396 = vmatpush.msra.mxu0 0.0
    %2397 = vmatpush.msra.mxu0 0.0
    %2398 = vmatpush.msra.mxu0 0.0
    %2399 = vmatpush.msra.mxu0 0.0
    %2400 = vmatpush.msra.mxu0 0.0
    %2401 = vmatpush.msra.mxu0 0.0
    %2402 = vmatpush.msra.mxu0 0.0
    %2403 = vmatpush.msra.mxu0 0.0
    %2404 = vmatpush.msra.mxu0 0.0
    %2405 = vmatpush.msra.mxu0 0.0
    %2406 = vmatpush.msra.mxu0 0.0
    %2407 = vmatpush.msra.mxu0 %v2187
    %2408 = vmatpush.msra.mxu0 %v2392
    %2409 = vmatmul.f32.gmra.mxu0 %v263
    %v2410 = vpop.f32.mrf.mxu0
    %v2411 = vadd.f32 0.0, %v2410
    %2412 = vmatmul.f32.gmra.mxu0 %v266
    %v2413 = vpop.f32.mrf.mxu0
    %v2414 = vadd.f32 0.0, %v2413
    %2415 = vmatmul.f32.gmra.mxu0 %v269
    %v2416 = vpop.f32.mrf.mxu0
    %v2417 = vadd.f32 0.0, %v2416
    %2418 = vmatmul.f32.gmra.mxu0 %v272
    %v2419 = vpop.f32.mrf.mxu0
    %v2420 = vadd.f32 0.0, %v2419
    %2421 = vdwg.mxu0
    %v2422 = vadd.f32 %v74, %v2411
    %v2423 = vadd.f32 %v79, %v2414
    %v2424 = vadd.f32 %v84, %v2417
    %v2425 = vadd.f32 %v89, %v2420
    %v2426 = vxor.u32 %v2422, 2147483648
    %v2427 = vmul.f32 %v2426, 1.442695
    %v2428 = vpow.pop %v2427
    %v2429 = vadd.f32 %v2428, 1.0
    %v2430 = vrcp.pop %v2429
    %v2431 = vmul.f32 %v2429, %v2430
    %v2432 = vsub.f32 1.0, %v2431
    %v2433 = vmul.f32 %v2430, %v2432
    %v2434 = vadd.f32 %v2430, %v2433
    %vm2435 = vweird.f32 %v2429
    %vm2436 = vweird.f32 %v2430
    %vm2437 = vmor %vm2435, %vm2436
    %v2438 = vsel %vm2437, %v2430, %v2434
    %v2439 = vand.u32 2147483647, %v2429
    %vm2440 = vcmp.eq.f32.partialorder %v2439, 8.507059e+37
    %v2441 = vand.u32 %v2429, 2147483648
    %v2442 = vor.u32 1.1754944e-38, %v2441
    %v2443 = vsel %vm2440, %v2442, %v2438
    %v2444 = vmul.f32 1.0, %v2443
    %v2445 = vxor.u32 %v2423, 2147483648
    %v2446 = vmul.f32 %v2445, 1.442695
    %v2447 = vpow.pop %v2446
    %v2448 = vadd.f32 %v2447, 1.0
    %v2449 = vrcp.pop %v2448
    %v2450 = vmul.f32 %v2448, %v2449
    %v2451 = vsub.f32 1.0, %v2450
    %v2452 = vmul.f32 %v2449, %v2451
    %v2453 = vadd.f32 %v2449, %v2452
    %vm2454 = vweird.f32 %v2448
    %vm2455 = vweird.f32 %v2449
    %vm2456 = vmor %vm2454, %vm2455
    %v2457 = vsel %vm2456, %v2449, %v2453
    %v2458 = vand.u32 2147483647, %v2448
    %vm2459 = vcmp.eq.f32.partialorder %v2458, 8.507059e+37
    %v2460 = vand.u32 %v2448, 2147483648
    %v2461 = vor.u32 1.1754944e-38, %v2460
    %v2462 = vsel %vm2459, %v2461, %v2457
    %v2463 = vmul.f32 1.0, %v2462
    %v2464 = vtanh.pop %v2424
    %v2465 = vxor.u32 %v2425, 2147483648
    %v2466 = vmul.f32 %v2465, 1.442695
    %v2467 = vpow.pop %v2466
    %v2468 = vadd.f32 %v2467, 1.0
    %v2469 = vrcp.pop %v2468
    %v2470 = vmul.f32 %v2468, %v2469
    %v2471 = vsub.f32 1.0, %v2470
    %v2472 = vmul.f32 %v2469, %v2471
    %v2473 = vadd.f32 %v2469, %v2472
    %vm2474 = vweird.f32 %v2468
    %vm2475 = vweird.f32 %v2469
    %vm2476 = vmor %vm2474, %vm2475
    %v2477 = vsel %vm2476, %v2469, %v2473
    %v2478 = vand.u32 2147483647, %v2468
    %vm2479 = vcmp.eq.f32.partialorder %v2478, 8.507059e+37
    %v2480 = vand.u32 %v2468, 2147483648
    %v2481 = vor.u32 1.1754944e-38, %v2480
    %v2482 = vsel %vm2479, %v2481, %v2477
    %v2483 = vmul.f32 1.0, %v2482
    %v2484 = vmul.f32 %v2463, %v2185
    %v2485 = vmul.f32 %v2444, %v2464
    %v2486 = vadd.f32 %v2484, %v2485
    %v2487 = vtanh.pop %v2486
    %v2488 = vmul.f32 %v2483, %v2487
    %2489 = vmatpush.msra.mxu0 0.0
    %2490 = vmatpush.msra.mxu0 0.0
    %2491 = vmatpush.msra.mxu0 0.0
    %2492 = vmatpush.msra.mxu0 0.0
    %2493 = vmatpush.msra.mxu0 0.0
    %2494 = vmatpush.msra.mxu0 0.0
    %2495 = vmatpush.msra.mxu0 0.0
    %2496 = vmatpush.msra.mxu0 0.0
    %2497 = vmatpush.msra.mxu0 0.0
    %2498 = vmatpush.msra.mxu0 0.0
    %2499 = vmatpush.msra.mxu0 0.0
    %2500 = vmatpush.msra.mxu0 0.0
    %2501 = vmatpush.msra.mxu0 0.0
    %2502 = vmatpush.msra.mxu0 0.0
    %2503 = vmatpush.msra.mxu0 %v2283
    %2504 = vmatpush.msra.mxu0 %v2488
    %2505 = vmatmul.f32.gmra.mxu0 %v371
    %v2506 = vpop.f32.mrf.mxu0
    %v2507 = vadd.f32 0.0, %v2506
    %2508 = vmatmul.f32.gmra.mxu0 %v374
    %v2509 = vpop.f32.mrf.mxu0
    %v2510 = vadd.f32 0.0, %v2509
    %2511 = vmatmul.f32.gmra.mxu0 %v377
    %v2512 = vpop.f32.mrf.mxu0
    %v2513 = vadd.f32 0.0, %v2512
    %2514 = vmatmul.f32.gmra.mxu0 %v380
    %v2515 = vpop.f32.mrf.mxu0
    %v2516 = vadd.f32 0.0, %v2515
    %2517 = vdwg.mxu0
    %v2518 = vadd.f32 %v99, %v2507
    %v2519 = vadd.f32 %v104, %v2510
    %v2520 = vadd.f32 %v109, %v2513
    %v2521 = vadd.f32 %v114, %v2516
    %v2522 = vxor.u32 %v2518, 2147483648
    %v2523 = vmul.f32 %v2522, 1.442695
    %v2524 = vpow.pop %v2523
    %v2525 = vadd.f32 %v2524, 1.0
    %v2526 = vrcp.pop %v2525
    %v2527 = vmul.f32 %v2525, %v2526
    %v2528 = vsub.f32 1.0, %v2527
    %v2529 = vmul.f32 %v2526, %v2528
    %v2530 = vadd.f32 %v2526, %v2529
    %vm2531 = vweird.f32 %v2525
    %vm2532 = vweird.f32 %v2526
    %vm2533 = vmor %vm2531, %vm2532
    %v2534 = vsel %vm2533, %v2526, %v2530
    %v2535 = vand.u32 2147483647, %v2525
    %vm2536 = vcmp.eq.f32.partialorder %v2535, 8.507059e+37
    %v2537 = vand.u32 %v2525, 2147483648
    %v2538 = vor.u32 1.1754944e-38, %v2537
    %v2539 = vsel %vm2536, %v2538, %v2534
    %v2540 = vmul.f32 1.0, %v2539
    %v2541 = vxor.u32 %v2519, 2147483648
    %v2542 = vmul.f32 %v2541, 1.442695
    %v2543 = vpow.pop %v2542
    %v2544 = vadd.f32 %v2543, 1.0
    %v2545 = vrcp.pop %v2544
    %v2546 = vmul.f32 %v2544, %v2545
    %v2547 = vsub.f32 1.0, %v2546
    %v2548 = vmul.f32 %v2545, %v2547
    %v2549 = vadd.f32 %v2545, %v2548
    %vm2550 = vweird.f32 %v2544
    %vm2551 = vweird.f32 %v2545
    %vm2552 = vmor %vm2550, %vm2551
    %v2553 = vsel %vm2552, %v2545, %v2549
    %v2554 = vand.u32 2147483647, %v2544
    %vm2555 = vcmp.eq.f32.partialorder %v2554, 8.507059e+37
    %v2556 = vand.u32 %v2544, 2147483648
    %v2557 = vor.u32 1.1754944e-38, %v2556
    %v2558 = vsel %vm2555, %v2557, %v2553
    %v2559 = vmul.f32 1.0, %v2558
    %v2560 = vtanh.pop %v2520
    %v2561 = vxor.u32 %v2521, 2147483648
    %v2562 = vmul.f32 %v2561, 1.442695
    %v2563 = vpow.pop %v2562
    %v2564 = vadd.f32 %v2563, 1.0
    %v2565 = vrcp.pop %v2564
    %v2566 = vmul.f32 %v2564, %v2565
    %v2567 = vsub.f32 1.0, %v2566
    %v2568 = vmul.f32 %v2565, %v2567
    %v2569 = vadd.f32 %v2565, %v2568
    %vm2570 = vweird.f32 %v2564
    %vm2571 = vweird.f32 %v2565
    %vm2572 = vmor %vm2570, %vm2571
    %v2573 = vsel %vm2572, %v2565, %v2569
    %v2574 = vand.u32 2147483647, %v2564
    %vm2575 = vcmp.eq.f32.partialorder %v2574, 8.507059e+37
    %v2576 = vand.u32 %v2564, 2147483648
    %v2577 = vor.u32 1.1754944e-38, %v2576
    %v2578 = vsel %vm2575, %v2577, %v2573
    %v2579 = vmul.f32 1.0, %v2578
    %v2580 = vmul.f32 %v2559, %v2281
    %v2581 = vmul.f32 %v2540, %v2560
    %v2582 = vadd.f32 %v2580, %v2581
    %v2583 = vtanh.pop %v2582
    %v2584 = vmul.f32 %v2579, %v2583
    %v2585 = vld [vmem:[%s5] sm:$0xff]
    %2587 = vset.pattern.permute.xlu0 0
    %2588 = vperm.xlu0 %2587, %v2585
    %v2589 = vpop.permute.xlu0 %2588
    %v2591 = vmul.f32 %v2589, %v2584
    %vm2592 = vcmask 15360
    %v2593 = vsel %vm2592, %v2591, 0.0
    %v2594 = vrot.slane %v2593, 4
    %v2595 = vadd.f32 %v2593, %v2594
    %v2596 = vrot.slane %v2595, 2
    %v2597 = vadd.f32 %v2595, %v2596
    %v2598 = vrot.slane %v2597, 1
    %v2599 = vadd.f32 %v2597, %v2598
    %v2600 = vld [vmem:[#allocation2] sm:$0x1]
    %2602 = vset.pattern.permute.xlu0 0
    %2603 = vperm.xlu0 %2602, %v2600
    %v2604 = vpop.permute.xlu0 %2603
    %v2606 = vperm.slane %v2604, 0
    %v2607 = vadd.f32 %v2599, %v2606
    %vm2608 = vcmask 8192
    %2609 = vst.msk [vmem:[#allocation3] sm:$0x1] %vm2608, %v2607
    // Predicated region
    $region30: #{net_forward.1} parent=1 // pred_check
      _
    $region31: #{net_forward.1} parent=1 // pred_check_branch
      %2611 = sbr.rel (0) target = $region33
    $region32: #{net_forward.1} parent=1 // pred_region
      %2613 = vsyncadd [#allocation4], 0
      %s2615 = sshll.u32 [#allocation3], 4
      %s2616 = int_to_ptr.vmem [resolvable:$true] %s2615
      %s2617 = sshll.u32 %s7, 4
      %s2618 = int_to_ptr.hbm [resolvable:$true] %s2617
      %2620 = dma.vmem_to_hbm [thread:$0]  %s2616, 16, %s2618, [#allocation4]
    $region33: #{net_forward.1} parent=1 // pred_fallthru
      _
    // Predicated region
    $region34: #{net_forward.1} parent=1 // pred_check
      _
    $region35: #{net_forward.1} parent=1 // pred_check_branch
      %2622 = sbr.rel (0) target = $region37
    $region36: #{net_forward.1} parent=1 // pred_region
      %2624 = dma.done [#allocation4], 16
    $region37: #{net_forward.1} parent=1 // pred_fallthru
      _
    %2625 = vsyncpa [#allocation4], 1

</llo_original>
